<compile_context>
chip_gen: v5e
topology: v5e:2x2
jax: 0.10.0
libtpu: 0.0.40
codegen_flags: <defaults>
</compile_context>

<pallas_src>
import jax
import jax.numpy as jnp
from jax import lax
from jax.experimental import pallas as pl
from jax.experimental.pallas import tpu as pltpu


_TAP_OFFS = tuple(ky * 16 + kx for ky in range(3) for kx in range(3))


# ---------------------------------------------------------------------------
# Fused conv stage: conv1+ReLU+pool -> conv2+ReLU+pool, per batch tile
# ---------------------------------------------------------------------------
def _conv_stage_kernel(p1_ref, w1_ref, w2_ref, b2_ref,
                       feats_ref, featsb_ref,
                       y1p_ref, y1col_ref, s2_ref):
    """One grid step = `tb` images, everything resident in VMEM.

    p1_ref:    (tb, 256, 40) bf16  conv1 patches; row = h*16+w on the padded
                                   16x16 pooled grid, lanes = pos*10 + tap
                                   (tap 9 = bias indicator, 0 on border rows).
    w1_ref:    (40, 128) bf16      block-diag conv1 weight (+bias row) x4 pos.
    w2_ref:    (288, 64) bf16      conv2 weight, row = 32*(ky*3+kx) + cin.
    b2_ref:    (1, 64)   f32       conv2 bias.
    feats_ref: (tb, 49, 64) f32    pooled conv2 activations (hp, wp, c) order.
    featsb_ref:(tb, 49, 64) bf16   same, bf16 copy feeding the MLP kernel.
    y1p_ref:   (tb*256+40, 32) bf16  zero-padded pooled conv1 activations.
    y1col_ref: (tb*256, 288) bf16    conv2 im2col built in VMEM.
    s2_ref:    (tb*256, 64) f32      conv2 pre-activation (un-pooled).
    """
    tb = feats_ref.shape[0]
    m = tb * 256

    # Tail rows only back shifted slices whose results are never read; zero
    # them once (scratch persists across grid steps).
    @pl.when(pl.program_id(0) == 0)
    def _():
        y1p_ref[pl.ds(m, 40), :] = jnp.zeros((40, 32), jnp.bfloat16)

    # ---- conv1 (+bias folded): ONE lane-dense GEMM for the whole tile -----
    x1 = p1_ref[...].reshape(m, 40)
    s1 = jnp.dot(x1, w1_ref[...], preferred_element_type=jnp.float32)  # (m,128)
    # 2x2 max-pool = max over the four 32-lane pooling-position groups; ReLU.
    pooled1 = jnp.maximum(jnp.maximum(s1[:, 0:32], s1[:, 32:64]),
                          jnp.maximum(s1[:, 64:96], s1[:, 96:128]))
    # Border rows stay exactly 0 (their patches, incl. bias column, are 0).
    y1p_ref[pl.ds(0, m), :] = jnp.maximum(pooled1, 0.0).astype(jnp.bfloat16)

    # ---- conv2 im2col in VMEM: 9 lane-offset copies (no HBM blow-up) ------
    for t, off in enumerate(_TAP_OFFS):
        y1col_ref[:, 32 * t:32 * (t + 1)] = y1p_ref[pl.ds(off, m), :]

    # ---- conv2: ONE K=288 GEMM for the whole tile (MXU accumulation) ------
    s2_ref[...] = jnp.dot(y1col_ref[...], w2_ref[...],
                          preferred_element_type=jnp.float32)

    # ---- 2x2 max-pool + bias + ReLU + compaction via strided reads --------
    b2 = b2_ref[...]
    for i in range(tb):
        for hp in range(7):
            r0 = i * 256 + 32 * hp
            blk = jnp.maximum(
                jnp.maximum(s2_ref[pl.ds(r0, 7, stride=2), :],
                            s2_ref[pl.ds(r0 + 1, 7, stride=2), :]),
                jnp.maximum(s2_ref[pl.ds(r0 + 16, 7, stride=2), :],
                            s2_ref[pl.ds(r0 + 17, 7, stride=2), :]))
            blk = jnp.maximum(blk + b2, 0.0)                 # stays f32
            feats_ref[i, pl.ds(7 * hp, 7), :] = blk
            featsb_ref[i, pl.ds(7 * hp, 7), :] = blk.astype(jnp.bfloat16)


def _conv_batch_tile(b):
    """Largest divisor of b <= 8; prefer an even grid-step count (v7x 2 TCs)."""
    divs = [t for t in range(1, min(8, b) + 1) if b % t == 0]
    even = [t for t in divs if (b // t) >= 2 and (b // t) % 2 == 0]
    return max(even) if even else max(divs)


def conv_stage_pallas(p1, w1bd, w2f, b2):
    b = p1.shape[0]
    tb = _conv_batch_tile(b)
    m = tb * 256
    flops = 2 * b * 256 * (40 * 128 + 288 * 64)
    bytes_acc = (p1.size * 2 + w1bd.size * 2 + w2f.size * 2 + b2.size * 4
                 + b * 49 * 64 * (4 + 2))
    return pl.pallas_call(
        _conv_stage_kernel,
        out_shape=(jax.ShapeDtypeStruct((b, 49, 64), jnp.float32),
                   jax.ShapeDtypeStruct((b, 49, 64), jnp.bfloat16)),
        grid_spec=pltpu.PrefetchScalarGridSpec(
            num_scalar_prefetch=0,
            grid=(b // tb,),
            in_specs=[
                pl.BlockSpec((tb, 256, 40), lambda i: (i, 0, 0)),
                pl.BlockSpec((40, 128), lambda i: (0, 0)),
                pl.BlockSpec((288, 64), lambda i: (0, 0)),
                pl.BlockSpec((1, 64), lambda i: (0, 0)),
            ],
            out_specs=[pl.BlockSpec((tb, 49, 64), lambda i: (i, 0, 0)),
                       pl.BlockSpec((tb, 49, 64), lambda i: (i, 0, 0))],
            scratch_shapes=[pltpu.VMEM((m + 40, 32), jnp.bfloat16),
                            pltpu.VMEM((m, 288), jnp.bfloat16),
                            pltpu.VMEM((m, 64), jnp.float32)],
        ),
        compiler_params=pltpu.CompilerParams(
            dimension_semantics=("parallel",)),
        cost_estimate=pl.CostEstimate(flops=flops, transcendentals=0,
                                      bytes_accessed=bytes_acc),
    )(p1, w1bd, w2f, b2)


# ---------------------------------------------------------------------------
# MLP kernel: Linear(3136,128) + ReLU + Linear(128,10 padded to 128)
# ---------------------------------------------------------------------------
def _mlp_kernel(x_ref, w1_ref, b1_ref, w2_ref, b2_ref, o_ref):
    h = jnp.dot(x_ref[...], w1_ref[...], preferred_element_type=jnp.float32)
    h = jnp.maximum(h + b1_ref[...], 0.0).astype(jnp.bfloat16)
    o_ref[...] = (jnp.dot(h, w2_ref[...], preferred_element_type=jnp.float32)
                  + b2_ref[...]).astype(o_ref.dtype)


def _mlp_row_tile(b):
    """Largest multiple-of-8 divisor of b <= 512; prefer an even step count."""
    divs = [t for t in range(8, min(512, b) + 1, 8) if b % t == 0]
    if not divs:
        return b
    even = [t for t in divs if (b // t) % 2 == 0]
    return max(even) if even else max(divs)


def mlp_pallas(x, w1, b1, w2, b2):
    b, k = x.shape
    tb = _mlp_row_tile(b)
    n = w2.shape[1]
    flops = 2 * b * (k * w1.shape[1] + w1.shape[1] * n)
    bytes_acc = (x.size * 2 + w1.size * 2 + b1.size * 4 + w2.size * 2
                 + b2.size * 4 + b * n * 4)
    return pl.pallas_call(
        _mlp_kernel,
        out_shape=jax.ShapeDtypeStruct((b, n), jnp.float32),
        grid_spec=pltpu.PrefetchScalarGridSpec(
            num_scalar_prefetch=0,
            grid=(b // tb,),
            in_specs=[
                pl.BlockSpec((tb, k), lambda i: (i, 0)),
                pl.BlockSpec(w1.shape, lambda i: (0, 0)),
                pl.BlockSpec(b1.shape, lambda i: (0, 0)),
                pl.BlockSpec(w2.shape, lambda i: (0, 0)),
                pl.BlockSpec(b2.shape, lambda i: (0, 0)),
            ],
            out_specs=pl.BlockSpec((tb, n), lambda i: (i, 0)),
        ),
        compiler_params=pltpu.CompilerParams(
            dimension_semantics=("parallel",)),
        cost_estimate=pl.CostEstimate(flops=flops, transcendentals=0,
                                      bytes_accessed=bytes_acc),
    )(x, w1, b1, w2, b2)


# ---------------------------------------------------------------------------
# Host-side data movement (im2col / pool grouping, kernel-ready weights)
# ---------------------------------------------------------------------------
def _conv1_patches(x_nhwc):
    """(B,28,28,1) -> (B, 256, 40) bf16, lane-dense.

    row  = h*16 + w on the zero-padded 16x16 *pooled* grid,
    lane = (py*2+px)*10 + tap   (tap = ky*3+kx, tap 9 = bias indicator).
    """
    b = x_nhwc.shape[0]
    xp = jnp.pad(x_nhwc, ((0, 0), (1, 1), (1, 1), (0, 0)))
    cols = [xp[:, ky:ky + 28, kx:kx + 28, :]
            for ky in range(3) for kx in range(3)]
    cols.append(jnp.ones((b, 28, 28, 1), x_nhwc.dtype))          # bias column
    pat = jnp.concatenate(cols, axis=-1)                          # (B,28,28,10)
    # (b, hp, py, wp, px, k) -> (b, hp, wp, py, px, k) -> lanes = pos*10 + k
    g = pat.reshape(b, 14, 2, 14, 2, 10).transpose(0, 1, 3, 2, 4, 5)
    g = g.reshape(b, 14, 14, 40)
    g = jnp.pad(g, ((0, 0), (1, 1), (1, 1), (0, 0)))              # 16x16 grid
    return g.reshape(b, 256, 40).astype(jnp.bfloat16)


def prepare_params(params):
    """Weight re-layouts hoisted out of the jitted forward (weights static)."""
    # conv1: (ky,kx,cin flattened) taps + bias row -> 40x128 block diagonal.
    w1a = jnp.concatenate(
        [jnp.transpose(params["conv1_w"], (2, 3, 1, 0)).reshape(9, 32),
         params["conv1_b"].reshape(1, 32)], axis=0)               # (10, 32)
    w1bd = jnp.zeros((40, 128), jnp.float32)
    for p in range(4):
        w1bd = w1bd.at[10 * p:10 * p + 10, 32 * p:32 * p + 32].set(w1a)
    # conv2: K=288 layout, row = 32*(ky*3+kx) + cin.
    w2f = jnp.transpose(params["conv2_w"], (2, 3, 1, 0)).reshape(288, 64)
    # fc1 columns permuted from PyTorch (C,H,W) flatten to the kernel's
    # (H,W,C) feature order; fc2 zero-padded to 128 lane-dense outputs.
    wfc1 = params["fc1_w"].reshape(128, 64, 7, 7).transpose(2, 3, 1, 0)
    wfc1 = wfc1.reshape(64 * 7 * 7, 128)
    wfc2 = jnp.zeros((128, 128), jnp.float32).at[:, :10].set(params["fc2_w"].T)
    bfc2 = jnp.zeros((1, 128), jnp.float32).at[:, :10].set(
        params["fc2_b"].reshape(1, 10))
    return {
        "w1bd": w1bd.astype(jnp.bfloat16),
        "w2f": w2f.astype(jnp.bfloat16),
        "b2": params["conv2_b"].reshape(1, 64).astype(jnp.float32),
        "wfc1": wfc1.astype(jnp.bfloat16),
        "bfc1": params["fc1_b"].reshape(1, 128).astype(jnp.float32),
        "wfc2": wfc2.astype(jnp.bfloat16),
        "bfc2": bfc2,
    }


# ---------------------------------------------------------------------------
# Full forward pass
# ---------------------------------------------------------------------------
def mnist_forward(x_nchw, kp):
    b = x_nchw.shape[0]
    x = jnp.transpose(x_nchw, (0, 2, 3, 1))                      # NCHW -> NHWC
    p1 = _conv1_patches(x)

    feats_f32, feats_bf16 = conv_stage_pallas(p1, kp["w1bd"], kp["w2f"],
                                              kp["b2"])          # (B,49,64) x2

    logits = mlp_pallas(feats_bf16.reshape(b, 64 * 7 * 7),
                        kp["wfc1"], kp["bfc1"], kp["wfc2"],
                        kp["bfc2"])[:, :10]

    # PyTorch feats.view(B,-1) flattens channel-major (C,H,W).
    feats_flat = jnp.transpose(feats_f32.reshape(b, 7, 7, 64),
                               (0, 3, 1, 2)).reshape(b, -1)
    return logits, feats_flat


# ---------------------------------------------------------------------------
# Pure-JAX (XLA) reference mirroring the PyTorch module exactly
# ---------------------------------------------------------------------------
def torch_style_reference(x_nchw, params):
    hi = lax.Precision.HIGHEST

    def conv(x, w, bias):
        y = lax.conv_general_dilated(
            x, w, window_strides=(1, 1), padding=((1, 1), (1, 1)),
            dimension_numbers=("NCHW", "OIHW", "NCHW"), precision=hi)
        return y + bias[None, :, None, None]

    def pool(x):
        return lax.reduce_window(x, -jnp.inf, lax.max,
                                 (1, 1, 2, 2), (1, 1, 2, 2), "VALID")

    h = pool(jnp.maximum(conv(x_nchw, params["conv1_w"], params["conv1_b"]), 0))
    h = pool(jnp.maximum(conv(h, params["conv2_w"], params["conv2_b"]), 0))
    feats_flat = h.reshape(x_nchw.shape[0], -1)
    h = jnp.maximum(
        jnp.dot(feats_flat, params["fc1_w"].T, precision=hi) + params["fc1_b"], 0)
    logits = jnp.dot(h, params["fc2_w"].T, precision=hi) + params["fc2_b"]
    return logits, feats_flat


# ---------------------------------------------------------------------------
if __name__ == "__main__":
    key = jax.random.PRNGKey(0)
    kx, k1, k2, k3, k4, k5, k6, k7, k8 = jax.random.split(key, 9)

    B = 2
    x = jax.random.normal(kx, (B, 1, 28, 28), jnp.float32)   # NCHW (PyTorch)

    params = {
        "conv1_w": 0.10 * jax.random.normal(k1, (32, 1, 3, 3), jnp.float32),
        "conv1_b": 0.10 * jax.random.normal(k2, (32,), jnp.float32),
        "conv2_w": 0.05 * jax.random.normal(k3, (64, 32, 3, 3), jnp.float32),
        "conv2_b": 0.05 * jax.random.normal(k4, (64,), jnp.float32),
        "fc1_w":   0.02 * jax.random.normal(k5, (128, 64 * 7 * 7), jnp.float32),
        "fc1_b":   0.02 * jax.random.normal(k6, (128,), jnp.float32),
        "fc2_w":   0.05 * jax.random.normal(k7, (10, 128), jnp.float32),
        "fc2_b":   0.05 * jax.random.normal(k8, (10,), jnp.float32),
    }

    kparams = prepare_params(params)            # weight re-layouts, once
    logits, feats_flat = jax.jit(mnist_forward)(x, kparams)
    jax.block_until_ready((logits, feats_flat))

    assert logits.shape == (B, 10)
    assert feats_flat.shape == (B, 64 * 7 * 7)

    ref_logits, ref_feats = torch_style_reference(x, params)
    assert jnp.allclose(feats_flat, ref_feats, atol=5e-2, rtol=5e-2), "feats mismatch"
    assert jnp.allclose(logits, ref_logits, atol=5e-2, rtol=5e-2), "logits mismatch"

    print("KERNEL_OK")
</pallas_src>

<mosaic_0001>
module attributes {stable_mosaic.version = 11 : i64} {
  func.func @_conv_stage_kernel(%arg0: i32, %arg1: memref<1x256x40xbf16, #tpu.memory_space<vmem>>, %arg2: memref<40x128xbf16, #tpu.memory_space<vmem>>, %arg3: memref<288x64xbf16, #tpu.memory_space<vmem>>, %arg4: memref<1x64xf32, #tpu.memory_space<vmem>>, %arg5: memref<1x49x64xf32, #tpu.memory_space<vmem>>, %arg6: memref<1x49x64xbf16, #tpu.memory_space<vmem>>, %arg7: memref<296x32xbf16, #tpu.memory_space<vmem>>, %arg8: memref<256x288xbf16, #tpu.memory_space<vmem>>, %arg9: memref<256x64xf32, #tpu.memory_space<vmem>>) attributes {dimension_semantics = [#tpu.dimension_semantics<parallel>], iteration_bounds = array<i64: 2>, scalar_prefetch = 0 : i64, scratch_operands = 3 : i64, tpu.core_type = #tpu.core_type<tc>, window_params = [{transform_indices = @transform_0, window_bounds = array<i64: 1, 256, 40>}, {pipeline_mode = #tpu.pipeline_mode<synchronous>, transform_indices = @transform_1, window_bounds = array<i64: 40, 128>}, {pipeline_mode = #tpu.pipeline_mode<synchronous>, transform_indices = @transform_2, window_bounds = array<i64: 288, 64>}, {pipeline_mode = #tpu.pipeline_mode<synchronous>, transform_indices = @transform_3, window_bounds = array<i64: 1, 64>}, {transform_indices = @transform_4, window_bounds = array<i64: 1, 49, 64>}, {transform_indices = @transform_5, window_bounds = array<i64: 1, 49, 64>}]} {
    %c0_i32 = arith.constant 0 : i32
    %0 = arith.cmpi eq, %arg0, %c0_i32 : i32
    %1 = arith.extui %0 : i1 to i32
    %c0_i32_0 = arith.constant 0 : i32
    %2 = arith.cmpi ne, %1, %c0_i32_0 : i32
    scf.if %2 {
      %cst_120 = arith.constant 0.000000e+00 : bf16
      %167 = vector.broadcast %cst_120 : bf16 to vector<40x32xbf16>
      %c256_121 = arith.constant 256 : index
      %c0_122 = arith.constant 0 : index
      %168 = vector.load %arg7[%c256_121, %c0_122] : memref<296x32xbf16, #tpu.memory_space<vmem>>, vector<40x32xbf16>
      tpu.vector_store %arg7[%c256_121, %c0_122], %167 {strides = array<i32>} : memref<296x32xbf16, #tpu.memory_space<vmem>>, vector<40x32xbf16>,
    } else {
    }
    %c0 = arith.constant 0 : index
    %c0_1 = arith.constant 0 : index
    %c0_2 = arith.constant 0 : index
    %3 = vector.load %arg1[%c0, %c0_1, %c0_2] : memref<1x256x40xbf16, #tpu.memory_space<vmem>>, vector<1x256x40xbf16>
    %4 = vector.shape_cast %3 : vector<1x256x40xbf16> to vector<256x40xbf16>
    %c0_3 = arith.constant 0 : index
    %c0_4 = arith.constant 0 : index
    %5 = vector.load %arg2[%c0_3, %c0_4] : memref<40x128xbf16, #tpu.memory_space<vmem>>, vector<40x128xbf16>
    %cst = arith.constant dense<0.000000e+00> : vector<256x128xf32>
    %6 = tpu.matmul %4, %5, %cst {dimension_numbers = #tpu.dot_dimension_numbers<[1], [0], [0], [1], [0, 0, 1, 1], [], []>} : vector<256x40xbf16>, vector<40x128xbf16>, vector<256x128xf32> -> vector<256x128xf32>
    %7 = vector.extract_strided_slice %6 {offsets = [0, 0], sizes = [256, 32], strides = [1, 1]} : vector<256x128xf32> to vector<256x32xf32>
    %8 = vector.extract_strided_slice %6 {offsets = [0, 32], sizes = [256, 32], strides = [1, 1]} : vector<256x128xf32> to vector<256x32xf32>
    %9 = arith.maximumf %7, %8 : vector<256x32xf32>
    %10 = vector.extract_strided_slice %6 {offsets = [0, 64], sizes = [256, 32], strides = [1, 1]} : vector<256x128xf32> to vector<256x32xf32>
    %11 = vector.extract_strided_slice %6 {offsets = [0, 96], sizes = [256, 32], strides = [1, 1]} : vector<256x128xf32> to vector<256x32xf32>
    %12 = arith.maximumf %10, %11 : vector<256x32xf32>
    %13 = arith.maximumf %9, %12 : vector<256x32xf32>
    %cst_5 = arith.constant 0.000000e+00 : f32
    %14 = vector.broadcast %cst_5 : f32 to vector<256x32xf32>
    %15 = arith.maximumf %13, %14 : vector<256x32xf32>
    %16 = arith.truncf %15 : vector<256x32xf32> to vector<256x32xbf16>
    %c0_6 = arith.constant 0 : index
    %c0_7 = arith.constant 0 : index
    %17 = vector.load %arg7[%c0_6, %c0_7] : memref<296x32xbf16, #tpu.memory_space<vmem>>, vector<256x32xbf16>
    tpu.vector_store %arg7[%c0_6, %c0_7], %16 {strides = array<i32>} : memref<296x32xbf16, #tpu.memory_space<vmem>>, vector<256x32xbf16>,
    %c0_8 = arith.constant 0 : index
    %c0_9 = arith.constant 0 : index
    %18 = vector.load %arg7[%c0_8, %c0_9] : memref<296x32xbf16, #tpu.memory_space<vmem>>, vector<256x32xbf16>
    %c0_10 = arith.constant 0 : index
    %c0_11 = arith.constant 0 : index
    %19 = vector.load %arg8[%c0_10, %c0_11] : memref<256x288xbf16, #tpu.memory_space<vmem>>, vector<256x32xbf16>
    tpu.vector_store %arg8[%c0_10, %c0_11], %18 {strides = array<i32>} : memref<256x288xbf16, #tpu.memory_space<vmem>>, vector<256x32xbf16>,
    %c1 = arith.constant 1 : index
    %c0_12 = arith.constant 0 : index
    %20 = vector.load %arg7[%c1, %c0_12] : memref<296x32xbf16, #tpu.memory_space<vmem>>, vector<256x32xbf16>
    %c0_13 = arith.constant 0 : index
    %c32 = arith.constant 32 : index
    %21 = vector.load %arg8[%c0_13, %c32] : memref<256x288xbf16, #tpu.memory_space<vmem>>, vector<256x32xbf16>
    tpu.vector_store %arg8[%c0_13, %c32], %20 {strides = array<i32>} : memref<256x288xbf16, #tpu.memory_space<vmem>>, vector<256x32xbf16>,
    %c2 = arith.constant 2 : index
    %c0_14 = arith.constant 0 : index
    %22 = vector.load %arg7[%c2, %c0_14] : memref<296x32xbf16, #tpu.memory_space<vmem>>, vector<256x32xbf16>
    %c0_15 = arith.constant 0 : index
    %c64 = arith.constant 64 : index
    %23 = vector.load %arg8[%c0_15, %c64] : memref<256x288xbf16, #tpu.memory_space<vmem>>, vector<256x32xbf16>
    tpu.vector_store %arg8[%c0_15, %c64], %22 {strides = array<i32>} : memref<256x288xbf16, #tpu.memory_space<vmem>>, vector<256x32xbf16>,
    %c16 = arith.constant 16 : index
    %c0_16 = arith.constant 0 : index
    %24 = vector.load %arg7[%c16, %c0_16] : memref<296x32xbf16, #tpu.memory_space<vmem>>, vector<256x32xbf16>
    %c0_17 = arith.constant 0 : index
    %c96 = arith.constant 96 : index
    %25 = vector.load %arg8[%c0_17, %c96] : memref<256x288xbf16, #tpu.memory_space<vmem>>, vector<256x32xbf16>
    tpu.vector_store %arg8[%c0_17, %c96], %24 {strides = array<i32>} : memref<256x288xbf16, #tpu.memory_space<vmem>>, vector<256x32xbf16>,
    %c17 = arith.constant 17 : index
    %c0_18 = arith.constant 0 : index
    %26 = vector.load %arg7[%c17, %c0_18] : memref<296x32xbf16, #tpu.memory_space<vmem>>, vector<256x32xbf16>
    %c0_19 = arith.constant 0 : index
    %c128 = arith.constant 128 : index
    %27 = vector.load %arg8[%c0_19, %c128] : memref<256x288xbf16, #tpu.memory_space<vmem>>, vector<256x32xbf16>
    tpu.vector_store %arg8[%c0_19, %c128], %26 {strides = array<i32>} : memref<256x288xbf16, #tpu.memory_space<vmem>>, vector<256x32xbf16>,
    %c18 = arith.constant 18 : index
    %c0_20 = arith.constant 0 : index
    %28 = vector.load %arg7[%c18, %c0_20] : memref<296x32xbf16, #tpu.memory_space<vmem>>, vector<256x32xbf16>
    %c0_21 = arith.constant 0 : index
    %c160 = arith.constant 160 : index
    %29 = vector.load %arg8[%c0_21, %c160] : memref<256x288xbf16, #tpu.memory_space<vmem>>, vector<256x32xbf16>
    tpu.vector_store %arg8[%c0_21, %c160], %28 {strides = array<i32>} : memref<256x288xbf16, #tpu.memory_space<vmem>>, vector<256x32xbf16>,
    %c32_22 = arith.constant 32 : index
    %c0_23 = arith.constant 0 : index
    %30 = vector.load %arg7[%c32_22, %c0_23] : memref<296x32xbf16, #tpu.memory_space<vmem>>, vector<256x32xbf16>
    %c0_24 = arith.constant 0 : index
    %c192 = arith.constant 192 : index
    %31 = vector.load %arg8[%c0_24, %c192] : memref<256x288xbf16, #tpu.memory_space<vmem>>, vector<256x32xbf16>
    tpu.vector_store %arg8[%c0_24, %c192], %30 {strides = array<i32>} : memref<256x288xbf16, #tpu.memory_space<vmem>>, vector<256x32xbf16>,
    %c33 = arith.constant 33 : index
    %c0_25 = arith.constant 0 : index
    %32 = vector.load %arg7[%c33, %c0_25] : memref<296x32xbf16, #tpu.memory_space<vmem>>, vector<256x32xbf16>
    %c0_26 = arith.constant 0 : index
    %c224 = arith.constant 224 : index
    %33 = vector.load %arg8[%c0_26, %c224] : memref<256x288xbf16, #tpu.memory_space<vmem>>, vector<256x32xbf16>
    tpu.vector_store %arg8[%c0_26, %c224], %32 {strides = array<i32>} : memref<256x288xbf16, #tpu.memory_space<vmem>>, vector<256x32xbf16>,
    %c34 = arith.constant 34 : index
    %c0_27 = arith.constant 0 : index
    %34 = vector.load %arg7[%c34, %c0_27] : memref<296x32xbf16, #tpu.memory_space<vmem>>, vector<256x32xbf16>
    %c0_28 = arith.constant 0 : index
    %c256 = arith.constant 256 : index
    %35 = vector.load %arg8[%c0_28, %c256] : memref<256x288xbf16, #tpu.memory_space<vmem>>, vector<256x32xbf16>
    tpu.vector_store %arg8[%c0_28, %c256], %34 {strides = array<i32>} : memref<256x288xbf16, #tpu.memory_space<vmem>>, vector<256x32xbf16>,
    %c0_29 = arith.constant 0 : index
    %c0_30 = arith.constant 0 : index
    %36 = vector.load %arg8[%c0_29, %c0_30] : memref<256x288xbf16, #tpu.memory_space<vmem>>, vector<256x288xbf16>
    %c0_31 = arith.constant 0 : index
    %c0_32 = arith.constant 0 : index
    %37 = vector.load %arg3[%c0_31, %c0_32] : memref<288x64xbf16, #tpu.memory_space<vmem>>, vector<288x64xbf16>
    %cst_33 = arith.constant dense<0.000000e+00> : vector<256x64xf32>
    %38 = tpu.matmul %36, %37, %cst_33 {dimension_numbers = #tpu.dot_dimension_numbers<[1], [0], [0], [1], [0, 0, 1, 1], [], []>} : vector<256x288xbf16>, vector<288x64xbf16>, vector<256x64xf32> -> vector<256x64xf32>
    %c0_34 = arith.constant 0 : index
    %c0_35 = arith.constant 0 : index
    %39 = vector.load %arg9[%c0_34, %c0_35] : memref<256x64xf32, #tpu.memory_space<vmem>>, vector<256x64xf32>
    tpu.vector_store %arg9[%c0_34, %c0_35], %38 {strides = array<i32>} : memref<256x64xf32, #tpu.memory_space<vmem>>, vector<256x64xf32>,
    %c0_36 = arith.constant 0 : index
    %c0_37 = arith.constant 0 : index
    %40 = vector.load %arg4[%c0_36, %c0_37] : memref<1x64xf32, #tpu.memory_space<vmem>>, vector<1x64xf32>
    %c0_38 = arith.constant 0 : index
    %c0_39 = arith.constant 0 : index
    %41 = tpu.strided_load %arg9[%c0_38, %c0_39] {strides = array<i32: 2, 1>} : memref<256x64xf32, #tpu.memory_space<vmem>>, vector<7x64xf32>
    %c1_40 = arith.constant 1 : index
    %c0_41 = arith.constant 0 : index
    %42 = tpu.strided_load %arg9[%c1_40, %c0_41] {strides = array<i32: 2, 1>} : memref<256x64xf32, #tpu.memory_space<vmem>>, vector<7x64xf32>
    %43 = arith.maximumf %41, %42 : vector<7x64xf32>
    %c16_42 = arith.constant 16 : index
    %c0_43 = arith.constant 0 : index
    %44 = tpu.strided_load %arg9[%c16_42, %c0_43] {strides = array<i32: 2, 1>} : memref<256x64xf32, #tpu.memory_space<vmem>>, vector<7x64xf32>
    %c17_44 = arith.constant 17 : index
    %c0_45 = arith.constant 0 : index
    %45 = tpu.strided_load %arg9[%c17_44, %c0_45] {strides = array<i32: 2, 1>} : memref<256x64xf32, #tpu.memory_space<vmem>>, vector<7x64xf32>
    %46 = arith.maximumf %44, %45 : vector<7x64xf32>
    %47 = arith.maximumf %43, %46 : vector<7x64xf32>
    %48 = vector.broadcast %40 : vector<1x64xf32> to vector<7x64xf32>
    %49 = arith.addf %47, %48 : vector<7x64xf32>
    %cst_46 = arith.constant 0.000000e+00 : f32
    %50 = vector.broadcast %cst_46 : f32 to vector<7x64xf32>
    %51 = arith.maximumf %49, %50 : vector<7x64xf32>
    %c0_47 = arith.constant 0 : index
    %c0_48 = arith.constant 0 : index
    %c0_49 = arith.constant 0 : index
    %52 = vector.load %arg5[%c0_47, %c0_48, %c0_49] : memref<1x49x64xf32, #tpu.memory_space<vmem>>, vector<1x7x64xf32>
    %53 = vector.shape_cast %52 : vector<1x7x64xf32> to vector<7x64xf32>
    %54 = vector.shape_cast %51 : vector<7x64xf32> to vector<1x7x64xf32>
    tpu.vector_store %arg5[%c0_47, %c0_48, %c0_49], %54 {strides = array<i32>} : memref<1x49x64xf32, #tpu.memory_space<vmem>>, vector<1x7x64xf32>,
    %55 = arith.truncf %51 : vector<7x64xf32> to vector<7x64xbf16>
    %c0_50 = arith.constant 0 : index
    %c0_51 = arith.constant 0 : index
    %c0_52 = arith.constant 0 : index
    %56 = vector.load %arg6[%c0_50, %c0_51, %c0_52] : memref<1x49x64xbf16, #tpu.memory_space<vmem>>, vector<1x7x64xbf16>
    %57 = vector.shape_cast %56 : vector<1x7x64xbf16> to vector<7x64xbf16>
    %58 = vector.shape_cast %55 : vector<7x64xbf16> to vector<1x7x64xbf16>
    tpu.vector_store %arg6[%c0_50, %c0_51, %c0_52], %58 {strides = array<i32>} : memref<1x49x64xbf16, #tpu.memory_space<vmem>>, vector<1x7x64xbf16>,
    %c32_53 = arith.constant 32 : index
    %c0_54 = arith.constant 0 : index
    %59 = tpu.strided_load %arg9[%c32_53, %c0_54] {strides = array<i32: 2, 1>} : memref<256x64xf32, #tpu.memory_space<vmem>>, vector<7x64xf32>
    %c33_55 = arith.constant 33 : index
    %c0_56 = arith.constant 0 : index
    %60 = tpu.strided_load %arg9[%c33_55, %c0_56] {strides = array<i32: 2, 1>} : memref<256x64xf32, #tpu.memory_space<vmem>>, vector<7x64xf32>
    %61 = arith.maximumf %59, %60 : vector<7x64xf32>
    %c48 = arith.constant 48 : index
    %c0_57 = arith.constant 0 : index
    %62 = tpu.strided_load %arg9[%c48, %c0_57] {strides = array<i32: 2, 1>} : memref<256x64xf32, #tpu.memory_space<vmem>>, vector<7x64xf32>
    %c49 = arith.constant 49 : index
    %c0_58 = arith.constant 0 : index
    %63 = tpu.strided_load %arg9[%c49, %c0_58] {strides = array<i32: 2, 1>} : memref<256x64xf32, #tpu.memory_space<vmem>>, vector<7x64xf32>
    %64 = arith.maximumf %62, %63 : vector<7x64xf32>
    %65 = arith.maximumf %61, %64 : vector<7x64xf32>
    %66 = vector.broadcast %40 : vector<1x64xf32> to vector<7x64xf32>
    %67 = arith.addf %65, %66 : vector<7x64xf32>
    %cst_59 = arith.constant 0.000000e+00 : f32
    %68 = vector.broadcast %cst_59 : f32 to vector<7x64xf32>
    %69 = arith.maximumf %67, %68 : vector<7x64xf32>
    %c0_60 = arith.constant 0 : index
    %c7 = arith.constant 7 : index
    %c0_61 = arith.constant 0 : index
    %70 = vector.load %arg5[%c0_60, %c7, %c0_61] : memref<1x49x64xf32, #tpu.memory_space<vmem>>, vector<1x7x64xf32>
    %71 = vector.shape_cast %70 : vector<1x7x64xf32> to vector<7x64xf32>
    %72 = vector.shape_cast %69 : vector<7x64xf32> to vector<1x7x64xf32>
    tpu.vector_store %arg5[%c0_60, %c7, %c0_61], %72 {strides = array<i32>} : memref<1x49x64xf32, #tpu.memory_space<vmem>>, vector<1x7x64xf32>,
    %73 = arith.truncf %69 : vector<7x64xf32> to vector<7x64xbf16>
    %c0_62 = arith.constant 0 : index
    %c7_63 = arith.constant 7 : index
    %c0_64 = arith.constant 0 : index
    %74 = vector.load %arg6[%c0_62, %c7_63, %c0_64] : memref<1x49x64xbf16, #tpu.memory_space<vmem>>, vector<1x7x64xbf16>
    %75 = vector.shape_cast %74 : vector<1x7x64xbf16> to vector<7x64xbf16>
    %76 = vector.shape_cast %73 : vector<7x64xbf16> to vector<1x7x64xbf16>
    tpu.vector_store %arg6[%c0_62, %c7_63, %c0_64], %76 {strides = array<i32>} : memref<1x49x64xbf16, #tpu.memory_space<vmem>>, vector<1x7x64xbf16>,
    %c64_65 = arith.constant 64 : index
    %c0_66 = arith.constant 0 : index
    %77 = tpu.strided_load %arg9[%c64_65, %c0_66] {strides = array<i32: 2, 1>} : memref<256x64xf32, #tpu.memory_space<vmem>>, vector<7x64xf32>
    %c65 = arith.constant 65 : index
    %c0_67 = arith.constant 0 : index
    %78 = tpu.strided_load %arg9[%c65, %c0_67] {strides = array<i32: 2, 1>} : memref<256x64xf32, #tpu.memory_space<vmem>>, vector<7x64xf32>
    %79 = arith.maximumf %77, %78 : vector<7x64xf32>
    %c80 = arith.constant 80 : index
    %c0_68 = arith.constant 0 : index
    %80 = tpu.strided_load %arg9[%c80, %c0_68] {strides = array<i32: 2, 1>} : memref<256x64xf32, #tpu.memory_space<vmem>>, vector<7x64xf32>
    %c81 = arith.constant 81 : index
    %c0_69 = arith.constant 0 : index
    %81 = tpu.strided_load %arg9[%c81, %c0_69] {strides = array<i32: 2, 1>} : memref<256x64xf32, #tpu.memory_space<vmem>>, vector<7x64xf32>
    %82 = arith.maximumf %80, %81 : vector<7x64xf32>
    %83 = arith.maximumf %79, %82 : vector<7x64xf32>
    %84 = vector.broadcast %40 : vector<1x64xf32> to vector<7x64xf32>
    %85 = arith.addf %83, %84 : vector<7x64xf32>
    %cst_70 = arith.constant 0.000000e+00 : f32
    %86 = vector.broadcast %cst_70 : f32 to vector<7x64xf32>
    %87 = arith.maximumf %85, %86 : vector<7x64xf32>
    %c0_71 = arith.constant 0 : index
    %c14 = arith.constant 14 : index
    %c0_72 = arith.constant 0 : index
    %88 = vector.load %arg5[%c0_71, %c14, %c0_72] : memref<1x49x64xf32, #tpu.memory_space<vmem>>, vector<1x7x64xf32>
    %89 = vector.shape_cast %88 : vector<1x7x64xf32> to vector<7x64xf32>
    %90 = vector.shape_cast %87 : vector<7x64xf32> to vector<1x7x64xf32>
    tpu.vector_store %arg5[%c0_71, %c14, %c0_72], %90 {strides = array<i32>} : memref<1x49x64xf32, #tpu.memory_space<vmem>>, vector<1x7x64xf32>,
    %91 = arith.truncf %87 : vector<7x64xf32> to vector<7x64xbf16>
    %c0_73 = arith.constant 0 : index
    %c14_74 = arith.constant 14 : index
    %c0_75 = arith.constant 0 : index
    %92 = vector.load %arg6[%c0_73, %c14_74, %c0_75] : memref<1x49x64xbf16, #tpu.memory_space<vmem>>, vector<1x7x64xbf16>
    %93 = vector.shape_cast %92 : vector<1x7x64xbf16> to vector<7x64xbf16>
    %94 = vector.shape_cast %91 : vector<7x64xbf16> to vector<1x7x64xbf16>
    tpu.vector_store %arg6[%c0_73, %c14_74, %c0_75], %94 {strides = array<i32>} : memref<1x49x64xbf16, #tpu.memory_space<vmem>>, vector<1x7x64xbf16>,
    %c96_76 = arith.constant 96 : index
    %c0_77 = arith.constant 0 : index
    %95 = tpu.strided_load %arg9[%c96_76, %c0_77] {strides = array<i32: 2, 1>} : memref<256x64xf32, #tpu.memory_space<vmem>>, vector<7x64xf32>
    %c97 = arith.constant 97 : index
    %c0_78 = arith.constant 0 : index
    %96 = tpu.strided_load %arg9[%c97, %c0_78] {strides = array<i32: 2, 1>} : memref<256x64xf32, #tpu.memory_space<vmem>>, vector<7x64xf32>
    %97 = arith.maximumf %95, %96 : vector<7x64xf32>
    %c112 = arith.constant 112 : index
    %c0_79 = arith.constant 0 : index
    %98 = tpu.strided_load %arg9[%c112, %c0_79] {strides = array<i32: 2, 1>} : memref<256x64xf32, #tpu.memory_space<vmem>>, vector<7x64xf32>
    %c113 = arith.constant 113 : index
    %c0_80 = arith.constant 0 : index
    %99 = tpu.strided_load %arg9[%c113, %c0_80] {strides = array<i32: 2, 1>} : memref<256x64xf32, #tpu.memory_space<vmem>>, vector<7x64xf32>
    %100 = arith.maximumf %98, %99 : vector<7x64xf32>
    %101 = arith.maximumf %97, %100 : vector<7x64xf32>
    %102 = vector.broadcast %40 : vector<1x64xf32> to vector<7x64xf32>
    %103 = arith.addf %101, %102 : vector<7x64xf32>
    %cst_81 = arith.constant 0.000000e+00 : f32
    %104 = vector.broadcast %cst_81 : f32 to vector<7x64xf32>
    %105 = arith.maximumf %103, %104 : vector<7x64xf32>
    %c0_82 = arith.constant 0 : index
    %c21 = arith.constant 21 : index
    %c0_83 = arith.constant 0 : index
    %106 = vector.load %arg5[%c0_82, %c21, %c0_83] : memref<1x49x64xf32, #tpu.memory_space<vmem>>, vector<1x7x64xf32>
    %107 = vector.shape_cast %106 : vector<1x7x64xf32> to vector<7x64xf32>
    %108 = vector.shape_cast %105 : vector<7x64xf32> to vector<1x7x64xf32>
    tpu.vector_store %arg5[%c0_82, %c21, %c0_83], %108 {strides = array<i32>} : memref<1x49x64xf32, #tpu.memory_space<vmem>>, vector<1x7x64xf32>,
    %109 = arith.truncf %105 : vector<7x64xf32> to vector<7x64xbf16>
    %c0_84 = arith.constant 0 : index
    %c21_85 = arith.constant 21 : index
    %c0_86 = arith.constant 0 : index
    %110 = vector.load %arg6[%c0_84, %c21_85, %c0_86] : memref<1x49x64xbf16, #tpu.memory_space<vmem>>, vector<1x7x64xbf16>
    %111 = vector.shape_cast %110 : vector<1x7x64xbf16> to vector<7x64xbf16>
    %112 = vector.shape_cast %109 : vector<7x64xbf16> to vector<1x7x64xbf16>
    tpu.vector_store %arg6[%c0_84, %c21_85, %c0_86], %112 {strides = array<i32>} : memref<1x49x64xbf16, #tpu.memory_space<vmem>>, vector<1x7x64xbf16>,
    %c128_87 = arith.constant 128 : index
    %c0_88 = arith.constant 0 : index
    %113 = tpu.strided_load %arg9[%c128_87, %c0_88] {strides = array<i32: 2, 1>} : memref<256x64xf32, #tpu.memory_space<vmem>>, vector<7x64xf32>
    %c129 = arith.constant 129 : index
    %c0_89 = arith.constant 0 : index
    %114 = tpu.strided_load %arg9[%c129, %c0_89] {strides = array<i32: 2, 1>} : memref<256x64xf32, #tpu.memory_space<vmem>>, vector<7x64xf32>
    %115 = arith.maximumf %113, %114 : vector<7x64xf32>
    %c144 = arith.constant 144 : index
    %c0_90 = arith.constant 0 : index
    %116 = tpu.strided_load %arg9[%c144, %c0_90] {strides = array<i32: 2, 1>} : memref<256x64xf32, #tpu.memory_space<vmem>>, vector<7x64xf32>
    %c145 = arith.constant 145 : index
    %c0_91 = arith.constant 0 : index
    %117 = tpu.strided_load %arg9[%c145, %c0_91] {strides = array<i32: 2, 1>} : memref<256x64xf32, #tpu.memory_space<vmem>>, vector<7x64xf32>
    %118 = arith.maximumf %116, %117 : vector<7x64xf32>
    %119 = arith.maximumf %115, %118 : vector<7x64xf32>
    %120 = vector.broadcast %40 : vector<1x64xf32> to vector<7x64xf32>
    %121 = arith.addf %119, %120 : vector<7x64xf32>
    %cst_92 = arith.constant 0.000000e+00 : f32
    %122 = vector.broadcast %cst_92 : f32 to vector<7x64xf32>
    %123 = arith.maximumf %121, %122 : vector<7x64xf32>
    %c0_93 = arith.constant 0 : index
    %c28 = arith.constant 28 : index
    %c0_94 = arith.constant 0 : index
    %124 = vector.load %arg5[%c0_93, %c28, %c0_94] : memref<1x49x64xf32, #tpu.memory_space<vmem>>, vector<1x7x64xf32>
    %125 = vector.shape_cast %124 : vector<1x7x64xf32> to vector<7x64xf32>
    %126 = vector.shape_cast %123 : vector<7x64xf32> to vector<1x7x64xf32>
    tpu.vector_store %arg5[%c0_93, %c28, %c0_94], %126 {strides = array<i32>} : memref<1x49x64xf32, #tpu.memory_space<vmem>>, vector<1x7x64xf32>,
    %127 = arith.truncf %123 : vector<7x64xf32> to vector<7x64xbf16>
    %c0_95 = arith.constant 0 : index
    %c28_96 = arith.constant 28 : index
    %c0_97 = arith.constant 0 : index
    %128 = vector.load %arg6[%c0_95, %c28_96, %c0_97] : memref<1x49x64xbf16, #tpu.memory_space<vmem>>, vector<1x7x64xbf16>
    %129 = vector.shape_cast %128 : vector<1x7x64xbf16> to vector<7x64xbf16>
    %130 = vector.shape_cast %127 : vector<7x64xbf16> to vector<1x7x64xbf16>
    tpu.vector_store %arg6[%c0_95, %c28_96, %c0_97], %130 {strides = array<i32>} : memref<1x49x64xbf16, #tpu.memory_space<vmem>>, vector<1x7x64xbf16>,
    %c160_98 = arith.constant 160 : index
    %c0_99 = arith.constant 0 : index
    %131 = tpu.strided_load %arg9[%c160_98, %c0_99] {strides = array<i32: 2, 1>} : memref<256x64xf32, #tpu.memory_space<vmem>>, vector<7x64xf32>
    %c161 = arith.constant 161 : index
    %c0_100 = arith.constant 0 : index
    %132 = tpu.strided_load %arg9[%c161, %c0_100] {strides = array<i32: 2, 1>} : memref<256x64xf32, #tpu.memory_space<vmem>>, vector<7x64xf32>
    %133 = arith.maximumf %131, %132 : vector<7x64xf32>
    %c176 = arith.constant 176 : index
    %c0_101 = arith.constant 0 : index
    %134 = tpu.strided_load %arg9[%c176, %c0_101] {strides = array<i32: 2, 1>} : memref<256x64xf32, #tpu.memory_space<vmem>>, vector<7x64xf32>
    %c177 = arith.constant 177 : index
    %c0_102 = arith.constant 0 : index
    %135 = tpu.strided_load %arg9[%c177, %c0_102] {strides = array<i32: 2, 1>} : memref<256x64xf32, #tpu.memory_space<vmem>>, vector<7x64xf32>
    %136 = arith.maximumf %134, %135 : vector<7x64xf32>
    %137 = arith.maximumf %133, %136 : vector<7x64xf32>
    %138 = vector.broadcast %40 : vector<1x64xf32> to vector<7x64xf32>
    %139 = arith.addf %137, %138 : vector<7x64xf32>
    %cst_103 = arith.constant 0.000000e+00 : f32
    %140 = vector.broadcast %cst_103 : f32 to vector<7x64xf32>
    %141 = arith.maximumf %139, %140 : vector<7x64xf32>
    %c0_104 = arith.constant 0 : index
    %c35 = arith.constant 35 : index
    %c0_105 = arith.constant 0 : index
    %142 = vector.load %arg5[%c0_104, %c35, %c0_105] : memref<1x49x64xf32, #tpu.memory_space<vmem>>, vector<1x7x64xf32>
    %143 = vector.shape_cast %142 : vector<1x7x64xf32> to vector<7x64xf32>
    %144 = vector.shape_cast %141 : vector<7x64xf32> to vector<1x7x64xf32>
    tpu.vector_store %arg5[%c0_104, %c35, %c0_105], %144 {strides = array<i32>} : memref<1x49x64xf32, #tpu.memory_space<vmem>>, vector<1x7x64xf32>,
    %145 = arith.truncf %141 : vector<7x64xf32> to vector<7x64xbf16>
    %c0_106 = arith.constant 0 : index
    %c35_107 = arith.constant 35 : index
    %c0_108 = arith.constant 0 : index
    %146 = vector.load %arg6[%c0_106, %c35_107, %c0_108] : memref<1x49x64xbf16, #tpu.memory_space<vmem>>, vector<1x7x64xbf16>
    %147 = vector.shape_cast %146 : vector<1x7x64xbf16> to vector<7x64xbf16>
    %148 = vector.shape_cast %145 : vector<7x64xbf16> to vector<1x7x64xbf16>
    tpu.vector_store %arg6[%c0_106, %c35_107, %c0_108], %148 {strides = array<i32>} : memref<1x49x64xbf16, #tpu.memory_space<vmem>>, vector<1x7x64xbf16>,
    %c192_109 = arith.constant 192 : index
    %c0_110 = arith.constant 0 : index
    %149 = tpu.strided_load %arg9[%c192_109, %c0_110] {strides = array<i32: 2, 1>} : memref<256x64xf32, #tpu.memory_space<vmem>>, vector<7x64xf32>
    %c193 = arith.constant 193 : index
    %c0_111 = arith.constant 0 : index
    %150 = tpu.strided_load %arg9[%c193, %c0_111] {strides = array<i32: 2, 1>} : memref<256x64xf32, #tpu.memory_space<vmem>>, vector<7x64xf32>
    %151 = arith.maximumf %149, %150 : vector<7x64xf32>
    %c208 = arith.constant 208 : index
    %c0_112 = arith.constant 0 : index
    %152 = tpu.strided_load %arg9[%c208, %c0_112] {strides = array<i32: 2, 1>} : memref<256x64xf32, #tpu.memory_space<vmem>>, vector<7x64xf32>
    %c209 = arith.constant 209 : index
    %c0_113 = arith.constant 0 : index
    %153 = tpu.strided_load %arg9[%c209, %c0_113] {strides = array<i32: 2, 1>} : memref<256x64xf32, #tpu.memory_space<vmem>>, vector<7x64xf32>
    %154 = arith.maximumf %152, %153 : vector<7x64xf32>
    %155 = arith.maximumf %151, %154 : vector<7x64xf32>
    %156 = vector.broadcast %40 : vector<1x64xf32> to vector<7x64xf32>
    %157 = arith.addf %155, %156 : vector<7x64xf32>
    %cst_114 = arith.constant 0.000000e+00 : f32
    %158 = vector.broadcast %cst_114 : f32 to vector<7x64xf32>
    %159 = arith.maximumf %157, %158 : vector<7x64xf32>
    %c0_115 = arith.constant 0 : index
    %c42 = arith.constant 42 : index
    %c0_116 = arith.constant 0 : index
    %160 = vector.load %arg5[%c0_115, %c42, %c0_116] : memref<1x49x64xf32, #tpu.memory_space<vmem>>, vector<1x7x64xf32>
    %161 = vector.shape_cast %160 : vector<1x7x64xf32> to vector<7x64xf32>
    %162 = vector.shape_cast %159 : vector<7x64xf32> to vector<1x7x64xf32>
    tpu.vector_store %arg5[%c0_115, %c42, %c0_116], %162 {strides = array<i32>} : memref<1x49x64xf32, #tpu.memory_space<vmem>>, vector<1x7x64xf32>,
    %163 = arith.truncf %159 : vector<7x64xf32> to vector<7x64xbf16>
    %c0_117 = arith.constant 0 : index
    %c42_118 = arith.constant 42 : index
    %c0_119 = arith.constant 0 : index
    %164 = vector.load %arg6[%c0_117, %c42_118, %c0_119] : memref<1x49x64xbf16, #tpu.memory_space<vmem>>, vector<1x7x64xbf16>
    %165 = vector.shape_cast %164 : vector<1x7x64xbf16> to vector<7x64xbf16>
    %166 = vector.shape_cast %163 : vector<7x64xbf16> to vector<1x7x64xbf16>
    tpu.vector_store %arg6[%c0_117, %c42_118, %c0_119], %166 {strides = array<i32>} : memref<1x49x64xbf16, #tpu.memory_space<vmem>>, vector<1x7x64xbf16>,
    return
  }
  func.func @transform_0(%arg0: i32) -> (i32, i32, i32) {
    %c0_i32 = arith.constant 0 : i32
    %c0_i32_0 = arith.constant 0 : i32
    %c0_i32_1 = arith.constant 0 : i32
    return %arg0, %c0_i32, %c0_i32_0 : i32, i32, i32
  }
  func.func @transform_1(%arg0: i32) -> (i32, i32) {
    %c0_i32 = arith.constant 0 : i32
    %c0_i32_0 = arith.constant 0 : i32
    %c0_i32_1 = arith.constant 0 : i32
    return %c0_i32, %c0_i32_0 : i32, i32
  }
  func.func @transform_2(%arg0: i32) -> (i32, i32) {
    %c0_i32 = arith.constant 0 : i32
    %c0_i32_0 = arith.constant 0 : i32
    %c0_i32_1 = arith.constant 0 : i32
    return %c0_i32, %c0_i32_0 : i32, i32
  }
  func.func @transform_3(%arg0: i32) -> (i32, i32) {
    %c0_i32 = arith.constant 0 : i32
    %c0_i32_0 = arith.constant 0 : i32
    %c0_i32_1 = arith.constant 0 : i32
    return %c0_i32, %c0_i32_0 : i32, i32
  }
  func.func @transform_4(%arg0: i32) -> (i32, i32, i32) {
    %c0_i32 = arith.constant 0 : i32
    %c0_i32_0 = arith.constant 0 : i32
    %c0_i32_1 = arith.constant 0 : i32
    return %arg0, %c0_i32, %c0_i32_0 : i32, i32, i32
  }
  func.func @transform_5(%arg0: i32) -> (i32, i32, i32) {
    %c0_i32 = arith.constant 0 : i32
    %c0_i32_0 = arith.constant 0 : i32
    %c0_i32_1 = arith.constant 0 : i32
    return %arg0, %c0_i32, %c0_i32_0 : i32, i32, i32
  }
}

module attributes {stable_mosaic.version = 11 : i64} {
  func.func @_mlp_kernel(%arg0: i32, %arg1: memref<2x3136xbf16, #tpu.memory_space<vmem>>, %arg2: memref<3136x128xbf16, #tpu.memory_space<vmem>>, %arg3: memref<1x128xf32, #tpu.memory_space<vmem>>, %arg4: memref<128x128xbf16, #tpu.memory_space<vmem>>, %arg5: memref<1x128xf32, #tpu.memory_space<vmem>>, %arg6: memref<2x128xf32, #tpu.memory_space<vmem>>) attributes {dimension_semantics = [#tpu.dimension_semantics<parallel>], iteration_bounds = array<i64: 1>, scalar_prefetch = 0 : i64, scratch_operands = 0 : i64, tpu.core_type = #tpu.core_type<tc>, window_params = [{transform_indices = @transform_0, window_bounds = array<i64: 2, 3136>}, {pipeline_mode = #tpu.pipeline_mode<synchronous>, transform_indices = @transform_1, window_bounds = array<i64: 3136, 128>}, {pipeline_mode = #tpu.pipeline_mode<synchronous>, transform_indices = @transform_2, window_bounds = array<i64: 1, 128>}, {pipeline_mode = #tpu.pipeline_mode<synchronous>, transform_indices = @transform_3, window_bounds = array<i64: 128, 128>}, {pipeline_mode = #tpu.pipeline_mode<synchronous>, transform_indices = @transform_4, window_bounds = array<i64: 1, 128>}, {transform_indices = @transform_5, window_bounds = array<i64: 2, 128>}]} {
    %c0 = arith.constant 0 : index
    %c0_0 = arith.constant 0 : index
    %0 = vector.load %arg1[%c0, %c0_0] : memref<2x3136xbf16, #tpu.memory_space<vmem>>, vector<2x3136xbf16>
    %c0_1 = arith.constant 0 : index
    %c0_2 = arith.constant 0 : index
    %1 = vector.load %arg2[%c0_1, %c0_2] : memref<3136x128xbf16, #tpu.memory_space<vmem>>, vector<3136x128xbf16>
    %cst = arith.constant dense<0.000000e+00> : vector<2x128xf32>
    %2 = tpu.matmul %0, %1, %cst {dimension_numbers = #tpu.dot_dimension_numbers<[1], [0], [0], [1], [0, 0, 1, 1], [], []>} : vector<2x3136xbf16>, vector<3136x128xbf16>, vector<2x128xf32> -> vector<2x128xf32>
    %c0_3 = arith.constant 0 : index
    %c0_4 = arith.constant 0 : index
    %3 = vector.load %arg3[%c0_3, %c0_4] : memref<1x128xf32, #tpu.memory_space<vmem>>, vector<1x128xf32>
    %4 = vector.broadcast %3 : vector<1x128xf32> to vector<2x128xf32>
    %5 = arith.addf %2, %4 : vector<2x128xf32>
    %cst_5 = arith.constant 0.000000e+00 : f32
    %6 = vector.broadcast %cst_5 : f32 to vector<2x128xf32>
    %7 = arith.maximumf %5, %6 : vector<2x128xf32>
    %8 = arith.truncf %7 : vector<2x128xf32> to vector<2x128xbf16>
    %c0_6 = arith.constant 0 : index
    %c0_7 = arith.constant 0 : index
    %9 = vector.load %arg4[%c0_6, %c0_7] : memref<128x128xbf16, #tpu.memory_space<vmem>>, vector<128x128xbf16>
    %cst_8 = arith.constant dense<0.000000e+00> : vector<2x128xf32>
    %10 = tpu.matmul %8, %9, %cst_8 {dimension_numbers = #tpu.dot_dimension_numbers<[1], [0], [0], [1], [0, 0, 1, 1], [], []>} : vector<2x128xbf16>, vector<128x128xbf16>, vector<2x128xf32> -> vector<2x128xf32>
    %c0_9 = arith.constant 0 : index
    %c0_10 = arith.constant 0 : index
    %11 = vector.load %arg5[%c0_9, %c0_10] : memref<1x128xf32, #tpu.memory_space<vmem>>, vector<1x128xf32>
    %12 = vector.broadcast %11 : vector<1x128xf32> to vector<2x128xf32>
    %13 = arith.addf %10, %12 : vector<2x128xf32>
    %c0_11 = arith.constant 0 : index
    %c0_12 = arith.constant 0 : index
    %14 = vector.load %arg6[%c0_11, %c0_12] : memref<2x128xf32, #tpu.memory_space<vmem>>, vector<2x128xf32>
    tpu.vector_store %arg6[%c0_11, %c0_12], %13 {strides = array<i32>} : memref<2x128xf32, #tpu.memory_space<vmem>>, vector<2x128xf32>,
    return
  }
  func.func @transform_0(%arg0: i32) -> (i32, i32) {
    %c0_i32 = arith.constant 0 : i32
    %c0_i32_0 = arith.constant 0 : i32
    return %arg0, %c0_i32 : i32, i32
  }
  func.func @transform_1(%arg0: i32) -> (i32, i32) {
    %c0_i32 = arith.constant 0 : i32
    %c0_i32_0 = arith.constant 0 : i32
    %c0_i32_1 = arith.constant 0 : i32
    return %c0_i32, %c0_i32_0 : i32, i32
  }
  func.func @transform_2(%arg0: i32) -> (i32, i32) {
    %c0_i32 = arith.constant 0 : i32
    %c0_i32_0 = arith.constant 0 : i32
    %c0_i32_1 = arith.constant 0 : i32
    return %c0_i32, %c0_i32_0 : i32, i32
  }
  func.func @transform_3(%arg0: i32) -> (i32, i32) {
    %c0_i32 = arith.constant 0 : i32
    %c0_i32_0 = arith.constant 0 : i32
    %c0_i32_1 = arith.constant 0 : i32
    return %c0_i32, %c0_i32_0 : i32, i32
  }
  func.func @transform_4(%arg0: i32) -> (i32, i32) {
    %c0_i32 = arith.constant 0 : i32
    %c0_i32_0 = arith.constant 0 : i32
    %c0_i32_1 = arith.constant 0 : i32
    return %c0_i32, %c0_i32_0 : i32, i32
  }
  func.func @transform_5(%arg0: i32) -> (i32, i32) {
    %c0_i32 = arith.constant 0 : i32
    %c0_i32_0 = arith.constant 0 : i32
    return %arg0, %c0_i32 : i32, i32
  }
}

</mosaic_0001>

<llo_original>
// kernel: mnist_forward.3
$region0: #{mnist_forward.3}
  #allocation0 [shape = 'u32[]', space=smem, size = 0x4, offset = 0x4, fixed_abs, tag = 'smem constant byte address 0x4 - core index']
  #allocation1 [shape = 'u32[72,128]{1,0:T(1,128)}', space=vmem, size = 0x9000, scoped, tag = 'internal scratch']
  %s0 = inlined_call_operand.vmem [shape: bf16[2,3136], index: 0, kind: input, shape index: {}]
  %s1 = inlined_call_operand.vmem [shape: bf16[3136,128], index: 1, kind: input, shape index: {}]
  %s2 = inlined_call_operand.vmem [shape: f32[1,128], index: 2, kind: input, shape index: {}]
  %s3 = inlined_call_operand.vmem [shape: bf16[128,128], index: 3, kind: input, shape index: {}]
  %s4 = inlined_call_operand.vmem [shape: f32[1,128], index: 4, kind: input, shape index: {}]
  %s5 = inlined_call_operand.hbm [shape: f32[2,128], index: 5, kind: output, shape index: {}]
  %s6 = sld [smem:[#allocation0]]
  $region30: #{mnist_forward.3} parent=0
    _
  %s8 = ssub.s32 1, %s6
  %s9 = scalar_select 0, %s8, %s6
  $region1: #{mnist_forward.3} parent=0
    #allocation2 [shape = 'u8[1024]{0}', space=vmem, size = 0x400, scoped, tag = 'output window, operand 0, single buffered']
    #allocation3 [shape = 's32[1]{0}', space=sflag, size = 0x4, scoped, tag = 'scoped memory for mnist_forward.3']
    %10 = vsyncpa [#allocation3], 0
    // Predicated region
    $region2: #{mnist_forward.3} parent=1 // pred_check
      _
    $region3: #{mnist_forward.3} parent=1 // pred_check_branch
      %12 = sbr.rel (0) target = $region5
    $region4: #{mnist_forward.3} parent=1 // pred_region
      _
    $region5: #{mnist_forward.3} parent=1 // pred_fallthru
      _
    // Predicated region
    $region6: #{mnist_forward.3} parent=1 // pred_check
      _
    $region7: #{mnist_forward.3} parent=1 // pred_check_branch
      %14 = sbr.rel (0) target = $region9
    $region8: #{mnist_forward.3} parent=1 // pred_region
      _
    $region9: #{mnist_forward.3} parent=1 // pred_fallthru
      _
    // Predicated region
    $region10: #{mnist_forward.3} parent=1 // pred_check
      _
    $region11: #{mnist_forward.3} parent=1 // pred_check_branch
      %16 = sbr.rel (0) target = $region13
    $region12: #{mnist_forward.3} parent=1 // pred_region
      _
    $region13: #{mnist_forward.3} parent=1 // pred_fallthru
      _
    // Predicated region
    $region14: #{mnist_forward.3} parent=1 // pred_check
      _
    $region15: #{mnist_forward.3} parent=1 // pred_check_branch
      %18 = sbr.rel (0) target = $region17
    $region16: #{mnist_forward.3} parent=1 // pred_region
      _
    $region17: #{mnist_forward.3} parent=1 // pred_fallthru
      _
    // Predicated region
    $region18: #{mnist_forward.3} parent=1 // pred_check
      _
    $region19: #{mnist_forward.3} parent=1 // pred_check_branch
      %20 = sbr.rel (0) target = $region21
    $region20: #{mnist_forward.3} parent=1 // pred_region
      _
    $region21: #{mnist_forward.3} parent=1 // pred_fallthru
      _
    %v22 = vld [vmem:[%s0] sm:$0xff]
    %v23 = vld [vmem:[%s0 + $0x8] sm:$0xff]
    %v24 = vld [vmem:[%s0 + $0x10] sm:$0xff]
    %v25 = vld [vmem:[%s0 + $0x18] sm:$0x1]
    %v26 = vld [vmem:[%s1] sm:$0xf]
    %v27 = vld [vmem:[%s1 + $0x4] sm:$0xf]
    %v28 = vld [vmem:[%s1 + $0x8] sm:$0xf]
    %v29 = vld [vmem:[%s1 + $0xc] sm:$0xf]
    %v30 = vld [vmem:[%s1 + $0x10] sm:$0xf]
    %v31 = vld [vmem:[%s1 + $0x14] sm:$0xf]
    %v32 = vld [vmem:[%s1 + $0x18] sm:$0xf]
    %v33 = vld [vmem:[%s1 + $0x1c] sm:$0xf]
    %v34 = vld [vmem:[%s1 + $0x20] sm:$0xf]
    %v35 = vld [vmem:[%s1 + $0x24] sm:$0xf]
    %v36 = vld [vmem:[%s1 + $0x28] sm:$0xf]
    %v37 = vld [vmem:[%s1 + $0x2c] sm:$0xf]
    %v38 = vld [vmem:[%s1 + $0x30] sm:$0xf]
    %v39 = vld [vmem:[%s1 + $0x34] sm:$0xf]
    %v40 = vld [vmem:[%s1 + $0x38] sm:$0xf]
    %v41 = vld [vmem:[%s1 + $0x3c] sm:$0xf]
    %v42 = vld [vmem:[%s1 + $0x40] sm:$0xf]
    %v43 = vld [vmem:[%s1 + $0x44] sm:$0xf]
    %v44 = vld [vmem:[%s1 + $0x48] sm:$0xf]
    %v45 = vld [vmem:[%s1 + $0x4c] sm:$0xf]
    %v46 = vld [vmem:[%s1 + $0x50] sm:$0xf]
    %v47 = vld [vmem:[%s1 + $0x54] sm:$0xf]
    %v48 = vld [vmem:[%s1 + $0x58] sm:$0xf]
    %v49 = vld [vmem:[%s1 + $0x5c] sm:$0xf]
    %v50 = vld [vmem:[%s1 + $0x60] sm:$0xf]
    %v51 = vld [vmem:[%s1 + $0x64] sm:$0xf]
    %v52 = vld [vmem:[%s1 + $0x68] sm:$0xf]
    %v53 = vld [vmem:[%s1 + $0x6c] sm:$0xf]
    %v54 = vld [vmem:[%s1 + $0x70] sm:$0xf]
    %v55 = vld [vmem:[%s1 + $0x74] sm:$0xf]
    %v56 = vld [vmem:[%s1 + $0x78] sm:$0xf]
    %v57 = vld [vmem:[%s1 + $0x7c] sm:$0xf]
    %v58 = vld [vmem:[%s1 + $0x80] sm:$0xf]
    %v59 = vld [vmem:[%s1 + $0x84] sm:$0xf]
    %v60 = vld [vmem:[%s1 + $0x88] sm:$0xf]
    %v61 = vld [vmem:[%s1 + $0x8c] sm:$0xf]
    %v62 = vld [vmem:[%s1 + $0x90] sm:$0xf]
    %v63 = vld [vmem:[%s1 + $0x94] sm:$0xf]
    %v64 = vld [vmem:[%s1 + $0x98] sm:$0xf]
    %v65 = vld [vmem:[%s1 + $0x9c] sm:$0xf]
    %v66 = vld [vmem:[%s1 + $0xa0] sm:$0xf]
    %v67 = vld [vmem:[%s1 + $0xa4] sm:$0xf]
    %v68 = vld [vmem:[%s1 + $0xa8] sm:$0xf]
    %v69 = vld [vmem:[%s1 + $0xac] sm:$0xf]
    %v70 = vld [vmem:[%s1 + $0xb0] sm:$0xf]
    %v71 = vld [vmem:[%s1 + $0xb4] sm:$0xf]
    %v72 = vld [vmem:[%s1 + $0xb8] sm:$0xf]
    %v73 = vld [vmem:[%s1 + $0xbc] sm:$0xf]
    %v74 = vld [vmem:[%s1 + $0xc0] sm:$0xf]
    %v75 = vld [vmem:[%s1 + $0xc4] sm:$0xf]
    %v76 = vld [vmem:[%s1 + $0xc8] sm:$0xf]
    %v77 = vld [vmem:[%s1 + $0xcc] sm:$0xf]
    %v78 = vld [vmem:[%s1 + $0xd0] sm:$0xf]
    %v79 = vld [vmem:[%s1 + $0xd4] sm:$0xf]
    %v80 = vld [vmem:[%s1 + $0xd8] sm:$0xf]
    %v81 = vld [vmem:[%s1 + $0xdc] sm:$0xf]
    %v82 = vld [vmem:[%s1 + $0xe0] sm:$0xf]
    %v83 = vld [vmem:[%s1 + $0xe4] sm:$0xf]
    %v84 = vld [vmem:[%s1 + $0xe8] sm:$0xf]
    %v85 = vld [vmem:[%s1 + $0xec] sm:$0xf]
    %v86 = vld [vmem:[%s1 + $0xf0] sm:$0xf]
    %v87 = vld [vmem:[%s1 + $0xf4] sm:$0xf]
    %v88 = vld [vmem:[%s1 + $0xf8] sm:$0xf]
    %v89 = vld [vmem:[%s1 + $0xfc] sm:$0xf]
    %v90 = vld [vmem:[%s1 + $0x100] sm:$0xf]
    %v91 = vld [vmem:[%s1 + $0x104] sm:$0xf]
    %v92 = vld [vmem:[%s1 + $0x108] sm:$0xf]
    %v93 = vld [vmem:[%s1 + $0x10c] sm:$0xf]
    %v94 = vld [vmem:[%s1 + $0x110] sm:$0xf]
    %v95 = vld [vmem:[%s1 + $0x114] sm:$0xf]
    %v96 = vld [vmem:[%s1 + $0x118] sm:$0xf]
    %v97 = vld [vmem:[%s1 + $0x11c] sm:$0xf]
    %v98 = vld [vmem:[%s1 + $0x120] sm:$0xf]
    %v99 = vld [vmem:[%s1 + $0x124] sm:$0xf]
    %v100 = vld [vmem:[%s1 + $0x128] sm:$0xf]
    %v101 = vld [vmem:[%s1 + $0x12c] sm:$0xf]
    %v102 = vld [vmem:[%s1 + $0x130] sm:$0xf]
    %v103 = vld [vmem:[%s1 + $0x134] sm:$0xf]
    %v104 = vld [vmem:[%s1 + $0x138] sm:$0xf]
    %v105 = vld [vmem:[%s1 + $0x13c] sm:$0xf]
    %v106 = vld [vmem:[%s1 + $0x140] sm:$0xf]
    %v107 = vld [vmem:[%s1 + $0x144] sm:$0xf]
    %v108 = vld [vmem:[%s1 + $0x148] sm:$0xf]
    %v109 = vld [vmem:[%s1 + $0x14c] sm:$0xf]
    %v110 = vld [vmem:[%s1 + $0x150] sm:$0xf]
    %v111 = vld [vmem:[%s1 + $0x154] sm:$0xf]
    %v112 = vld [vmem:[%s1 + $0x158] sm:$0xf]
    %v113 = vld [vmem:[%s1 + $0x15c] sm:$0xf]
    %v114 = vld [vmem:[%s1 + $0x160] sm:$0xf]
    %v115 = vld [vmem:[%s1 + $0x164] sm:$0xf]
    %v116 = vld [vmem:[%s1 + $0x168] sm:$0xf]
    %v117 = vld [vmem:[%s1 + $0x16c] sm:$0xf]
    %v118 = vld [vmem:[%s1 + $0x170] sm:$0xf]
    %v119 = vld [vmem:[%s1 + $0x174] sm:$0xf]
    %v120 = vld [vmem:[%s1 + $0x178] sm:$0xf]
    %v121 = vld [vmem:[%s1 + $0x17c] sm:$0xf]
    %v122 = vld [vmem:[%s1 + $0x180] sm:$0xf]
    %v123 = vld [vmem:[%s1 + $0x184] sm:$0xf]
    %v124 = vld [vmem:[%s1 + $0x188] sm:$0xf]
    %v125 = vld [vmem:[%s1 + $0x18c] sm:$0xf]
    %v126 = vld [vmem:[%s1 + $0x190] sm:$0xf]
    %v127 = vld [vmem:[%s1 + $0x194] sm:$0xf]
    %v128 = vld [vmem:[%s1 + $0x198] sm:$0xf]
    %v129 = vld [vmem:[%s1 + $0x19c] sm:$0xf]
    %v130 = vld [vmem:[%s1 + $0x1a0] sm:$0xf]
    %v131 = vld [vmem:[%s1 + $0x1a4] sm:$0xf]
    %v132 = vld [vmem:[%s1 + $0x1a8] sm:$0xf]
    %v133 = vld [vmem:[%s1 + $0x1ac] sm:$0xf]
    %v134 = vld [vmem:[%s1 + $0x1b0] sm:$0xf]
    %v135 = vld [vmem:[%s1 + $0x1b4] sm:$0xf]
    %v136 = vld [vmem:[%s1 + $0x1b8] sm:$0xf]
    %v137 = vld [vmem:[%s1 + $0x1bc] sm:$0xf]
    %v138 = vld [vmem:[%s1 + $0x1c0] sm:$0xf]
    %v139 = vld [vmem:[%s1 + $0x1c4] sm:$0xf]
    %v140 = vld [vmem:[%s1 + $0x1c8] sm:$0xf]
    %v141 = vld [vmem:[%s1 + $0x1cc] sm:$0xf]
    %v142 = vld [vmem:[%s1 + $0x1d0] sm:$0xf]
    %v143 = vld [vmem:[%s1 + $0x1d4] sm:$0xf]
    %v144 = vld [vmem:[%s1 + $0x1d8] sm:$0xf]
    %v145 = vld [vmem:[%s1 + $0x1dc] sm:$0xf]
    %v146 = vld [vmem:[%s1 + $0x1e0] sm:$0xf]
    %v147 = vld [vmem:[%s1 + $0x1e4] sm:$0xf]
    %v148 = vld [vmem:[%s1 + $0x1e8] sm:$0xf]
    %v149 = vld [vmem:[%s1 + $0x1ec] sm:$0xf]
    %v150 = vld [vmem:[%s1 + $0x1f0] sm:$0xf]
    %v151 = vld [vmem:[%s1 + $0x1f4] sm:$0xf]
    %v152 = vld [vmem:[%s1 + $0x1f8] sm:$0xf]
    %v153 = vld [vmem:[%s1 + $0x1fc] sm:$0xf]
    %v154 = vld [vmem:[%s1 + $0x200] sm:$0xf]
    %v155 = vld [vmem:[%s1 + $0x204] sm:$0xf]
    %v156 = vld [vmem:[%s1 + $0x208] sm:$0xf]
    %v157 = vld [vmem:[%s1 + $0x20c] sm:$0xf]
    %v158 = vld [vmem:[%s1 + $0x210] sm:$0xf]
    %v159 = vld [vmem:[%s1 + $0x214] sm:$0xf]
    %v160 = vld [vmem:[%s1 + $0x218] sm:$0xf]
    %v161 = vld [vmem:[%s1 + $0x21c] sm:$0xf]
    %v162 = vld [vmem:[%s1 + $0x220] sm:$0xf]
    %v163 = vld [vmem:[%s1 + $0x224] sm:$0xf]
    %v164 = vld [vmem:[%s1 + $0x228] sm:$0xf]
    %v165 = vld [vmem:[%s1 + $0x22c] sm:$0xf]
    %v166 = vld [vmem:[%s1 + $0x230] sm:$0xf]
    %v167 = vld [vmem:[%s1 + $0x234] sm:$0xf]
    %v168 = vld [vmem:[%s1 + $0x238] sm:$0xf]
    %v169 = vld [vmem:[%s1 + $0x23c] sm:$0xf]
    %v170 = vld [vmem:[%s1 + $0x240] sm:$0xf]
    %v171 = vld [vmem:[%s1 + $0x244] sm:$0xf]
    %v172 = vld [vmem:[%s1 + $0x248] sm:$0xf]
    %v173 = vld [vmem:[%s1 + $0x24c] sm:$0xf]
    %v174 = vld [vmem:[%s1 + $0x250] sm:$0xf]
    %v175 = vld [vmem:[%s1 + $0x254] sm:$0xf]
    %v176 = vld [vmem:[%s1 + $0x258] sm:$0xf]
    %v177 = vld [vmem:[%s1 + $0x25c] sm:$0xf]
    %v178 = vld [vmem:[%s1 + $0x260] sm:$0xf]
    %v179 = vld [vmem:[%s1 + $0x264] sm:$0xf]
    %v180 = vld [vmem:[%s1 + $0x268] sm:$0xf]
    %v181 = vld [vmem:[%s1 + $0x26c] sm:$0xf]
    %v182 = vld [vmem:[%s1 + $0x270] sm:$0xf]
    %v183 = vld [vmem:[%s1 + $0x274] sm:$0xf]
    %v184 = vld [vmem:[%s1 + $0x278] sm:$0xf]
    %v185 = vld [vmem:[%s1 + $0x27c] sm:$0xf]
    %v186 = vld [vmem:[%s1 + $0x280] sm:$0xf]
    %v187 = vld [vmem:[%s1 + $0x284] sm:$0xf]
    %v188 = vld [vmem:[%s1 + $0x288] sm:$0xf]
    %v189 = vld [vmem:[%s1 + $0x28c] sm:$0xf]
    %v190 = vld [vmem:[%s1 + $0x290] sm:$0xf]
    %v191 = vld [vmem:[%s1 + $0x294] sm:$0xf]
    %v192 = vld [vmem:[%s1 + $0x298] sm:$0xf]
    %v193 = vld [vmem:[%s1 + $0x29c] sm:$0xf]
    %v194 = vld [vmem:[%s1 + $0x2a0] sm:$0xf]
    %v195 = vld [vmem:[%s1 + $0x2a4] sm:$0xf]
    %v196 = vld [vmem:[%s1 + $0x2a8] sm:$0xf]
    %v197 = vld [vmem:[%s1 + $0x2ac] sm:$0xf]
    %v198 = vld [vmem:[%s1 + $0x2b0] sm:$0xf]
    %v199 = vld [vmem:[%s1 + $0x2b4] sm:$0xf]
    %v200 = vld [vmem:[%s1 + $0x2b8] sm:$0xf]
    %v201 = vld [vmem:[%s1 + $0x2bc] sm:$0xf]
    %v202 = vld [vmem:[%s1 + $0x2c0] sm:$0xf]
    %v203 = vld [vmem:[%s1 + $0x2c4] sm:$0xf]
    %v204 = vld [vmem:[%s1 + $0x2c8] sm:$0xf]
    %v205 = vld [vmem:[%s1 + $0x2cc] sm:$0xf]
    %v206 = vld [vmem:[%s1 + $0x2d0] sm:$0xf]
    %v207 = vld [vmem:[%s1 + $0x2d4] sm:$0xf]
    %v208 = vld [vmem:[%s1 + $0x2d8] sm:$0xf]
    %v209 = vld [vmem:[%s1 + $0x2dc] sm:$0xf]
    %v210 = vld [vmem:[%s1 + $0x2e0] sm:$0xf]
    %v211 = vld [vmem:[%s1 + $0x2e4] sm:$0xf]
    %v212 = vld [vmem:[%s1 + $0x2e8] sm:$0xf]
    %v213 = vld [vmem:[%s1 + $0x2ec] sm:$0xf]
    %v214 = vld [vmem:[%s1 + $0x2f0] sm:$0xf]
    %v215 = vld [vmem:[%s1 + $0x2f4] sm:$0xf]
    %v216 = vld [vmem:[%s1 + $0x2f8] sm:$0xf]
    %v217 = vld [vmem:[%s1 + $0x2fc] sm:$0xf]
    %v218 = vld [vmem:[%s1 + $0x300] sm:$0xf]
    %v219 = vld [vmem:[%s1 + $0x304] sm:$0xf]
    %v220 = vld [vmem:[%s1 + $0x308] sm:$0xf]
    %v221 = vld [vmem:[%s1 + $0x30c] sm:$0xf]
    %v222 = vld [vmem:[%s1 + $0x310] sm:$0xf]
    %v223 = vld [vmem:[%s1 + $0x314] sm:$0xf]
    %v224 = vld [vmem:[%s1 + $0x318] sm:$0xf]
    %v225 = vld [vmem:[%s1 + $0x31c] sm:$0xf]
    %v226 = vld [vmem:[%s1 + $0x320] sm:$0xf]
    %v227 = vld [vmem:[%s1 + $0x324] sm:$0xf]
    %v228 = vld [vmem:[%s1 + $0x328] sm:$0xf]
    %v229 = vld [vmem:[%s1 + $0x32c] sm:$0xf]
    %v230 = vld [vmem:[%s1 + $0x330] sm:$0xf]
    %v231 = vld [vmem:[%s1 + $0x334] sm:$0xf]
    %v232 = vld [vmem:[%s1 + $0x338] sm:$0xf]
    %v233 = vld [vmem:[%s1 + $0x33c] sm:$0xf]
    %v234 = vld [vmem:[%s1 + $0x340] sm:$0xf]
    %v235 = vld [vmem:[%s1 + $0x344] sm:$0xf]
    %v236 = vld [vmem:[%s1 + $0x348] sm:$0xf]
    %v237 = vld [vmem:[%s1 + $0x34c] sm:$0xf]
    %v238 = vld [vmem:[%s1 + $0x350] sm:$0xf]
    %v239 = vld [vmem:[%s1 + $0x354] sm:$0xf]
    %v240 = vld [vmem:[%s1 + $0x358] sm:$0xf]
    %v241 = vld [vmem:[%s1 + $0x35c] sm:$0xf]
    %v242 = vld [vmem:[%s1 + $0x360] sm:$0xf]
    %v243 = vld [vmem:[%s1 + $0x364] sm:$0xf]
    %v244 = vld [vmem:[%s1 + $0x368] sm:$0xf]
    %v245 = vld [vmem:[%s1 + $0x36c] sm:$0xf]
    %v246 = vld [vmem:[%s1 + $0x370] sm:$0xf]
    %v247 = vld [vmem:[%s1 + $0x374] sm:$0xf]
    %v248 = vld [vmem:[%s1 + $0x378] sm:$0xf]
    %v249 = vld [vmem:[%s1 + $0x37c] sm:$0xf]
    %v250 = vld [vmem:[%s1 + $0x380] sm:$0xf]
    %v251 = vld [vmem:[%s1 + $0x384] sm:$0xf]
    %v252 = vld [vmem:[%s1 + $0x388] sm:$0xf]
    %v253 = vld [vmem:[%s1 + $0x38c] sm:$0xf]
    %v254 = vld [vmem:[%s1 + $0x390] sm:$0xf]
    %v255 = vld [vmem:[%s1 + $0x394] sm:$0xf]
    %v256 = vld [vmem:[%s1 + $0x398] sm:$0xf]
    %v257 = vld [vmem:[%s1 + $0x39c] sm:$0xf]
    %v258 = vld [vmem:[%s1 + $0x3a0] sm:$0xf]
    %v259 = vld [vmem:[%s1 + $0x3a4] sm:$0xf]
    %v260 = vld [vmem:[%s1 + $0x3a8] sm:$0xf]
    %v261 = vld [vmem:[%s1 + $0x3ac] sm:$0xf]
    %v262 = vld [vmem:[%s1 + $0x3b0] sm:$0xf]
    %v263 = vld [vmem:[%s1 + $0x3b4] sm:$0xf]
    %v264 = vld [vmem:[%s1 + $0x3b8] sm:$0xf]
    %v265 = vld [vmem:[%s1 + $0x3bc] sm:$0xf]
    %v266 = vld [vmem:[%s1 + $0x3c0] sm:$0xf]
    %v267 = vld [vmem:[%s1 + $0x3c4] sm:$0xf]
    %v268 = vld [vmem:[%s1 + $0x3c8] sm:$0xf]
    %v269 = vld [vmem:[%s1 + $0x3cc] sm:$0xf]
    %v270 = vld [vmem:[%s1 + $0x3d0] sm:$0xf]
    %v271 = vld [vmem:[%s1 + $0x3d4] sm:$0xf]
    %v272 = vld [vmem:[%s1 + $0x3d8] sm:$0xf]
    %v273 = vld [vmem:[%s1 + $0x3dc] sm:$0xf]
    %v274 = vld [vmem:[%s1 + $0x3e0] sm:$0xf]
    %v275 = vld [vmem:[%s1 + $0x3e4] sm:$0xf]
    %v276 = vld [vmem:[%s1 + $0x3e8] sm:$0xf]
    %v277 = vld [vmem:[%s1 + $0x3ec] sm:$0xf]
    %v278 = vld [vmem:[%s1 + $0x3f0] sm:$0xf]
    %v279 = vld [vmem:[%s1 + $0x3f4] sm:$0xf]
    %v280 = vld [vmem:[%s1 + $0x3f8] sm:$0xf]
    %v281 = vld [vmem:[%s1 + $0x3fc] sm:$0xf]
    %v282 = vld [vmem:[%s1 + $0x400] sm:$0xf]
    %v283 = vld [vmem:[%s1 + $0x404] sm:$0xf]
    %v284 = vld [vmem:[%s1 + $0x408] sm:$0xf]
    %v285 = vld [vmem:[%s1 + $0x40c] sm:$0xf]
    %v286 = vld [vmem:[%s1 + $0x410] sm:$0xf]
    %v287 = vld [vmem:[%s1 + $0x414] sm:$0xf]
    %v288 = vld [vmem:[%s1 + $0x418] sm:$0xf]
    %v289 = vld [vmem:[%s1 + $0x41c] sm:$0xf]
    %v290 = vld [vmem:[%s1 + $0x420] sm:$0xf]
    %v291 = vld [vmem:[%s1 + $0x424] sm:$0xf]
    %v292 = vld [vmem:[%s1 + $0x428] sm:$0xf]
    %v293 = vld [vmem:[%s1 + $0x42c] sm:$0xf]
    %v294 = vld [vmem:[%s1 + $0x430] sm:$0xf]
    %v295 = vld [vmem:[%s1 + $0x434] sm:$0xf]
    %v296 = vld [vmem:[%s1 + $0x438] sm:$0xf]
    %v297 = vld [vmem:[%s1 + $0x43c] sm:$0xf]
    %v298 = vld [vmem:[%s1 + $0x440] sm:$0xf]
    %v299 = vld [vmem:[%s1 + $0x444] sm:$0xf]
    %v300 = vld [vmem:[%s1 + $0x448] sm:$0xf]
    %v301 = vld [vmem:[%s1 + $0x44c] sm:$0xf]
    %v302 = vld [vmem:[%s1 + $0x450] sm:$0xf]
    %v303 = vld [vmem:[%s1 + $0x454] sm:$0xf]
    %v304 = vld [vmem:[%s1 + $0x458] sm:$0xf]
    %v305 = vld [vmem:[%s1 + $0x45c] sm:$0xf]
    %v306 = vld [vmem:[%s1 + $0x460] sm:$0xf]
    %v307 = vld [vmem:[%s1 + $0x464] sm:$0xf]
    %v308 = vld [vmem:[%s1 + $0x468] sm:$0xf]
    %v309 = vld [vmem:[%s1 + $0x46c] sm:$0xf]
    %v310 = vld [vmem:[%s1 + $0x470] sm:$0xf]
    %v311 = vld [vmem:[%s1 + $0x474] sm:$0xf]
    %v312 = vld [vmem:[%s1 + $0x478] sm:$0xf]
    %v313 = vld [vmem:[%s1 + $0x47c] sm:$0xf]
    %v314 = vld [vmem:[%s1 + $0x480] sm:$0xf]
    %v315 = vld [vmem:[%s1 + $0x484] sm:$0xf]
    %v316 = vld [vmem:[%s1 + $0x488] sm:$0xf]
    %v317 = vld [vmem:[%s1 + $0x48c] sm:$0xf]
    %v318 = vld [vmem:[%s1 + $0x490] sm:$0xf]
    %v319 = vld [vmem:[%s1 + $0x494] sm:$0xf]
    %v320 = vld [vmem:[%s1 + $0x498] sm:$0xf]
    %v321 = vld [vmem:[%s1 + $0x49c] sm:$0xf]
    %v322 = vld [vmem:[%s1 + $0x4a0] sm:$0xf]
    %v323 = vld [vmem:[%s1 + $0x4a4] sm:$0xf]
    %v324 = vld [vmem:[%s1 + $0x4a8] sm:$0xf]
    %v325 = vld [vmem:[%s1 + $0x4ac] sm:$0xf]
    %v326 = vld [vmem:[%s1 + $0x4b0] sm:$0xf]
    %v327 = vld [vmem:[%s1 + $0x4b4] sm:$0xf]
    %v328 = vld [vmem:[%s1 + $0x4b8] sm:$0xf]
    %v329 = vld [vmem:[%s1 + $0x4bc] sm:$0xf]
    %v330 = vld [vmem:[%s1 + $0x4c0] sm:$0xf]
    %v331 = vld [vmem:[%s1 + $0x4c4] sm:$0xf]
    %v332 = vld [vmem:[%s1 + $0x4c8] sm:$0xf]
    %v333 = vld [vmem:[%s1 + $0x4cc] sm:$0xf]
    %v334 = vld [vmem:[%s1 + $0x4d0] sm:$0xf]
    %v335 = vld [vmem:[%s1 + $0x4d4] sm:$0xf]
    %v336 = vld [vmem:[%s1 + $0x4d8] sm:$0xf]
    %v337 = vld [vmem:[%s1 + $0x4dc] sm:$0xf]
    %v338 = vld [vmem:[%s1 + $0x4e0] sm:$0xf]
    %v339 = vld [vmem:[%s1 + $0x4e4] sm:$0xf]
    %v340 = vld [vmem:[%s1 + $0x4e8] sm:$0xf]
    %v341 = vld [vmem:[%s1 + $0x4ec] sm:$0xf]
    %v342 = vld [vmem:[%s1 + $0x4f0] sm:$0xf]
    %v343 = vld [vmem:[%s1 + $0x4f4] sm:$0xf]
    %v344 = vld [vmem:[%s1 + $0x4f8] sm:$0xf]
    %v345 = vld [vmem:[%s1 + $0x4fc] sm:$0xf]
    %v346 = vld [vmem:[%s1 + $0x500] sm:$0xf]
    %v347 = vld [vmem:[%s1 + $0x504] sm:$0xf]
    %v348 = vld [vmem:[%s1 + $0x508] sm:$0xf]
    %v349 = vld [vmem:[%s1 + $0x50c] sm:$0xf]
    %v350 = vld [vmem:[%s1 + $0x510] sm:$0xf]
    %v351 = vld [vmem:[%s1 + $0x514] sm:$0xf]
    %v352 = vld [vmem:[%s1 + $0x518] sm:$0xf]
    %v353 = vld [vmem:[%s1 + $0x51c] sm:$0xf]
    %v354 = vld [vmem:[%s1 + $0x520] sm:$0xf]
    %v355 = vld [vmem:[%s1 + $0x524] sm:$0xf]
    %v356 = vld [vmem:[%s1 + $0x528] sm:$0xf]
    %v357 = vld [vmem:[%s1 + $0x52c] sm:$0xf]
    %v358 = vld [vmem:[%s1 + $0x530] sm:$0xf]
    %v359 = vld [vmem:[%s1 + $0x534] sm:$0xf]
    %v360 = vld [vmem:[%s1 + $0x538] sm:$0xf]
    %v361 = vld [vmem:[%s1 + $0x53c] sm:$0xf]
    %v362 = vld [vmem:[%s1 + $0x540] sm:$0xf]
    %v363 = vld [vmem:[%s1 + $0x544] sm:$0xf]
    %v364 = vld [vmem:[%s1 + $0x548] sm:$0xf]
    %v365 = vld [vmem:[%s1 + $0x54c] sm:$0xf]
    %v366 = vld [vmem:[%s1 + $0x550] sm:$0xf]
    %v367 = vld [vmem:[%s1 + $0x554] sm:$0xf]
    %v368 = vld [vmem:[%s1 + $0x558] sm:$0xf]
    %v369 = vld [vmem:[%s1 + $0x55c] sm:$0xf]
    %v370 = vld [vmem:[%s1 + $0x560] sm:$0xf]
    %v371 = vld [vmem:[%s1 + $0x564] sm:$0xf]
    %v372 = vld [vmem:[%s1 + $0x568] sm:$0xf]
    %v373 = vld [vmem:[%s1 + $0x56c] sm:$0xf]
    %v374 = vld [vmem:[%s1 + $0x570] sm:$0xf]
    %v375 = vld [vmem:[%s1 + $0x574] sm:$0xf]
    %v376 = vld [vmem:[%s1 + $0x578] sm:$0xf]
    %v377 = vld [vmem:[%s1 + $0x57c] sm:$0xf]
    %v378 = vld [vmem:[%s1 + $0x580] sm:$0xf]
    %v379 = vld [vmem:[%s1 + $0x584] sm:$0xf]
    %v380 = vld [vmem:[%s1 + $0x588] sm:$0xf]
    %v381 = vld [vmem:[%s1 + $0x58c] sm:$0xf]
    %v382 = vld [vmem:[%s1 + $0x590] sm:$0xf]
    %v383 = vld [vmem:[%s1 + $0x594] sm:$0xf]
    %v384 = vld [vmem:[%s1 + $0x598] sm:$0xf]
    %v385 = vld [vmem:[%s1 + $0x59c] sm:$0xf]
    %v386 = vld [vmem:[%s1 + $0x5a0] sm:$0xf]
    %v387 = vld [vmem:[%s1 + $0x5a4] sm:$0xf]
    %v388 = vld [vmem:[%s1 + $0x5a8] sm:$0xf]
    %v389 = vld [vmem:[%s1 + $0x5ac] sm:$0xf]
    %v390 = vld [vmem:[%s1 + $0x5b0] sm:$0xf]
    %v391 = vld [vmem:[%s1 + $0x5b4] sm:$0xf]
    %v392 = vld [vmem:[%s1 + $0x5b8] sm:$0xf]
    %v393 = vld [vmem:[%s1 + $0x5bc] sm:$0xf]
    %v394 = vld [vmem:[%s1 + $0x5c0] sm:$0xf]
    %v395 = vld [vmem:[%s1 + $0x5c4] sm:$0xf]
    %v396 = vld [vmem:[%s1 + $0x5c8] sm:$0xf]
    %v397 = vld [vmem:[%s1 + $0x5cc] sm:$0xf]
    %v398 = vld [vmem:[%s1 + $0x5d0] sm:$0xf]
    %v399 = vld [vmem:[%s1 + $0x5d4] sm:$0xf]
    %v400 = vld [vmem:[%s1 + $0x5d8] sm:$0xf]
    %v401 = vld [vmem:[%s1 + $0x5dc] sm:$0xf]
    %v402 = vld [vmem:[%s1 + $0x5e0] sm:$0xf]
    %v403 = vld [vmem:[%s1 + $0x5e4] sm:$0xf]
    %v404 = vld [vmem:[%s1 + $0x5e8] sm:$0xf]
    %v405 = vld [vmem:[%s1 + $0x5ec] sm:$0xf]
    %v406 = vld [vmem:[%s1 + $0x5f0] sm:$0xf]
    %v407 = vld [vmem:[%s1 + $0x5f4] sm:$0xf]
    %v408 = vld [vmem:[%s1 + $0x5f8] sm:$0xf]
    %v409 = vld [vmem:[%s1 + $0x5fc] sm:$0xf]
    %v410 = vld [vmem:[%s1 + $0x600] sm:$0xf]
    %v411 = vld [vmem:[%s1 + $0x604] sm:$0xf]
    %v412 = vld [vmem:[%s1 + $0x608] sm:$0xf]
    %v413 = vld [vmem:[%s1 + $0x60c] sm:$0xf]
    %v414 = vld [vmem:[%s1 + $0x610] sm:$0xf]
    %v415 = vld [vmem:[%s1 + $0x614] sm:$0xf]
    %v416 = vld [vmem:[%s1 + $0x618] sm:$0xf]
    %v417 = vld [vmem:[%s1 + $0x61c] sm:$0xf]
    %v418 = vld [vmem:[%s2] sm:$0x1]
    %v420 = vperm.slane %v418, 0
    %423 = vst [vmem:[#allocation1] ss:$9 sm:$0xff] %v22
    %v424 = vld [vmem:[#allocation1] sm:$0xff]
    %v425 = vld [vmem:[#allocation1 + $0x9] sm:$0xff]
    %v426 = vld [vmem:[#allocation1 + $0x12] sm:$0xff]
    %v427 = vld [vmem:[#allocation1 + $0x1b] sm:$0xff]
    %v428 = vld [vmem:[#allocation1 + $0x24] sm:$0xff]
    %v429 = vld [vmem:[#allocation1 + $0x2d] sm:$0xff]
    %v430 = vld [vmem:[#allocation1 + $0x36] sm:$0xff]
    %v431 = vld [vmem:[#allocation1 + $0x3f] sm:$0xff]
    %433 = vst [vmem:[#allocation1] ss:$9 sm:$0xff] %v23
    %v434 = vld [vmem:[#allocation1] sm:$0xff]
    %v435 = vld [vmem:[#allocation1 + $0x9] sm:$0xff]
    %v436 = vld [vmem:[#allocation1 + $0x12] sm:$0xff]
    %v437 = vld [vmem:[#allocation1 + $0x1b] sm:$0xff]
    %v438 = vld [vmem:[#allocation1 + $0x24] sm:$0xff]
    %v439 = vld [vmem:[#allocation1 + $0x2d] sm:$0xff]
    %v440 = vld [vmem:[#allocation1 + $0x36] sm:$0xff]
    %v441 = vld [vmem:[#allocation1 + $0x3f] sm:$0xff]
    %443 = vst [vmem:[#allocation1] ss:$9 sm:$0xff] %v24
    %v444 = vld [vmem:[#allocation1] sm:$0xff]
    %v445 = vld [vmem:[#allocation1 + $0x9] sm:$0xff]
    %v446 = vld [vmem:[#allocation1 + $0x12] sm:$0xff]
    %v447 = vld [vmem:[#allocation1 + $0x1b] sm:$0xff]
    %v448 = vld [vmem:[#allocation1 + $0x24] sm:$0xff]
    %v449 = vld [vmem:[#allocation1 + $0x2d] sm:$0xff]
    %v450 = vld [vmem:[#allocation1 + $0x36] sm:$0xff]
    %v451 = vld [vmem:[#allocation1 + $0x3f] sm:$0xff]
    %453 = vst [vmem:[#allocation1] ss:$9 sm:$0xff] %v25
    %v454 = vld [vmem:[#allocation1] sm:$0xff]
    %v871 = vunpack.c.l.b16 %v26
    %v872 = vunpack.c.l.b16 %v27
    %v873 = vunpack.c.l.b16 %v28
    %v874 = vunpack.c.l.b16 %v29
    %v875 = vunpack.c.l.b16 %v30
    %v876 = vunpack.c.l.b16 %v31
    %v877 = vunpack.c.l.b16 %v32
    %v878 = vunpack.c.l.b16 %v33
    %v879 = vunpack.c.l.b16 %v34
    %v880 = vunpack.c.l.b16 %v35
    %v881 = vunpack.c.l.b16 %v36
    %v882 = vunpack.c.l.b16 %v37
    %v883 = vunpack.c.l.b16 %v38
    %v884 = vunpack.c.l.b16 %v39
    %v885 = vunpack.c.l.b16 %v40
    %v886 = vunpack.c.l.b16 %v41
    %v887 = vunpack.c.l.b16 %v42
    %v888 = vunpack.c.l.b16 %v43
    %v889 = vunpack.c.l.b16 %v44
    %v890 = vunpack.c.l.b16 %v45
    %v891 = vunpack.c.l.b16 %v46
    %v892 = vunpack.c.l.b16 %v47
    %v893 = vunpack.c.l.b16 %v48
    %v894 = vunpack.c.l.b16 %v49
    %v895 = vunpack.c.l.b16 %v50
    %v896 = vunpack.c.l.b16 %v51
    %v897 = vunpack.c.l.b16 %v52
    %v898 = vunpack.c.l.b16 %v53
    %v899 = vunpack.c.l.b16 %v54
    %v900 = vunpack.c.l.b16 %v55
    %v901 = vunpack.c.l.b16 %v56
    %v902 = vunpack.c.l.b16 %v57
    %v903 = vunpack.c.l.b16 %v58
    %v904 = vunpack.c.l.b16 %v59
    %v905 = vunpack.c.l.b16 %v60
    %v906 = vunpack.c.l.b16 %v61
    %v907 = vunpack.c.l.b16 %v62
    %v908 = vunpack.c.l.b16 %v63
    %v909 = vunpack.c.l.b16 %v64
    %v910 = vunpack.c.l.b16 %v65
    %v911 = vunpack.c.l.b16 %v66
    %v912 = vunpack.c.l.b16 %v67
    %v913 = vunpack.c.l.b16 %v68
    %v914 = vunpack.c.l.b16 %v69
    %v915 = vunpack.c.l.b16 %v70
    %v916 = vunpack.c.l.b16 %v71
    %v917 = vunpack.c.l.b16 %v72
    %v918 = vunpack.c.l.b16 %v73
    %v919 = vunpack.c.l.b16 %v74
    %v920 = vunpack.c.l.b16 %v75
    %v921 = vunpack.c.l.b16 %v76
    %v922 = vunpack.c.l.b16 %v77
    %v923 = vunpack.c.l.b16 %v78
    %v924 = vunpack.c.l.b16 %v79
    %v925 = vunpack.c.l.b16 %v80
    %v926 = vunpack.c.l.b16 %v81
    %v927 = vunpack.c.l.b16 %v82
    %v928 = vunpack.c.l.b16 %v83
    %v929 = vunpack.c.l.b16 %v84
    %v930 = vunpack.c.l.b16 %v85
    %v931 = vunpack.c.l.b16 %v86
    %v932 = vunpack.c.l.b16 %v87
    %v933 = vunpack.c.l.b16 %v88
    %v934 = vunpack.c.l.b16 %v89
    %v935 = vunpack.c.l.b16 %v90
    %v936 = vunpack.c.l.b16 %v91
    %v937 = vunpack.c.l.b16 %v92
    %v938 = vunpack.c.l.b16 %v93
    %v939 = vunpack.c.l.b16 %v94
    %v940 = vunpack.c.l.b16 %v95
    %v941 = vunpack.c.l.b16 %v96
    %v942 = vunpack.c.l.b16 %v97
    %v943 = vunpack.c.l.b16 %v98
    %v944 = vunpack.c.l.b16 %v99
    %v945 = vunpack.c.l.b16 %v100
    %v946 = vunpack.c.l.b16 %v101
    %v947 = vunpack.c.l.b16 %v102
    %v948 = vunpack.c.l.b16 %v103
    %v949 = vunpack.c.l.b16 %v104
    %v950 = vunpack.c.l.b16 %v105
    %v951 = vunpack.c.l.b16 %v106
    %v952 = vunpack.c.l.b16 %v107
    %v953 = vunpack.c.l.b16 %v108
    %v954 = vunpack.c.l.b16 %v109
    %v955 = vunpack.c.l.b16 %v110
    %v956 = vunpack.c.l.b16 %v111
    %v957 = vunpack.c.l.b16 %v112
    %v958 = vunpack.c.l.b16 %v113
    %v959 = vunpack.c.l.b16 %v114
    %v960 = vunpack.c.l.b16 %v115
    %v961 = vunpack.c.l.b16 %v116
    %v962 = vunpack.c.l.b16 %v117
    %v963 = vunpack.c.l.b16 %v118
    %v964 = vunpack.c.l.b16 %v119
    %v965 = vunpack.c.l.b16 %v120
    %v966 = vunpack.c.l.b16 %v121
    %v967 = vunpack.c.l.b16 %v122
    %v968 = vunpack.c.l.b16 %v123
    %v969 = vunpack.c.l.b16 %v124
    %v970 = vunpack.c.l.b16 %v125
    %v971 = vunpack.c.l.b16 %v126
    %v972 = vunpack.c.l.b16 %v127
    %v973 = vunpack.c.l.b16 %v128
    %v974 = vunpack.c.l.b16 %v129
    %v975 = vunpack.c.l.b16 %v130
    %v976 = vunpack.c.l.b16 %v131
    %v977 = vunpack.c.l.b16 %v132
    %v978 = vunpack.c.l.b16 %v133
    %v979 = vunpack.c.l.b16 %v134
    %v980 = vunpack.c.l.b16 %v135
    %v981 = vunpack.c.l.b16 %v136
    %v982 = vunpack.c.l.b16 %v137
    %v983 = vunpack.c.l.b16 %v138
    %v984 = vunpack.c.l.b16 %v139
    %v985 = vunpack.c.l.b16 %v140
    %v986 = vunpack.c.l.b16 %v141
    %v987 = vunpack.c.l.b16 %v142
    %v988 = vunpack.c.l.b16 %v143
    %v989 = vunpack.c.l.b16 %v144
    %v990 = vunpack.c.l.b16 %v145
    %v991 = vunpack.c.l.b16 %v146
    %v992 = vunpack.c.l.b16 %v147
    %v993 = vunpack.c.l.b16 %v148
    %v994 = vunpack.c.l.b16 %v149
    %v995 = vunpack.c.l.b16 %v150
    %v996 = vunpack.c.l.b16 %v151
    %v997 = vunpack.c.l.b16 %v152
    %v998 = vunpack.c.l.b16 %v153
    %v999 = vunpack.c.l.b16 %v154
    %v1000 = vunpack.c.l.b16 %v155
    %v1001 = vunpack.c.l.b16 %v156
    %v1002 = vunpack.c.l.b16 %v157
    %v1003 = vunpack.c.l.b16 %v158
    %v1004 = vunpack.c.l.b16 %v159
    %v1005 = vunpack.c.l.b16 %v160
    %v1006 = vunpack.c.l.b16 %v161
    %v1007 = vunpack.c.l.b16 %v162
    %v1008 = vunpack.c.l.b16 %v163
    %v1009 = vunpack.c.l.b16 %v164
    %v1010 = vunpack.c.l.b16 %v165
    %v1011 = vunpack.c.l.b16 %v166
    %v1012 = vunpack.c.l.b16 %v167
    %v1013 = vunpack.c.l.b16 %v168
    %v1014 = vunpack.c.l.b16 %v169
    %v1015 = vunpack.c.l.b16 %v170
    %v1016 = vunpack.c.l.b16 %v171
    %v1017 = vunpack.c.l.b16 %v172
    %v1018 = vunpack.c.l.b16 %v173
    %v1019 = vunpack.c.l.b16 %v174
    %v1020 = vunpack.c.l.b16 %v175
    %v1021 = vunpack.c.l.b16 %v176
    %v1022 = vunpack.c.l.b16 %v177
    %v1023 = vunpack.c.l.b16 %v178
    %v1024 = vunpack.c.l.b16 %v179
    %v1025 = vunpack.c.l.b16 %v180
    %v1026 = vunpack.c.l.b16 %v181
    %v1027 = vunpack.c.l.b16 %v182
    %v1028 = vunpack.c.l.b16 %v183
    %v1029 = vunpack.c.l.b16 %v184
    %v1030 = vunpack.c.l.b16 %v185
    %v1031 = vunpack.c.l.b16 %v186
    %v1032 = vunpack.c.l.b16 %v187
    %v1033 = vunpack.c.l.b16 %v188
    %v1034 = vunpack.c.l.b16 %v189
    %v1035 = vunpack.c.l.b16 %v190
    %v1036 = vunpack.c.l.b16 %v191
    %v1037 = vunpack.c.l.b16 %v192
    %v1038 = vunpack.c.l.b16 %v193
    %v1039 = vunpack.c.l.b16 %v194
    %v1040 = vunpack.c.l.b16 %v195
    %v1041 = vunpack.c.l.b16 %v196
    %v1042 = vunpack.c.l.b16 %v197
    %v1043 = vunpack.c.l.b16 %v198
    %v1044 = vunpack.c.l.b16 %v199
    %v1045 = vunpack.c.l.b16 %v200
    %v1046 = vunpack.c.l.b16 %v201
    %v1047 = vunpack.c.l.b16 %v202
    %v1048 = vunpack.c.l.b16 %v203
    %v1049 = vunpack.c.l.b16 %v204
    %v1050 = vunpack.c.l.b16 %v205
    %v1051 = vunpack.c.l.b16 %v206
    %v1052 = vunpack.c.l.b16 %v207
    %v1053 = vunpack.c.l.b16 %v208
    %v1054 = vunpack.c.l.b16 %v209
    %v1055 = vunpack.c.l.b16 %v210
    %v1056 = vunpack.c.l.b16 %v211
    %v1057 = vunpack.c.l.b16 %v212
    %v1058 = vunpack.c.l.b16 %v213
    %v1059 = vunpack.c.l.b16 %v214
    %v1060 = vunpack.c.l.b16 %v215
    %v1061 = vunpack.c.l.b16 %v216
    %v1062 = vunpack.c.l.b16 %v217
    %v1063 = vunpack.c.l.b16 %v218
    %v1064 = vunpack.c.l.b16 %v219
    %v1065 = vunpack.c.l.b16 %v220
    %v1066 = vunpack.c.l.b16 %v221
    %v1067 = vunpack.c.l.b16 %v222
    %v1068 = vunpack.c.l.b16 %v223
    %v1069 = vunpack.c.l.b16 %v224
    %v1070 = vunpack.c.l.b16 %v225
    %v1071 = vunpack.c.l.b16 %v226
    %v1072 = vunpack.c.l.b16 %v227
    %v1073 = vunpack.c.l.b16 %v228
    %v1074 = vunpack.c.l.b16 %v229
    %v1075 = vunpack.c.l.b16 %v230
    %v1076 = vunpack.c.l.b16 %v231
    %v1077 = vunpack.c.l.b16 %v232
    %v1078 = vunpack.c.l.b16 %v233
    %v1079 = vunpack.c.l.b16 %v234
    %v1080 = vunpack.c.l.b16 %v235
    %v1081 = vunpack.c.l.b16 %v236
    %v1082 = vunpack.c.l.b16 %v237
    %v1083 = vunpack.c.l.b16 %v238
    %v1084 = vunpack.c.l.b16 %v239
    %v1085 = vunpack.c.l.b16 %v240
    %v1086 = vunpack.c.l.b16 %v241
    %v1087 = vunpack.c.l.b16 %v242
    %v1088 = vunpack.c.l.b16 %v243
    %v1089 = vunpack.c.l.b16 %v244
    %v1090 = vunpack.c.l.b16 %v245
    %v1091 = vunpack.c.l.b16 %v246
    %v1092 = vunpack.c.l.b16 %v247
    %v1093 = vunpack.c.l.b16 %v248
    %v1094 = vunpack.c.l.b16 %v249
    %v1095 = vunpack.c.l.b16 %v250
    %v1096 = vunpack.c.l.b16 %v251
    %v1097 = vunpack.c.l.b16 %v252
    %v1098 = vunpack.c.l.b16 %v253
    %v1099 = vunpack.c.l.b16 %v254
    %v1100 = vunpack.c.l.b16 %v255
    %v1101 = vunpack.c.l.b16 %v256
    %v1102 = vunpack.c.l.b16 %v257
    %v1103 = vunpack.c.l.b16 %v258
    %v1104 = vunpack.c.l.b16 %v259
    %v1105 = vunpack.c.l.b16 %v260
    %v1106 = vunpack.c.l.b16 %v261
    %v1107 = vunpack.c.l.b16 %v262
    %v1108 = vunpack.c.l.b16 %v263
    %v1109 = vunpack.c.l.b16 %v264
    %v1110 = vunpack.c.l.b16 %v265
    %v1111 = vunpack.c.l.b16 %v266
    %v1112 = vunpack.c.l.b16 %v267
    %v1113 = vunpack.c.l.b16 %v268
    %v1114 = vunpack.c.l.b16 %v269
    %v1115 = vunpack.c.l.b16 %v270
    %v1116 = vunpack.c.l.b16 %v271
    %v1117 = vunpack.c.l.b16 %v272
    %v1118 = vunpack.c.l.b16 %v273
    %v1119 = vunpack.c.l.b16 %v274
    %v1120 = vunpack.c.l.b16 %v275
    %v1121 = vunpack.c.l.b16 %v276
    %v1122 = vunpack.c.l.b16 %v277
    %v1123 = vunpack.c.l.b16 %v278
    %v1124 = vunpack.c.l.b16 %v279
    %v1125 = vunpack.c.l.b16 %v280
    %v1126 = vunpack.c.l.b16 %v281
    %v1127 = vunpack.c.l.b16 %v282
    %v1128 = vunpack.c.l.b16 %v283
    %v1129 = vunpack.c.l.b16 %v284
    %v1130 = vunpack.c.l.b16 %v285
    %v1131 = vunpack.c.l.b16 %v286
    %v1132 = vunpack.c.l.b16 %v287
    %v1133 = vunpack.c.l.b16 %v288
    %v1134 = vunpack.c.l.b16 %v289
    %v1135 = vunpack.c.l.b16 %v290
    %v1136 = vunpack.c.l.b16 %v291
    %v1137 = vunpack.c.l.b16 %v292
    %v1138 = vunpack.c.l.b16 %v293
    %v1139 = vunpack.c.l.b16 %v294
    %v1140 = vunpack.c.l.b16 %v295
    %v1141 = vunpack.c.l.b16 %v296
    %v1142 = vunpack.c.l.b16 %v297
    %v1143 = vunpack.c.l.b16 %v298
    %v1144 = vunpack.c.l.b16 %v299
    %v1145 = vunpack.c.l.b16 %v300
    %v1146 = vunpack.c.l.b16 %v301
    %v1147 = vunpack.c.l.b16 %v302
    %v1148 = vunpack.c.l.b16 %v303
    %v1149 = vunpack.c.l.b16 %v304
    %v1150 = vunpack.c.l.b16 %v305
    %v1151 = vunpack.c.l.b16 %v306
    %v1152 = vunpack.c.l.b16 %v307
    %v1153 = vunpack.c.l.b16 %v308
    %v1154 = vunpack.c.l.b16 %v309
    %v1155 = vunpack.c.l.b16 %v310
    %v1156 = vunpack.c.l.b16 %v311
    %v1157 = vunpack.c.l.b16 %v312
    %v1158 = vunpack.c.l.b16 %v313
    %v1159 = vunpack.c.l.b16 %v314
    %v1160 = vunpack.c.l.b16 %v315
    %v1161 = vunpack.c.l.b16 %v316
    %v1162 = vunpack.c.l.b16 %v317
    %v1163 = vunpack.c.l.b16 %v318
    %v1164 = vunpack.c.l.b16 %v319
    %v1165 = vunpack.c.l.b16 %v320
    %v1166 = vunpack.c.l.b16 %v321
    %v1167 = vunpack.c.l.b16 %v322
    %v1168 = vunpack.c.l.b16 %v323
    %v1169 = vunpack.c.l.b16 %v324
    %v1170 = vunpack.c.l.b16 %v325
    %v1171 = vunpack.c.l.b16 %v326
    %v1172 = vunpack.c.l.b16 %v327
    %v1173 = vunpack.c.l.b16 %v328
    %v1174 = vunpack.c.l.b16 %v329
    %v1175 = vunpack.c.l.b16 %v330
    %v1176 = vunpack.c.l.b16 %v331
    %v1177 = vunpack.c.l.b16 %v332
    %v1178 = vunpack.c.l.b16 %v333
    %v1179 = vunpack.c.l.b16 %v334
    %v1180 = vunpack.c.l.b16 %v335
    %v1181 = vunpack.c.l.b16 %v336
    %v1182 = vunpack.c.l.b16 %v337
    %v1183 = vunpack.c.l.b16 %v338
    %v1184 = vunpack.c.l.b16 %v339
    %v1185 = vunpack.c.l.b16 %v340
    %v1186 = vunpack.c.l.b16 %v341
    %v1187 = vunpack.c.l.b16 %v342
    %v1188 = vunpack.c.l.b16 %v343
    %v1189 = vunpack.c.l.b16 %v344
    %v1190 = vunpack.c.l.b16 %v345
    %v1191 = vunpack.c.l.b16 %v346
    %v1192 = vunpack.c.l.b16 %v347
    %v1193 = vunpack.c.l.b16 %v348
    %v1194 = vunpack.c.l.b16 %v349
    %v1195 = vunpack.c.l.b16 %v350
    %v1196 = vunpack.c.l.b16 %v351
    %v1197 = vunpack.c.l.b16 %v352
    %v1198 = vunpack.c.l.b16 %v353
    %v1199 = vunpack.c.l.b16 %v354
    %v1200 = vunpack.c.l.b16 %v355
    %v1201 = vunpack.c.l.b16 %v356
    %v1202 = vunpack.c.l.b16 %v357
    %v1203 = vunpack.c.l.b16 %v358
    %v1204 = vunpack.c.l.b16 %v359
    %v1205 = vunpack.c.l.b16 %v360
    %v1206 = vunpack.c.l.b16 %v361
    %v1207 = vunpack.c.l.b16 %v362
    %v1208 = vunpack.c.l.b16 %v363
    %v1209 = vunpack.c.l.b16 %v364
    %v1210 = vunpack.c.l.b16 %v365
    %v1211 = vunpack.c.l.b16 %v366
    %v1212 = vunpack.c.l.b16 %v367
    %v1213 = vunpack.c.l.b16 %v368
    %v1214 = vunpack.c.l.b16 %v369
    %v1215 = vunpack.c.l.b16 %v370
    %v1216 = vunpack.c.l.b16 %v371
    %v1217 = vunpack.c.l.b16 %v372
    %v1218 = vunpack.c.l.b16 %v373
    %v1219 = vunpack.c.l.b16 %v374
    %v1220 = vunpack.c.l.b16 %v375
    %v1221 = vunpack.c.l.b16 %v376
    %v1222 = vunpack.c.l.b16 %v377
    %v1223 = vunpack.c.l.b16 %v378
    %v1224 = vunpack.c.l.b16 %v379
    %v1225 = vunpack.c.l.b16 %v380
    %v1226 = vunpack.c.l.b16 %v381
    %v1227 = vunpack.c.l.b16 %v382
    %v1228 = vunpack.c.l.b16 %v383
    %v1229 = vunpack.c.l.b16 %v384
    %v1230 = vunpack.c.l.b16 %v385
    %v1231 = vunpack.c.l.b16 %v386
    %v1232 = vunpack.c.l.b16 %v387
    %v1233 = vunpack.c.l.b16 %v388
    %v1234 = vunpack.c.l.b16 %v389
    %v1235 = vunpack.c.l.b16 %v390
    %v1236 = vunpack.c.l.b16 %v391
    %v1237 = vunpack.c.l.b16 %v392
    %v1238 = vunpack.c.l.b16 %v393
    %v1239 = vunpack.c.l.b16 %v394
    %v1240 = vunpack.c.l.b16 %v395
    %v1241 = vunpack.c.l.b16 %v396
    %v1242 = vunpack.c.l.b16 %v397
    %v1243 = vunpack.c.l.b16 %v398
    %v1244 = vunpack.c.l.b16 %v399
    %v1245 = vunpack.c.l.b16 %v400
    %v1246 = vunpack.c.l.b16 %v401
    %v1247 = vunpack.c.l.b16 %v402
    %v1248 = vunpack.c.l.b16 %v403
    %v1249 = vunpack.c.l.b16 %v404
    %v1250 = vunpack.c.l.b16 %v405
    %v1251 = vunpack.c.l.b16 %v406
    %v1252 = vunpack.c.l.b16 %v407
    %v1253 = vunpack.c.l.b16 %v408
    %v1254 = vunpack.c.l.b16 %v409
    %v1255 = vunpack.c.l.b16 %v410
    %v1256 = vunpack.c.l.b16 %v411
    %v1257 = vunpack.c.l.b16 %v412
    %v1258 = vunpack.c.l.b16 %v413
    %v1259 = vunpack.c.l.b16 %v414
    %v1260 = vunpack.c.l.b16 %v415
    %v1261 = vunpack.c.l.b16 %v416
    %v1262 = vunpack.c.l.b16 %v417
    %v1263 = vpack.c.b16 %v872, %v871
    %v1264 = vpack.c.b16 %v874, %v873
    %v1265 = vpack.c.b16 %v876, %v875
    %v1266 = vpack.c.b16 %v878, %v877
    %v1267 = vpack.c.b16 %v880, %v879
    %v1268 = vpack.c.b16 %v882, %v881
    %v1269 = vpack.c.b16 %v884, %v883
    %v1270 = vpack.c.b16 %v886, %v885
    %v1271 = vpack.c.b16 %v888, %v887
    %v1272 = vpack.c.b16 %v890, %v889
    %v1273 = vpack.c.b16 %v892, %v891
    %v1274 = vpack.c.b16 %v894, %v893
    %v1275 = vpack.c.b16 %v896, %v895
    %v1276 = vpack.c.b16 %v898, %v897
    %v1277 = vpack.c.b16 %v900, %v899
    %v1278 = vpack.c.b16 %v902, %v901
    %v1279 = vpack.c.b16 %v904, %v903
    %v1280 = vpack.c.b16 %v906, %v905
    %v1281 = vpack.c.b16 %v908, %v907
    %v1282 = vpack.c.b16 %v910, %v909
    %v1283 = vpack.c.b16 %v912, %v911
    %v1284 = vpack.c.b16 %v914, %v913
    %v1285 = vpack.c.b16 %v916, %v915
    %v1286 = vpack.c.b16 %v918, %v917
    %v1287 = vpack.c.b16 %v920, %v919
    %v1288 = vpack.c.b16 %v922, %v921
    %v1289 = vpack.c.b16 %v924, %v923
    %v1290 = vpack.c.b16 %v926, %v925
    %v1291 = vpack.c.b16 %v928, %v927
    %v1292 = vpack.c.b16 %v930, %v929
    %v1293 = vpack.c.b16 %v932, %v931
    %v1294 = vpack.c.b16 %v934, %v933
    %v1295 = vpack.c.b16 %v936, %v935
    %v1296 = vpack.c.b16 %v938, %v937
    %v1297 = vpack.c.b16 %v940, %v939
    %v1298 = vpack.c.b16 %v942, %v941
    %v1299 = vpack.c.b16 %v944, %v943
    %v1300 = vpack.c.b16 %v946, %v945
    %v1301 = vpack.c.b16 %v948, %v947
    %v1302 = vpack.c.b16 %v950, %v949
    %v1303 = vpack.c.b16 %v952, %v951
    %v1304 = vpack.c.b16 %v954, %v953
    %v1305 = vpack.c.b16 %v956, %v955
    %v1306 = vpack.c.b16 %v958, %v957
    %v1307 = vpack.c.b16 %v960, %v959
    %v1308 = vpack.c.b16 %v962, %v961
    %v1309 = vpack.c.b16 %v964, %v963
    %v1310 = vpack.c.b16 %v966, %v965
    %v1311 = vpack.c.b16 %v968, %v967
    %v1312 = vpack.c.b16 %v970, %v969
    %v1313 = vpack.c.b16 %v972, %v971
    %v1314 = vpack.c.b16 %v974, %v973
    %v1315 = vpack.c.b16 %v976, %v975
    %v1316 = vpack.c.b16 %v978, %v977
    %v1317 = vpack.c.b16 %v980, %v979
    %v1318 = vpack.c.b16 %v982, %v981
    %v1319 = vpack.c.b16 %v984, %v983
    %v1320 = vpack.c.b16 %v986, %v985
    %v1321 = vpack.c.b16 %v988, %v987
    %v1322 = vpack.c.b16 %v990, %v989
    %v1323 = vpack.c.b16 %v992, %v991
    %v1324 = vpack.c.b16 %v994, %v993
    %v1325 = vpack.c.b16 %v996, %v995
    %v1326 = vpack.c.b16 %v998, %v997
    %v1327 = vpack.c.b16 %v1000, %v999
    %v1328 = vpack.c.b16 %v1002, %v1001
    %v1329 = vpack.c.b16 %v1004, %v1003
    %v1330 = vpack.c.b16 %v1006, %v1005
    %v1331 = vpack.c.b16 %v1008, %v1007
    %v1332 = vpack.c.b16 %v1010, %v1009
    %v1333 = vpack.c.b16 %v1012, %v1011
    %v1334 = vpack.c.b16 %v1014, %v1013
    %v1335 = vpack.c.b16 %v1016, %v1015
    %v1336 = vpack.c.b16 %v1018, %v1017
    %v1337 = vpack.c.b16 %v1020, %v1019
    %v1338 = vpack.c.b16 %v1022, %v1021
    %v1339 = vpack.c.b16 %v1024, %v1023
    %v1340 = vpack.c.b16 %v1026, %v1025
    %v1341 = vpack.c.b16 %v1028, %v1027
    %v1342 = vpack.c.b16 %v1030, %v1029
    %v1343 = vpack.c.b16 %v1032, %v1031
    %v1344 = vpack.c.b16 %v1034, %v1033
    %v1345 = vpack.c.b16 %v1036, %v1035
    %v1346 = vpack.c.b16 %v1038, %v1037
    %v1347 = vpack.c.b16 %v1040, %v1039
    %v1348 = vpack.c.b16 %v1042, %v1041
    %v1349 = vpack.c.b16 %v1044, %v1043
    %v1350 = vpack.c.b16 %v1046, %v1045
    %v1351 = vpack.c.b16 %v1048, %v1047
    %v1352 = vpack.c.b16 %v1050, %v1049
    %v1353 = vpack.c.b16 %v1052, %v1051
    %v1354 = vpack.c.b16 %v1054, %v1053
    %v1355 = vpack.c.b16 %v1056, %v1055
    %v1356 = vpack.c.b16 %v1058, %v1057
    %v1357 = vpack.c.b16 %v1060, %v1059
    %v1358 = vpack.c.b16 %v1062, %v1061
    %v1359 = vpack.c.b16 %v1064, %v1063
    %v1360 = vpack.c.b16 %v1066, %v1065
    %v1361 = vpack.c.b16 %v1068, %v1067
    %v1362 = vpack.c.b16 %v1070, %v1069
    %v1363 = vpack.c.b16 %v1072, %v1071
    %v1364 = vpack.c.b16 %v1074, %v1073
    %v1365 = vpack.c.b16 %v1076, %v1075
    %v1366 = vpack.c.b16 %v1078, %v1077
    %v1367 = vpack.c.b16 %v1080, %v1079
    %v1368 = vpack.c.b16 %v1082, %v1081
    %v1369 = vpack.c.b16 %v1084, %v1083
    %v1370 = vpack.c.b16 %v1086, %v1085
    %v1371 = vpack.c.b16 %v1088, %v1087
    %v1372 = vpack.c.b16 %v1090, %v1089
    %v1373 = vpack.c.b16 %v1092, %v1091
    %v1374 = vpack.c.b16 %v1094, %v1093
    %v1375 = vpack.c.b16 %v1096, %v1095
    %v1376 = vpack.c.b16 %v1098, %v1097
    %v1377 = vpack.c.b16 %v1100, %v1099
    %v1378 = vpack.c.b16 %v1102, %v1101
    %v1379 = vpack.c.b16 %v1104, %v1103
    %v1380 = vpack.c.b16 %v1106, %v1105
    %v1381 = vpack.c.b16 %v1108, %v1107
    %v1382 = vpack.c.b16 %v1110, %v1109
    %v1383 = vpack.c.b16 %v1112, %v1111
    %v1384 = vpack.c.b16 %v1114, %v1113
    %v1385 = vpack.c.b16 %v1116, %v1115
    %v1386 = vpack.c.b16 %v1118, %v1117
    %v1387 = vpack.c.b16 %v1120, %v1119
    %v1388 = vpack.c.b16 %v1122, %v1121
    %v1389 = vpack.c.b16 %v1124, %v1123
    %v1390 = vpack.c.b16 %v1126, %v1125
    %v1391 = vpack.c.b16 %v1128, %v1127
    %v1392 = vpack.c.b16 %v1130, %v1129
    %v1393 = vpack.c.b16 %v1132, %v1131
    %v1394 = vpack.c.b16 %v1134, %v1133
    %v1395 = vpack.c.b16 %v1136, %v1135
    %v1396 = vpack.c.b16 %v1138, %v1137
    %v1397 = vpack.c.b16 %v1140, %v1139
    %v1398 = vpack.c.b16 %v1142, %v1141
    %v1399 = vpack.c.b16 %v1144, %v1143
    %v1400 = vpack.c.b16 %v1146, %v1145
    %v1401 = vpack.c.b16 %v1148, %v1147
    %v1402 = vpack.c.b16 %v1150, %v1149
    %v1403 = vpack.c.b16 %v1152, %v1151
    %v1404 = vpack.c.b16 %v1154, %v1153
    %v1405 = vpack.c.b16 %v1156, %v1155
    %v1406 = vpack.c.b16 %v1158, %v1157
    %v1407 = vpack.c.b16 %v1160, %v1159
    %v1408 = vpack.c.b16 %v1162, %v1161
    %v1409 = vpack.c.b16 %v1164, %v1163
    %v1410 = vpack.c.b16 %v1166, %v1165
    %v1411 = vpack.c.b16 %v1168, %v1167
    %v1412 = vpack.c.b16 %v1170, %v1169
    %v1413 = vpack.c.b16 %v1172, %v1171
    %v1414 = vpack.c.b16 %v1174, %v1173
    %v1415 = vpack.c.b16 %v1176, %v1175
    %v1416 = vpack.c.b16 %v1178, %v1177
    %v1417 = vpack.c.b16 %v1180, %v1179
    %v1418 = vpack.c.b16 %v1182, %v1181
    %v1419 = vpack.c.b16 %v1184, %v1183
    %v1420 = vpack.c.b16 %v1186, %v1185
    %v1421 = vpack.c.b16 %v1188, %v1187
    %v1422 = vpack.c.b16 %v1190, %v1189
    %v1423 = vpack.c.b16 %v1192, %v1191
    %v1424 = vpack.c.b16 %v1194, %v1193
    %v1425 = vpack.c.b16 %v1196, %v1195
    %v1426 = vpack.c.b16 %v1198, %v1197
    %v1427 = vpack.c.b16 %v1200, %v1199
    %v1428 = vpack.c.b16 %v1202, %v1201
    %v1429 = vpack.c.b16 %v1204, %v1203
    %v1430 = vpack.c.b16 %v1206, %v1205
    %v1431 = vpack.c.b16 %v1208, %v1207
    %v1432 = vpack.c.b16 %v1210, %v1209
    %v1433 = vpack.c.b16 %v1212, %v1211
    %v1434 = vpack.c.b16 %v1214, %v1213
    %v1435 = vpack.c.b16 %v1216, %v1215
    %v1436 = vpack.c.b16 %v1218, %v1217
    %v1437 = vpack.c.b16 %v1220, %v1219
    %v1438 = vpack.c.b16 %v1222, %v1221
    %v1439 = vpack.c.b16 %v1224, %v1223
    %v1440 = vpack.c.b16 %v1226, %v1225
    %v1441 = vpack.c.b16 %v1228, %v1227
    %v1442 = vpack.c.b16 %v1230, %v1229
    %v1443 = vpack.c.b16 %v1232, %v1231
    %v1444 = vpack.c.b16 %v1234, %v1233
    %v1445 = vpack.c.b16 %v1236, %v1235
    %v1446 = vpack.c.b16 %v1238, %v1237
    %v1447 = vpack.c.b16 %v1240, %v1239
    %v1448 = vpack.c.b16 %v1242, %v1241
    %v1449 = vpack.c.b16 %v1244, %v1243
    %v1450 = vpack.c.b16 %v1246, %v1245
    %v1451 = vpack.c.b16 %v1248, %v1247
    %v1452 = vpack.c.b16 %v1250, %v1249
    %v1453 = vpack.c.b16 %v1252, %v1251
    %v1454 = vpack.c.b16 %v1254, %v1253
    %v1455 = vpack.c.b16 %v1256, %v1255
    %v1456 = vpack.c.b16 %v1258, %v1257
    %v1457 = vpack.c.b16 %v1260, %v1259
    %v1458 = vpack.c.b16 %v1262, %v1261
    %vm1655 = vcmask 523264
    %v1656 = vsel %vm1655, %v454, 0
    %1658 = vmatpush.bf16.msra.mxu0 %v1270
    %1659 = vmatpush.bf16.msra.mxu0 %v1269
    %1660 = vmatpush.bf16.msra.mxu0 %v1268
    %1661 = vmatpush.bf16.msra.mxu0 %v1267
    %1662 = vmatpush.bf16.msra.mxu0 %v1266
    %1663 = vmatpush.bf16.msra.mxu0 %v1265
    %1664 = vmatpush.bf16.msra.mxu0 %v1264
    %1665 = vmatpush.bf16.msra.mxu0 %v1263
    %1666 = vmatmul.bf16.gmra.mxu0 %v424
    %v1667 = vpop.f32.mrf.mxu0
    %v1668 = vadd.f32 %v420, %v1667
    %v1669 = vpop.f32.mrf.mxu0
    %1670 = vdwg.mxu0
    %1671 = vmatpush.bf16.msra.mxu0 %v1278
    %1672 = vmatpush.bf16.msra.mxu0 %v1277
    %1673 = vmatpush.bf16.msra.mxu0 %v1276
    %1674 = vmatpush.bf16.msra.mxu0 %v1275
    %1675 = vmatpush.bf16.msra.mxu0 %v1274
    %1676 = vmatpush.bf16.msra.mxu0 %v1273
    %1677 = vmatpush.bf16.msra.mxu0 %v1272
    %1678 = vmatpush.bf16.msra.mxu0 %v1271
    %1679 = vmatmul.bf16.gmra.mxu0 %v425
    %v1680 = vpop.f32.mrf.mxu0
    %v1681 = vadd.f32 %v1668, %v1680
    %v1682 = vpop.f32.mrf.mxu0
    %1683 = vdwg.mxu0
    %1684 = vmatpush.bf16.msra.mxu0 %v1286
    %1685 = vmatpush.bf16.msra.mxu0 %v1285
    %1686 = vmatpush.bf16.msra.mxu0 %v1284
    %1687 = vmatpush.bf16.msra.mxu0 %v1283
    %1688 = vmatpush.bf16.msra.mxu0 %v1282
    %1689 = vmatpush.bf16.msra.mxu0 %v1281
    %1690 = vmatpush.bf16.msra.mxu0 %v1280
    %1691 = vmatpush.bf16.msra.mxu0 %v1279
    %1692 = vmatmul.bf16.gmra.mxu0 %v426
    %v1693 = vpop.f32.mrf.mxu0
    %v1694 = vadd.f32 %v1681, %v1693
    %v1695 = vpop.f32.mrf.mxu0
    %1696 = vdwg.mxu0
    %1697 = vmatpush.bf16.msra.mxu0 %v1294
    %1698 = vmatpush.bf16.msra.mxu0 %v1293
    %1699 = vmatpush.bf16.msra.mxu0 %v1292
    %1700 = vmatpush.bf16.msra.mxu0 %v1291
    %1701 = vmatpush.bf16.msra.mxu0 %v1290
    %1702 = vmatpush.bf16.msra.mxu0 %v1289
    %1703 = vmatpush.bf16.msra.mxu0 %v1288
    %1704 = vmatpush.bf16.msra.mxu0 %v1287
    %1705 = vmatmul.bf16.gmra.mxu0 %v427
    %v1706 = vpop.f32.mrf.mxu0
    %v1707 = vadd.f32 %v1694, %v1706
    %v1708 = vpop.f32.mrf.mxu0
    %1709 = vdwg.mxu0
    %1710 = vmatpush.bf16.msra.mxu0 %v1302
    %1711 = vmatpush.bf16.msra.mxu0 %v1301
    %1712 = vmatpush.bf16.msra.mxu0 %v1300
    %1713 = vmatpush.bf16.msra.mxu0 %v1299
    %1714 = vmatpush.bf16.msra.mxu0 %v1298
    %1715 = vmatpush.bf16.msra.mxu0 %v1297
    %1716 = vmatpush.bf16.msra.mxu0 %v1296
    %1717 = vmatpush.bf16.msra.mxu0 %v1295
    %1718 = vmatmul.bf16.gmra.mxu0 %v428
    %v1719 = vpop.f32.mrf.mxu0
    %v1720 = vadd.f32 %v1707, %v1719
    %v1721 = vpop.f32.mrf.mxu0
    %1722 = vdwg.mxu0
    %1723 = vmatpush.bf16.msra.mxu0 %v1310
    %1724 = vmatpush.bf16.msra.mxu0 %v1309
    %1725 = vmatpush.bf16.msra.mxu0 %v1308
    %1726 = vmatpush.bf16.msra.mxu0 %v1307
    %1727 = vmatpush.bf16.msra.mxu0 %v1306
    %1728 = vmatpush.bf16.msra.mxu0 %v1305
    %1729 = vmatpush.bf16.msra.mxu0 %v1304
    %1730 = vmatpush.bf16.msra.mxu0 %v1303
    %1731 = vmatmul.bf16.gmra.mxu0 %v429
    %v1732 = vpop.f32.mrf.mxu0
    %v1733 = vadd.f32 %v1720, %v1732
    %v1734 = vpop.f32.mrf.mxu0
    %1735 = vdwg.mxu0
    %1736 = vmatpush.bf16.msra.mxu0 %v1318
    %1737 = vmatpush.bf16.msra.mxu0 %v1317
    %1738 = vmatpush.bf16.msra.mxu0 %v1316
    %1739 = vmatpush.bf16.msra.mxu0 %v1315
    %1740 = vmatpush.bf16.msra.mxu0 %v1314
    %1741 = vmatpush.bf16.msra.mxu0 %v1313
    %1742 = vmatpush.bf16.msra.mxu0 %v1312
    %1743 = vmatpush.bf16.msra.mxu0 %v1311
    %1744 = vmatmul.bf16.gmra.mxu0 %v430
    %v1745 = vpop.f32.mrf.mxu0
    %v1746 = vadd.f32 %v1733, %v1745
    %v1747 = vpop.f32.mrf.mxu0
    %1748 = vdwg.mxu0
    %1749 = vmatpush.bf16.msra.mxu0 %v1326
    %1750 = vmatpush.bf16.msra.mxu0 %v1325
    %1751 = vmatpush.bf16.msra.mxu0 %v1324
    %1752 = vmatpush.bf16.msra.mxu0 %v1323
    %1753 = vmatpush.bf16.msra.mxu0 %v1322
    %1754 = vmatpush.bf16.msra.mxu0 %v1321
    %1755 = vmatpush.bf16.msra.mxu0 %v1320
    %1756 = vmatpush.bf16.msra.mxu0 %v1319
    %1757 = vmatmul.bf16.gmra.mxu0 %v431
    %v1758 = vpop.f32.mrf.mxu0
    %v1759 = vadd.f32 %v1746, %v1758
    %v1760 = vpop.f32.mrf.mxu0
    %1761 = vdwg.mxu0
    %1762 = vmatpush.bf16.msra.mxu0 %v1334
    %1763 = vmatpush.bf16.msra.mxu0 %v1333
    %1764 = vmatpush.bf16.msra.mxu0 %v1332
    %1765 = vmatpush.bf16.msra.mxu0 %v1331
    %1766 = vmatpush.bf16.msra.mxu0 %v1330
    %1767 = vmatpush.bf16.msra.mxu0 %v1329
    %1768 = vmatpush.bf16.msra.mxu0 %v1328
    %1769 = vmatpush.bf16.msra.mxu0 %v1327
    %1770 = vmatmul.bf16.gmra.mxu0 %v434
    %v1771 = vpop.f32.mrf.mxu0
    %v1772 = vadd.f32 %v1759, %v1771
    %v1773 = vpop.f32.mrf.mxu0
    %1774 = vdwg.mxu0
    %1775 = vmatpush.bf16.msra.mxu0 %v1342
    %1776 = vmatpush.bf16.msra.mxu0 %v1341
    %1777 = vmatpush.bf16.msra.mxu0 %v1340
    %1778 = vmatpush.bf16.msra.mxu0 %v1339
    %1779 = vmatpush.bf16.msra.mxu0 %v1338
    %1780 = vmatpush.bf16.msra.mxu0 %v1337
    %1781 = vmatpush.bf16.msra.mxu0 %v1336
    %1782 = vmatpush.bf16.msra.mxu0 %v1335
    %1783 = vmatmul.bf16.gmra.mxu0 %v435
    %v1784 = vpop.f32.mrf.mxu0
    %v1785 = vadd.f32 %v1772, %v1784
    %v1786 = vpop.f32.mrf.mxu0
    %1787 = vdwg.mxu0
    %1788 = vmatpush.bf16.msra.mxu0 %v1350
    %1789 = vmatpush.bf16.msra.mxu0 %v1349
    %1790 = vmatpush.bf16.msra.mxu0 %v1348
    %1791 = vmatpush.bf16.msra.mxu0 %v1347
    %1792 = vmatpush.bf16.msra.mxu0 %v1346
    %1793 = vmatpush.bf16.msra.mxu0 %v1345
    %1794 = vmatpush.bf16.msra.mxu0 %v1344
    %1795 = vmatpush.bf16.msra.mxu0 %v1343
    %1796 = vmatmul.bf16.gmra.mxu0 %v436
    %v1797 = vpop.f32.mrf.mxu0
    %v1798 = vadd.f32 %v1785, %v1797
    %v1799 = vpop.f32.mrf.mxu0
    %1800 = vdwg.mxu0
    %1801 = vmatpush.bf16.msra.mxu0 %v1358
    %1802 = vmatpush.bf16.msra.mxu0 %v1357
    %1803 = vmatpush.bf16.msra.mxu0 %v1356
    %1804 = vmatpush.bf16.msra.mxu0 %v1355
    %1805 = vmatpush.bf16.msra.mxu0 %v1354
    %1806 = vmatpush.bf16.msra.mxu0 %v1353
    %1807 = vmatpush.bf16.msra.mxu0 %v1352
    %1808 = vmatpush.bf16.msra.mxu0 %v1351
    %1809 = vmatmul.bf16.gmra.mxu0 %v437
    %v1810 = vpop.f32.mrf.mxu0
    %v1811 = vadd.f32 %v1798, %v1810
    %v1812 = vpop.f32.mrf.mxu0
    %1813 = vdwg.mxu0
    %1814 = vmatpush.bf16.msra.mxu0 %v1366
    %1815 = vmatpush.bf16.msra.mxu0 %v1365
    %1816 = vmatpush.bf16.msra.mxu0 %v1364
    %1817 = vmatpush.bf16.msra.mxu0 %v1363
    %1818 = vmatpush.bf16.msra.mxu0 %v1362
    %1819 = vmatpush.bf16.msra.mxu0 %v1361
    %1820 = vmatpush.bf16.msra.mxu0 %v1360
    %1821 = vmatpush.bf16.msra.mxu0 %v1359
    %1822 = vmatmul.bf16.gmra.mxu0 %v438
    %v1823 = vpop.f32.mrf.mxu0
    %v1824 = vadd.f32 %v1811, %v1823
    %v1825 = vpop.f32.mrf.mxu0
    %1826 = vdwg.mxu0
    %1827 = vmatpush.bf16.msra.mxu0 %v1374
    %1828 = vmatpush.bf16.msra.mxu0 %v1373
    %1829 = vmatpush.bf16.msra.mxu0 %v1372
    %1830 = vmatpush.bf16.msra.mxu0 %v1371
    %1831 = vmatpush.bf16.msra.mxu0 %v1370
    %1832 = vmatpush.bf16.msra.mxu0 %v1369
    %1833 = vmatpush.bf16.msra.mxu0 %v1368
    %1834 = vmatpush.bf16.msra.mxu0 %v1367
    %1835 = vmatmul.bf16.gmra.mxu0 %v439
    %v1836 = vpop.f32.mrf.mxu0
    %v1837 = vadd.f32 %v1824, %v1836
    %v1838 = vpop.f32.mrf.mxu0
    %1839 = vdwg.mxu0
    %1840 = vmatpush.bf16.msra.mxu0 %v1382
    %1841 = vmatpush.bf16.msra.mxu0 %v1381
    %1842 = vmatpush.bf16.msra.mxu0 %v1380
    %1843 = vmatpush.bf16.msra.mxu0 %v1379
    %1844 = vmatpush.bf16.msra.mxu0 %v1378
    %1845 = vmatpush.bf16.msra.mxu0 %v1377
    %1846 = vmatpush.bf16.msra.mxu0 %v1376
    %1847 = vmatpush.bf16.msra.mxu0 %v1375
    %1848 = vmatmul.bf16.gmra.mxu0 %v440
    %v1849 = vpop.f32.mrf.mxu0
    %v1850 = vadd.f32 %v1837, %v1849
    %v1851 = vpop.f32.mrf.mxu0
    %1852 = vdwg.mxu0
    %1853 = vmatpush.bf16.msra.mxu0 %v1390
    %1854 = vmatpush.bf16.msra.mxu0 %v1389
    %1855 = vmatpush.bf16.msra.mxu0 %v1388
    %1856 = vmatpush.bf16.msra.mxu0 %v1387
    %1857 = vmatpush.bf16.msra.mxu0 %v1386
    %1858 = vmatpush.bf16.msra.mxu0 %v1385
    %1859 = vmatpush.bf16.msra.mxu0 %v1384
    %1860 = vmatpush.bf16.msra.mxu0 %v1383
    %1861 = vmatmul.bf16.gmra.mxu0 %v441
    %v1862 = vpop.f32.mrf.mxu0
    %v1863 = vadd.f32 %v1850, %v1862
    %v1864 = vpop.f32.mrf.mxu0
    %1865 = vdwg.mxu0
    %1866 = vmatpush.bf16.msra.mxu0 %v1398
    %1867 = vmatpush.bf16.msra.mxu0 %v1397
    %1868 = vmatpush.bf16.msra.mxu0 %v1396
    %1869 = vmatpush.bf16.msra.mxu0 %v1395
    %1870 = vmatpush.bf16.msra.mxu0 %v1394
    %1871 = vmatpush.bf16.msra.mxu0 %v1393
    %1872 = vmatpush.bf16.msra.mxu0 %v1392
    %1873 = vmatpush.bf16.msra.mxu0 %v1391
    %1874 = vmatmul.bf16.gmra.mxu0 %v444
    %v1875 = vpop.f32.mrf.mxu0
    %v1876 = vadd.f32 %v1863, %v1875
    %v1877 = vpop.f32.mrf.mxu0
    %1878 = vdwg.mxu0
    %1879 = vmatpush.bf16.msra.mxu0 %v1406
    %1880 = vmatpush.bf16.msra.mxu0 %v1405
    %1881 = vmatpush.bf16.msra.mxu0 %v1404
    %1882 = vmatpush.bf16.msra.mxu0 %v1403
    %1883 = vmatpush.bf16.msra.mxu0 %v1402
    %1884 = vmatpush.bf16.msra.mxu0 %v1401
    %1885 = vmatpush.bf16.msra.mxu0 %v1400
    %1886 = vmatpush.bf16.msra.mxu0 %v1399
    %1887 = vmatmul.bf16.gmra.mxu0 %v445
    %v1888 = vpop.f32.mrf.mxu0
    %v1889 = vadd.f32 %v1876, %v1888
    %v1890 = vpop.f32.mrf.mxu0
    %1891 = vdwg.mxu0
    %1892 = vmatpush.bf16.msra.mxu0 %v1414
    %1893 = vmatpush.bf16.msra.mxu0 %v1413
    %1894 = vmatpush.bf16.msra.mxu0 %v1412
    %1895 = vmatpush.bf16.msra.mxu0 %v1411
    %1896 = vmatpush.bf16.msra.mxu0 %v1410
    %1897 = vmatpush.bf16.msra.mxu0 %v1409
    %1898 = vmatpush.bf16.msra.mxu0 %v1408
    %1899 = vmatpush.bf16.msra.mxu0 %v1407
    %1900 = vmatmul.bf16.gmra.mxu0 %v446
    %v1901 = vpop.f32.mrf.mxu0
    %v1902 = vadd.f32 %v1889, %v1901
    %v1903 = vpop.f32.mrf.mxu0
    %1904 = vdwg.mxu0
    %1905 = vmatpush.bf16.msra.mxu0 %v1422
    %1906 = vmatpush.bf16.msra.mxu0 %v1421
    %1907 = vmatpush.bf16.msra.mxu0 %v1420
    %1908 = vmatpush.bf16.msra.mxu0 %v1419
    %1909 = vmatpush.bf16.msra.mxu0 %v1418
    %1910 = vmatpush.bf16.msra.mxu0 %v1417
    %1911 = vmatpush.bf16.msra.mxu0 %v1416
    %1912 = vmatpush.bf16.msra.mxu0 %v1415
    %1913 = vmatmul.bf16.gmra.mxu0 %v447
    %v1914 = vpop.f32.mrf.mxu0
    %v1915 = vadd.f32 %v1902, %v1914
    %v1916 = vpop.f32.mrf.mxu0
    %1917 = vdwg.mxu0
    %1918 = vmatpush.bf16.msra.mxu0 %v1430
    %1919 = vmatpush.bf16.msra.mxu0 %v1429
    %1920 = vmatpush.bf16.msra.mxu0 %v1428
    %1921 = vmatpush.bf16.msra.mxu0 %v1427
    %1922 = vmatpush.bf16.msra.mxu0 %v1426
    %1923 = vmatpush.bf16.msra.mxu0 %v1425
    %1924 = vmatpush.bf16.msra.mxu0 %v1424
    %1925 = vmatpush.bf16.msra.mxu0 %v1423
    %1926 = vmatmul.bf16.gmra.mxu0 %v448
    %v1927 = vpop.f32.mrf.mxu0
    %v1928 = vadd.f32 %v1915, %v1927
    %v1929 = vpop.f32.mrf.mxu0
    %1930 = vdwg.mxu0
    %1931 = vmatpush.bf16.msra.mxu0 %v1438
    %1932 = vmatpush.bf16.msra.mxu0 %v1437
    %1933 = vmatpush.bf16.msra.mxu0 %v1436
    %1934 = vmatpush.bf16.msra.mxu0 %v1435
    %1935 = vmatpush.bf16.msra.mxu0 %v1434
    %1936 = vmatpush.bf16.msra.mxu0 %v1433
    %1937 = vmatpush.bf16.msra.mxu0 %v1432
    %1938 = vmatpush.bf16.msra.mxu0 %v1431
    %1939 = vmatmul.bf16.gmra.mxu0 %v449
    %v1940 = vpop.f32.mrf.mxu0
    %v1941 = vadd.f32 %v1928, %v1940
    %v1942 = vpop.f32.mrf.mxu0
    %1943 = vdwg.mxu0
    %1944 = vmatpush.bf16.msra.mxu0 %v1446
    %1945 = vmatpush.bf16.msra.mxu0 %v1445
    %1946 = vmatpush.bf16.msra.mxu0 %v1444
    %1947 = vmatpush.bf16.msra.mxu0 %v1443
    %1948 = vmatpush.bf16.msra.mxu0 %v1442
    %1949 = vmatpush.bf16.msra.mxu0 %v1441
    %1950 = vmatpush.bf16.msra.mxu0 %v1440
    %1951 = vmatpush.bf16.msra.mxu0 %v1439
    %1952 = vmatmul.bf16.gmra.mxu0 %v450
    %v1953 = vpop.f32.mrf.mxu0
    %v1954 = vadd.f32 %v1941, %v1953
    %v1955 = vpop.f32.mrf.mxu0
    %1956 = vdwg.mxu0
    %1957 = vmatpush.bf16.msra.mxu0 %v1454
    %1958 = vmatpush.bf16.msra.mxu0 %v1453
    %1959 = vmatpush.bf16.msra.mxu0 %v1452
    %1960 = vmatpush.bf16.msra.mxu0 %v1451
    %1961 = vmatpush.bf16.msra.mxu0 %v1450
    %1962 = vmatpush.bf16.msra.mxu0 %v1449
    %1963 = vmatpush.bf16.msra.mxu0 %v1448
    %1964 = vmatpush.bf16.msra.mxu0 %v1447
    %1965 = vmatmul.bf16.gmra.mxu0 %v451
    %v1966 = vpop.f32.mrf.mxu0
    %v1967 = vadd.f32 %v1954, %v1966
    %v1968 = vpop.f32.mrf.mxu0
    %1969 = vdwg.mxu0
    %1970 = vmatpush.bf16.msra.mxu0 0
    %1971 = vmatpush.bf16.msra.mxu0 0
    %1972 = vmatpush.bf16.msra.mxu0 0
    %1973 = vmatpush.bf16.msra.mxu0 0
    %1974 = vmatpush.bf16.msra.mxu0 %v1458
    %1975 = vmatpush.bf16.msra.mxu0 %v1457
    %1976 = vmatpush.bf16.msra.mxu0 %v1456
    %1977 = vmatpush.bf16.msra.mxu0 %v1455
    %1978 = vmatmul.bf16.gmra.mxu0 %v1656
    %v1979 = vpop.f32.mrf.mxu0
    %v1980 = vadd.f32 %v1967, %v1979
    %v1981 = vpop.f32.mrf.mxu0
    %1982 = vdwg.mxu0
    %v1983 = vmax.f32 %v1980, 0.0
    %v1984 = vpack.c.bf16 %v1983, %v1983
    %v1985 = vld [vmem:[%s3] sm:$0xf]
    %v1986 = vld [vmem:[%s3 + $0x4] sm:$0xf]
    %v1987 = vld [vmem:[%s3 + $0x8] sm:$0xf]
    %v1988 = vld [vmem:[%s3 + $0xc] sm:$0xf]
    %v1989 = vld [vmem:[%s3 + $0x10] sm:$0xf]
    %v1990 = vld [vmem:[%s3 + $0x14] sm:$0xf]
    %v1991 = vld [vmem:[%s3 + $0x18] sm:$0xf]
    %v1992 = vld [vmem:[%s3 + $0x1c] sm:$0xf]
    %v1993 = vld [vmem:[%s3 + $0x20] sm:$0xf]
    %v1994 = vld [vmem:[%s3 + $0x24] sm:$0xf]
    %v1995 = vld [vmem:[%s3 + $0x28] sm:$0xf]
    %v1996 = vld [vmem:[%s3 + $0x2c] sm:$0xf]
    %v1997 = vld [vmem:[%s3 + $0x30] sm:$0xf]
    %v1998 = vld [vmem:[%s3 + $0x34] sm:$0xf]
    %v1999 = vld [vmem:[%s3 + $0x38] sm:$0xf]
    %v2000 = vld [vmem:[%s3 + $0x3c] sm:$0xf]
    %v2001 = vld [vmem:[%s4] sm:$0x1]
    %v2003 = vperm.slane %v2001, 0
    %v2021 = vunpack.c.l.b16 %v1985
    %v2022 = vunpack.c.l.b16 %v1986
    %v2023 = vunpack.c.l.b16 %v1987
    %v2024 = vunpack.c.l.b16 %v1988
    %v2025 = vunpack.c.l.b16 %v1989
    %v2026 = vunpack.c.l.b16 %v1990
    %v2027 = vunpack.c.l.b16 %v1991
    %v2028 = vunpack.c.l.b16 %v1992
    %v2029 = vunpack.c.l.b16 %v1993
    %v2030 = vunpack.c.l.b16 %v1994
    %v2031 = vunpack.c.l.b16 %v1995
    %v2032 = vunpack.c.l.b16 %v1996
    %v2033 = vunpack.c.l.b16 %v1997
    %v2034 = vunpack.c.l.b16 %v1998
    %v2035 = vunpack.c.l.b16 %v1999
    %v2036 = vunpack.c.l.b16 %v2000
    %v2037 = vpack.c.b16 %v2022, %v2021
    %v2038 = vpack.c.b16 %v2024, %v2023
    %v2039 = vpack.c.b16 %v2026, %v2025
    %v2040 = vpack.c.b16 %v2028, %v2027
    %v2041 = vpack.c.b16 %v2030, %v2029
    %v2042 = vpack.c.b16 %v2032, %v2031
    %v2043 = vpack.c.b16 %v2034, %v2033
    %v2044 = vpack.c.b16 %v2036, %v2035
    %2053 = vmatpush.bf16.msra.mxu0 %v2044
    %2054 = vmatpush.bf16.msra.mxu0 %v2043
    %2055 = vmatpush.bf16.msra.mxu0 %v2042
    %2056 = vmatpush.bf16.msra.mxu0 %v2041
    %2057 = vmatpush.bf16.msra.mxu0 %v2040
    %2058 = vmatpush.bf16.msra.mxu0 %v2039
    %2059 = vmatpush.bf16.msra.mxu0 %v2038
    %2060 = vmatpush.bf16.msra.mxu0 %v2037
    %2061 = vmatmul.bf16.gmra.mxu0 %v1984
    %v2062 = vpop.f32.mrf.mxu0
    %v2063 = vadd.f32 %v2003, %v2062
    %v2064 = vpop.f32.mrf.mxu0
    %2065 = vdwg.mxu0
    %2066 = vst [vmem:[#allocation2] sm:$0x3] %v2063
    // Predicated region
    $region22: #{mnist_forward.3} parent=1 // pred_check
      _
    $region23: #{mnist_forward.3} parent=1 // pred_check_branch
      %2068 = sbr.rel (0) target = $region25
    $region24: #{mnist_forward.3} parent=1 // pred_region
      %2070 = vsyncadd [#allocation3], 0
      %s2072 = sshll.u32 [#allocation2], 4
      %s2073 = int_to_ptr.vmem [resolvable:$true] %s2072
      %s2074 = sshll.u32 %s5, 4
      %s2075 = int_to_ptr.hbm [resolvable:$true] %s2074
      %2077 = dma.vmem_to_hbm [thread:$0]  %s2073, 32, %s2075, [#allocation3]
    $region25: #{mnist_forward.3} parent=1 // pred_fallthru
      _
    // Predicated region
    $region26: #{mnist_forward.3} parent=1 // pred_check
      _
    $region27: #{mnist_forward.3} parent=1 // pred_check_branch
      %2079 = sbr.rel (0) target = $region29
    $region28: #{mnist_forward.3} parent=1 // pred_region
      %2081 = dma.done [#allocation3], 32
    $region29: #{mnist_forward.3} parent=1 // pred_fallthru
      _
    %2082 = vsyncpa [#allocation3], 1

// kernel: mnist_forward.2
$region0: #{mnist_forward.2}
  #allocation0 [shape = 'u32[]', space=smem, size = 0x4, offset = 0x4, fixed_abs, tag = 'smem constant byte address 0x4 - core index']
  #allocation1 [shape = 'u32[72,128]{1,0:T(1,128)}', space=vmem, size = 0x9000, scoped, tag = 'internal scratch']
  #allocation2 [shape = 'bf16[296,32]{1,0:T(8,128)(2,1)}', space=vmem, size = 0x12800, scoped, tag = 'scratch operand']
  #allocation3 [shape = 'bf16[256,288]{1,0:T(8,128)(2,1)}', space=vmem, size = 0x30000, scoped, tag = 'scratch operand']
  #allocation4 [shape = 'f32[256,64]{1,0:T(8,128)}', space=vmem, size = 0x20000, scoped, tag = 'scratch operand']
  %s0 = inlined_call_operand.vmem [shape: bf16[2,256,40], index: 0, kind: input, shape index: {}]
  %s1 = inlined_call_operand.vmem [shape: bf16[40,128], index: 1, kind: input, shape index: {}]
  %s2 = inlined_call_operand.vmem [shape: bf16[288,64], index: 2, kind: input, shape index: {}]
  %s3 = inlined_call_operand.vmem [shape: f32[1,64], index: 3, kind: input, shape index: {}]
  %s4 = inlined_call_operand.vmem [shape: f32[2,49,64], index: 4, kind: output, shape index: {0}]
  %s5 = inlined_call_operand.vmem [shape: bf16[2,49,64], index: 5, kind: output, shape index: {1}]
  %6 = xla_tuple %s4, %s5
  %s7 = sld [smem:[#allocation0]]
  $region61: #{mnist_forward.2} parent=0
    _
  %s9 = ssub.s32 1, %s7
  %s10 = scalar_select 0, %s9, %s7
  loop: start=0, step=1, limit=4
  $region2: #{mnist_forward.2} parent=0 // loop_pre_header
    _
  $region3: #{mnist_forward.2} parent=0 // loop_header
    %s12 = sphi 0, %s16
    %p13 = scmp.ge.s32.totalorder %s12, 4
    %s22 = sphi 0, %s24
    %s25 = sphi 0, %s22
    %s26 = sphi 0, %s25
    %s42 = sphi 0, %s26
    %s46 = sphi 0, %s46
    %s48 = sphi 0, %s46
    %s49 = sphi 0, %s48
    %s63 = sphi 0, %s49
    %s67 = sphi 0, %s67
    %s69 = sphi 0, %s67
    %s70 = sphi 0, %s69
    %s84 = sphi 0, %s70
    %s88 = sphi 0, %s88
    %s90 = sphi 0, %s88
    %s91 = sphi 0, %s90
    %s105 = sphi 0, %s91
    %s111 = sphi 0, %s113
    %s114 = sphi 0, %s111
    %s115 = sphi 0, %s114
    %s131 = sphi 0, %s115
    %s137 = sphi 0, %s139
    %s140 = sphi 0, %s137
    %s141 = sphi 0, %s140
    %s157 = sphi 0, %s141
  $region4: #{mnist_forward.2} parent=0 // loop_header_branch
    %15 = sbr.rel (%p13) target = $region8
  $region5: #{mnist_forward.2} parent=0 // loop_body
    %s17 = ssub.s32 %s12, 1
    %s18 = ssub.s32 %s12, 2
    %s19 = sadd.s32 %s12, 1
    %s20 = ssub.s32 %s12, %s19
    %p21 = scmp.eq.s32.totalorder %s20, 0
    %s23 = sadd.s32 %s22, 1
    %s24 = scalar_select %p21, %s22, %s23
    %p27 = pneg %p21
    %p28 = scmp.eq.s32.totalorder %s12, 1
    %p29 = por %p27, %p28
    %p30 = scmp.ne.s32.totalorder %s22, %s25
    %p31 = scmp.eq.s32.totalorder %s12, 0
    %p32 = por %p30, %p31
    %p33 = scmp.ne.s32.totalorder %s22, %s25
    %p34 = scmp.eq.s32.totalorder %s17, 1
    %p35 = por %p33, %p34
    %p36 = scmp.ne.s32.totalorder %s25, %s26
    %p37 = scmp.eq.s32.totalorder %s17, 0
    %p38 = por %p36, %p37
    %p39 = scmp.ne.s32.totalorder %s25, %s26
    %p40 = scmp.eq.s32.totalorder %s18, 1
    %p41 = por %p39, %p40
    %p43 = scmp.ne.s32.totalorder %s26, %s42
    %p44 = scmp.eq.s32.totalorder %s18, 0
    %p45 = por %p43, %p44
    %s47 = sadd.s32 %s46, 1
    %p50 = scmp.eq.s32.totalorder %s12, 1
    %p51 = scmp.ne.s32.totalorder %s46, %s48
    %p52 = scmp.eq.s32.totalorder %s12, 0
    %p53 = por %p51, %p52
    %p54 = scmp.ne.s32.totalorder %s46, %s48
    %p55 = scmp.eq.s32.totalorder %s17, 1
    %p56 = por %p54, %p55
    %p57 = scmp.ne.s32.totalorder %s48, %s49
    %p58 = scmp.eq.s32.totalorder %s17, 0
    %p59 = por %p57, %p58
    %p60 = scmp.ne.s32.totalorder %s48, %s49
    %p61 = scmp.eq.s32.totalorder %s18, 1
    %p62 = por %p60, %p61
    %p64 = scmp.ne.s32.totalorder %s49, %s63
    %p65 = scmp.eq.s32.totalorder %s18, 0
    %p66 = por %p64, %p65
    %s68 = sadd.s32 %s67, 1
    %p71 = scmp.eq.s32.totalorder %s12, 1
    %p72 = scmp.ne.s32.totalorder %s67, %s69
    %p73 = scmp.eq.s32.totalorder %s12, 0
    %p74 = por %p72, %p73
    %p75 = scmp.ne.s32.totalorder %s67, %s69
    %p76 = scmp.eq.s32.totalorder %s17, 1
    %p77 = por %p75, %p76
    %p78 = scmp.ne.s32.totalorder %s69, %s70
    %p79 = scmp.eq.s32.totalorder %s17, 0
    %p80 = por %p78, %p79
    %p81 = scmp.ne.s32.totalorder %s69, %s70
    %p82 = scmp.eq.s32.totalorder %s18, 1
    %p83 = por %p81, %p82
    %p85 = scmp.ne.s32.totalorder %s70, %s84
    %p86 = scmp.eq.s32.totalorder %s18, 0
    %p87 = por %p85, %p86
    %s89 = sadd.s32 %s88, 1
    %p92 = scmp.eq.s32.totalorder %s12, 1
    %p93 = scmp.ne.s32.totalorder %s88, %s90
    %p94 = scmp.eq.s32.totalorder %s12, 0
    %p95 = por %p93, %p94
    %p96 = scmp.ne.s32.totalorder %s88, %s90
    %p97 = scmp.eq.s32.totalorder %s17, 1
    %p98 = por %p96, %p97
    %p99 = scmp.ne.s32.totalorder %s90, %s91
    %p100 = scmp.eq.s32.totalorder %s17, 0
    %p101 = por %p99, %p100
    %p102 = scmp.ne.s32.totalorder %s90, %s91
    %p103 = scmp.eq.s32.totalorder %s18, 1
    %p104 = por %p102, %p103
    %p106 = scmp.ne.s32.totalorder %s91, %s105
    %p107 = scmp.eq.s32.totalorder %s18, 0
    %p108 = por %p106, %p107
    %s109 = ssub.s32 %s12, %s19
    %p110 = scmp.eq.s32.totalorder %s109, 0
    %s112 = sadd.s32 %s111, 1
    %s113 = scalar_select %p110, %s111, %s112
    %p116 = pneg %p110
    %p117 = scmp.eq.s32.totalorder %s12, 1
    %p118 = por %p116, %p117
    %p119 = scmp.ne.s32.totalorder %s111, %s114
    %p120 = scmp.eq.s32.totalorder %s12, 0
    %p121 = por %p119, %p120
    %p122 = scmp.ne.s32.totalorder %s111, %s114
    %p123 = scmp.eq.s32.totalorder %s17, 1
    %p124 = por %p122, %p123
    %p125 = scmp.ne.s32.totalorder %s114, %s115
    %p126 = scmp.eq.s32.totalorder %s17, 0
    %p127 = por %p125, %p126
    %p128 = scmp.ne.s32.totalorder %s114, %s115
    %p129 = scmp.eq.s32.totalorder %s18, 1
    %p130 = por %p128, %p129
    %p132 = scmp.ne.s32.totalorder %s115, %s131
    %p133 = scmp.eq.s32.totalorder %s18, 0
    %p134 = por %p132, %p133
    %s135 = ssub.s32 %s12, %s19
    %p136 = scmp.eq.s32.totalorder %s135, 0
    %s138 = sadd.s32 %s137, 1
    %s139 = scalar_select %p136, %s137, %s138
    %p142 = pneg %p136
    %p143 = scmp.eq.s32.totalorder %s12, 1
    %p144 = por %p142, %p143
    %p145 = scmp.ne.s32.totalorder %s137, %s140
    %p146 = scmp.eq.s32.totalorder %s12, 0
    %p147 = por %p145, %p146
    %p148 = scmp.ne.s32.totalorder %s137, %s140
    %p149 = scmp.eq.s32.totalorder %s17, 1
    %p150 = por %p148, %p149
    %p151 = scmp.ne.s32.totalorder %s140, %s141
    %p152 = scmp.eq.s32.totalorder %s17, 0
    %p153 = por %p151, %p152
    %p154 = scmp.ne.s32.totalorder %s140, %s141
    %p155 = scmp.eq.s32.totalorder %s18, 1
    %p156 = por %p154, %p155
    %p158 = scmp.ne.s32.totalorder %s141, %s157
    %p159 = scmp.eq.s32.totalorder %s18, 0
    %p160 = por %p158, %p159
    %p161 = scmp.le.s32.totalorder 1, %s12
    %p162 = scmp.lt.s32.totalorder %s12, 3
    %p163 = pnand %p161, %p162
    %p164 = pneg %p163
    // Predicated region
    $region9: #{mnist_forward.2} parent=5 // pred_check
      _
    $region10: #{mnist_forward.2} parent=5 // pred_check_branch
      %166 = sbr.rel (%p163) target = $region12
    $region11: #{mnist_forward.2} parent=5 // pred_region
      %s167 = ssub.s32 %s12, 1
      // Predicated region
      $region13: #{mnist_forward.2} parent=11 // pred_check
        %p168 = pneg %p59
      $region14: #{mnist_forward.2} parent=11 // pred_check_branch
        %170 = sbr.rel (%p168) target = $region16
      $region15: #{mnist_forward.2} parent=11 // pred_region
        _
      $region16: #{mnist_forward.2} parent=11 // pred_fallthru
        _
      // Predicated region
      $region17: #{mnist_forward.2} parent=11 // pred_check
        %p171 = pneg %p80
      $region18: #{mnist_forward.2} parent=11 // pred_check_branch
        %173 = sbr.rel (%p171) target = $region20
      $region19: #{mnist_forward.2} parent=11 // pred_region
        _
      $region20: #{mnist_forward.2} parent=11 // pred_fallthru
        _
      // Predicated region
      $region21: #{mnist_forward.2} parent=11 // pred_check
        %p174 = pneg %p101
      $region22: #{mnist_forward.2} parent=11 // pred_check_branch
        %176 = sbr.rel (%p174) target = $region24
      $region23: #{mnist_forward.2} parent=11 // pred_region
        _
      $region24: #{mnist_forward.2} parent=11 // pred_fallthru
        _
    $region12: #{mnist_forward.2} parent=5 // pred_fallthru
      _
    %p177 = scmp.lt.s32.totalorder %s12, 2
    // Predicated region
    $region25: #{mnist_forward.2} parent=5 // pred_check
      %p178 = pneg %p177
    $region26: #{mnist_forward.2} parent=5 // pred_check_branch
      %180 = sbr.rel (%p178) target = $region28
    $region27: #{mnist_forward.2} parent=5 // pred_region
      // Predicated region
      $region29: #{mnist_forward.2} parent=27 // pred_check
        %p181 = pneg %p32
      $region30: #{mnist_forward.2} parent=27 // pred_check_branch
        %183 = sbr.rel (%p181) target = $region32
      $region31: #{mnist_forward.2} parent=27 // pred_region
        %p184 = scmp.lt.s32.totalorder %s12, 1
        %s185 = scalar_select %p184, %s12, 1
        %s186 = smul.addr %s185, 32
        %s187 = smul.addr %s186, 4
        %s188 = scalar_lea.vmem %s0, %s187
      $region32: #{mnist_forward.2} parent=27 // pred_fallthru
        _
    $region28: #{mnist_forward.2} parent=5 // pred_fallthru
      _
    %p189 = scmp.le.s32.totalorder 1, %s12
    %p190 = scmp.lt.s32.totalorder %s12, 3
    %p191 = pnand %p189, %p190
    %p192 = pneg %p191
    // Predicated region
    $region33: #{mnist_forward.2} parent=5 // pred_check
      _
    $region34: #{mnist_forward.2} parent=5 // pred_check_branch
      %194 = sbr.rel (%p191) target = $region36
    $region35: #{mnist_forward.2} parent=5 // pred_region
      %s195 = ssub.s32 %s12, 1
      %p196 = scmp.lt.s32.totalorder %s17, 1
      %s197 = scalar_select %p196, %s17, 1
      %s198 = smul.addr %s197, 32
      %s199 = smul.addr %s198, 4
      %s200 = scalar_lea.vmem %s0, %s199
      %p201 = pneg %p38
      %p202 = pneg %p35
      %p203 = pneg %p59
      %p204 = pneg %p56
      %p205 = pneg %p80
      %p206 = pneg %p77
      %p207 = pneg %p101
      %p208 = pneg %p98
      %p209 = pneg %p127
      %p210 = pneg %p124
      %p211 = scmp.lt.s32.totalorder %s17, 1
      %s212 = scalar_select %p211, %s17, 1
      %s213 = smul.addr %s212, 7
      %s214 = smul.addr %s213, 8
      %s215 = scalar_lea.vmem %s4, %s214
      %p216 = pneg %p153
      %p217 = pneg %p150
      %p218 = scmp.lt.s32.totalorder %s17, 1
      %s219 = scalar_select %p218, %s17, 1
      %s220 = smul.addr %s219, 7
      %s221 = smul.addr %s220, 4
      %s222 = scalar_lea.vmem %s5, %s221
      %p223 = scmp.lt.s32.totalorder %s17, 1
      %s224 = scalar_select %p223, %s17, 1
      %s225 = smul.addr %s224, 32
      %s226 = smul.addr %s225, 4
      %s227 = scalar_lea.vmem %s0, %s226
      %p228 = scmp.lt.s32.totalorder %s17, 1
      %s229 = scalar_select %p228, %s17, 1
      %s230 = smul.addr %s229, 7
      %s231 = smul.addr %s230, 8
      %s232 = scalar_lea.vmem %s4, %s231
      %p233 = scmp.lt.s32.totalorder %s17, 1
      %s234 = scalar_select %p233, %s17, 1
      %s235 = smul.addr %s234, 7
      %s236 = smul.addr %s235, 4
      %s237 = scalar_lea.vmem %s5, %s236
      %p239 = scmp.eq.s32.totalorder %s17, 0
      // Predicated region
      $region37: #{mnist_forward.2} parent=35 // pred_check
        %p240 = pneg %p239
      $region38: #{mnist_forward.2} parent=35 // pred_check_branch
        %242 = sbr.rel (%p240) target = $region40
      $region39: #{mnist_forward.2} parent=35 // pred_region
        %vm243 = vcmask 257024
        %244 = vst.msk [vmem:[#allocation2 + $0x80] sm:$0xf] %vm243, 0
        %245 = vst.msk [vmem:[#allocation2 + $0x84] sm:$0xf] %vm243, 0
        %246 = vst.msk [vmem:[#allocation2 + $0x88] sm:$0xf] %vm243, 0
        %247 = vst.msk [vmem:[#allocation2 + $0x8c] sm:$0xf] %vm243, 0
        %248 = vst.msk [vmem:[#allocation2 + $0x90] sm:$0xf] %vm243, 0
      $region40: #{mnist_forward.2} parent=35 // pred_fallthru
        _
      %v249 = vld [vmem:[%s227] sm:$0xf]
      %v250 = vld [vmem:[%s227 + $0x4] sm:$0xf]
      %v251 = vld [vmem:[%s227 + $0x8] sm:$0xf]
      %v252 = vld [vmem:[%s227 + $0xc] sm:$0xf]
      %v253 = vld [vmem:[%s227 + $0x10] sm:$0xf]
      %v254 = vld [vmem:[%s227 + $0x14] sm:$0xf]
      %v255 = vld [vmem:[%s227 + $0x18] sm:$0xf]
      %v256 = vld [vmem:[%s227 + $0x1c] sm:$0xf]
      %v257 = vld [vmem:[%s227 + $0x20] sm:$0xf]
      %v258 = vld [vmem:[%s227 + $0x24] sm:$0xf]
      %v259 = vld [vmem:[%s227 + $0x28] sm:$0xf]
      %v260 = vld [vmem:[%s227 + $0x2c] sm:$0xf]
      %v261 = vld [vmem:[%s227 + $0x30] sm:$0xf]
      %v262 = vld [vmem:[%s227 + $0x34] sm:$0xf]
      %v263 = vld [vmem:[%s227 + $0x38] sm:$0xf]
      %v264 = vld [vmem:[%s227 + $0x3c] sm:$0xf]
      %v265 = vld [vmem:[%s227 + $0x40] sm:$0xf]
      %v266 = vld [vmem:[%s227 + $0x44] sm:$0xf]
      %v267 = vld [vmem:[%s227 + $0x48] sm:$0xf]
      %v268 = vld [vmem:[%s227 + $0x4c] sm:$0xf]
      %v269 = vld [vmem:[%s227 + $0x50] sm:$0xf]
      %v270 = vld [vmem:[%s227 + $0x54] sm:$0xf]
      %v271 = vld [vmem:[%s227 + $0x58] sm:$0xf]
      %v272 = vld [vmem:[%s227 + $0x5c] sm:$0xf]
      %v273 = vld [vmem:[%s227 + $0x60] sm:$0xf]
      %v274 = vld [vmem:[%s227 + $0x64] sm:$0xf]
      %v275 = vld [vmem:[%s227 + $0x68] sm:$0xf]
      %v276 = vld [vmem:[%s227 + $0x6c] sm:$0xf]
      %v277 = vld [vmem:[%s227 + $0x70] sm:$0xf]
      %v278 = vld [vmem:[%s227 + $0x74] sm:$0xf]
      %v279 = vld [vmem:[%s227 + $0x78] sm:$0xf]
      %v280 = vld [vmem:[%s227 + $0x7c] sm:$0xf]
      %v281 = vld [vmem:[%s1] sm:$0xf]
      %v282 = vld [vmem:[%s1 + $0x4] sm:$0xf]
      %v283 = vld [vmem:[%s1 + $0x8] sm:$0xf]
      %v284 = vld [vmem:[%s1 + $0xc] sm:$0xf]
      %v285 = vld [vmem:[%s1 + $0x10] sm:$0xf]
      %v318 = vunpack.c.l.b16 %v249
      %v319 = vunpack.c.l.b16 %v250
      %v320 = vunpack.c.l.b16 %v251
      %v321 = vunpack.c.l.b16 %v252
      %v322 = vunpack.c.l.b16 %v253
      %v323 = vunpack.c.l.b16 %v254
      %v324 = vunpack.c.l.b16 %v255
      %v325 = vunpack.c.l.b16 %v256
      %v326 = vunpack.c.l.b16 %v257
      %v327 = vunpack.c.l.b16 %v258
      %v328 = vunpack.c.l.b16 %v259
      %v329 = vunpack.c.l.b16 %v260
      %v330 = vunpack.c.l.b16 %v261
      %v331 = vunpack.c.l.b16 %v262
      %v332 = vunpack.c.l.b16 %v263
      %v333 = vunpack.c.l.b16 %v264
      %v334 = vunpack.c.l.b16 %v265
      %v335 = vunpack.c.l.b16 %v266
      %v336 = vunpack.c.l.b16 %v267
      %v337 = vunpack.c.l.b16 %v268
      %v338 = vunpack.c.l.b16 %v269
      %v339 = vunpack.c.l.b16 %v270
      %v340 = vunpack.c.l.b16 %v271
      %v341 = vunpack.c.l.b16 %v272
      %v342 = vunpack.c.l.b16 %v273
      %v343 = vunpack.c.l.b16 %v274
      %v344 = vunpack.c.l.b16 %v275
      %v345 = vunpack.c.l.b16 %v276
      %v346 = vunpack.c.l.b16 %v277
      %v347 = vunpack.c.l.b16 %v278
      %v348 = vunpack.c.l.b16 %v279
      %v349 = vunpack.c.l.b16 %v280
      %v350 = vpack.c.b16 %v319, %v318
      %v351 = vpack.c.b16 %v321, %v320
      %v352 = vpack.c.b16 %v323, %v322
      %v353 = vpack.c.b16 %v325, %v324
      %v354 = vpack.c.b16 %v327, %v326
      %v355 = vpack.c.b16 %v329, %v328
      %v356 = vpack.c.b16 %v331, %v330
      %v357 = vpack.c.b16 %v333, %v332
      %v358 = vpack.c.b16 %v335, %v334
      %v359 = vpack.c.b16 %v337, %v336
      %v360 = vpack.c.b16 %v339, %v338
      %v361 = vpack.c.b16 %v341, %v340
      %v362 = vpack.c.b16 %v343, %v342
      %v363 = vpack.c.b16 %v345, %v344
      %v364 = vpack.c.b16 %v347, %v346
      %v365 = vpack.c.b16 %v349, %v348
      %v371 = vunpack.c.l.b16 %v281
      %v372 = vunpack.c.l.b16 %v282
      %v373 = vunpack.c.l.b16 %v283
      %v374 = vunpack.c.l.b16 %v284
      %v375 = vunpack.c.l.b16 %v285
      %v376 = vpack.c.b16 %v372, %v371
      %v377 = vpack.c.b16 %v374, %v373
      %v378 = vpack.c.b16 %v375, %v375
      %vm381 = vcmask 326656
      %v383 = vsel %vm381, %v350, 0
      %v386 = vsel %vm381, %v351, 0
      %v389 = vsel %vm381, %v352, 0
      %v392 = vsel %vm381, %v353, 0
      %v395 = vsel %vm381, %v354, 0
      %v398 = vsel %vm381, %v355, 0
      %v401 = vsel %vm381, %v356, 0
      %v404 = vsel %vm381, %v357, 0
      %v407 = vsel %vm381, %v358, 0
      %v410 = vsel %vm381, %v359, 0
      %v413 = vsel %vm381, %v360, 0
      %v416 = vsel %vm381, %v361, 0
      %v419 = vsel %vm381, %v362, 0
      %v422 = vsel %vm381, %v363, 0
      %v425 = vsel %vm381, %v364, 0
      %v428 = vsel %vm381, %v365, 0
      %vm430 = vcmask 1043456
      %v432 = vsel %vm430, %v378, 0
      %434 = vmatpush.bf16.msra.mxu0 0
      %435 = vmatpush.bf16.msra.mxu0 0
      %436 = vmatpush.bf16.msra.mxu0 0
      %437 = vmatpush.bf16.msra.mxu0 0
      %438 = vmatpush.bf16.msra.mxu0 0
      %439 = vmatpush.bf16.msra.mxu0 %v432
      %440 = vmatpush.bf16.msra.mxu0 %v377
      %441 = vmatpush.bf16.msra.mxu0 %v376
      %442 = vmatmul.bf16.gmra.mxu0 %v383
      %v443 = vpop.f32.mrf.mxu0
      %v444 = vadd.f32 0.0, %v443
      %v445 = vpop.f32.mrf.mxu0
      %v446 = vadd.f32 0.0, %v445
      %447 = vmatmul.bf16.gmra.mxu0 %v386
      %v448 = vpop.f32.mrf.mxu0
      %v449 = vadd.f32 0.0, %v448
      %v450 = vpop.f32.mrf.mxu0
      %v451 = vadd.f32 0.0, %v450
      %452 = vmatmul.bf16.gmra.mxu0 %v389
      %v453 = vpop.f32.mrf.mxu0
      %v454 = vadd.f32 0.0, %v453
      %v455 = vpop.f32.mrf.mxu0
      %v456 = vadd.f32 0.0, %v455
      %457 = vmatmul.bf16.gmra.mxu0 %v392
      %v458 = vpop.f32.mrf.mxu0
      %v459 = vadd.f32 0.0, %v458
      %v460 = vpop.f32.mrf.mxu0
      %v461 = vadd.f32 0.0, %v460
      %462 = vmatmul.bf16.gmra.mxu0 %v395
      %v463 = vpop.f32.mrf.mxu0
      %v464 = vadd.f32 0.0, %v463
      %v465 = vpop.f32.mrf.mxu0
      %v466 = vadd.f32 0.0, %v465
      %467 = vmatmul.bf16.gmra.mxu0 %v398
      %v468 = vpop.f32.mrf.mxu0
      %v469 = vadd.f32 0.0, %v468
      %v470 = vpop.f32.mrf.mxu0
      %v471 = vadd.f32 0.0, %v470
      %472 = vmatmul.bf16.gmra.mxu0 %v401
      %v473 = vpop.f32.mrf.mxu0
      %v474 = vadd.f32 0.0, %v473
      %v475 = vpop.f32.mrf.mxu0
      %v476 = vadd.f32 0.0, %v475
      %477 = vmatmul.bf16.gmra.mxu0 %v404
      %v478 = vpop.f32.mrf.mxu0
      %v479 = vadd.f32 0.0, %v478
      %v480 = vpop.f32.mrf.mxu0
      %v481 = vadd.f32 0.0, %v480
      %482 = vmatmul.bf16.gmra.mxu0 %v407
      %v483 = vpop.f32.mrf.mxu0
      %v484 = vadd.f32 0.0, %v483
      %v485 = vpop.f32.mrf.mxu0
      %v486 = vadd.f32 0.0, %v485
      %487 = vmatmul.bf16.gmra.mxu0 %v410
      %v488 = vpop.f32.mrf.mxu0
      %v489 = vadd.f32 0.0, %v488
      %v490 = vpop.f32.mrf.mxu0
      %v491 = vadd.f32 0.0, %v490
      %492 = vmatmul.bf16.gmra.mxu0 %v413
      %v493 = vpop.f32.mrf.mxu0
      %v494 = vadd.f32 0.0, %v493
      %v495 = vpop.f32.mrf.mxu0
      %v496 = vadd.f32 0.0, %v495
      %497 = vmatmul.bf16.gmra.mxu0 %v416
      %v498 = vpop.f32.mrf.mxu0
      %v499 = vadd.f32 0.0, %v498
      %v500 = vpop.f32.mrf.mxu0
      %v501 = vadd.f32 0.0, %v500
      %502 = vmatmul.bf16.gmra.mxu0 %v419
      %v503 = vpop.f32.mrf.mxu0
      %v504 = vadd.f32 0.0, %v503
      %v505 = vpop.f32.mrf.mxu0
      %v506 = vadd.f32 0.0, %v505
      %507 = vmatmul.bf16.gmra.mxu0 %v422
      %v508 = vpop.f32.mrf.mxu0
      %v509 = vadd.f32 0.0, %v508
      %v510 = vpop.f32.mrf.mxu0
      %v511 = vadd.f32 0.0, %v510
      %512 = vmatmul.bf16.gmra.mxu0 %v425
      %v513 = vpop.f32.mrf.mxu0
      %v514 = vadd.f32 0.0, %v513
      %v515 = vpop.f32.mrf.mxu0
      %v516 = vadd.f32 0.0, %v515
      %517 = vmatmul.bf16.gmra.mxu0 %v428
      %v518 = vpop.f32.mrf.mxu0
      %v519 = vadd.f32 0.0, %v518
      %v520 = vpop.f32.mrf.mxu0
      %v521 = vadd.f32 0.0, %v520
      %522 = vdwg.mxu0
      %555 = vrot.lane.b32.xlu0 %v444, 96
      %v556 = vpop.permute.xlu0 %555
      %557 = vrot.lane.b32.xlu0 %v446, 96
      %v558 = vpop.permute.xlu0 %557
      %559 = vrot.lane.b32.xlu0 %v449, 96
      %v560 = vpop.permute.xlu0 %559
      %561 = vrot.lane.b32.xlu0 %v451, 96
      %v562 = vpop.permute.xlu0 %561
      %563 = vrot.lane.b32.xlu0 %v454, 96
      %v564 = vpop.permute.xlu0 %563
      %565 = vrot.lane.b32.xlu0 %v456, 96
      %v566 = vpop.permute.xlu0 %565
      %567 = vrot.lane.b32.xlu0 %v459, 96
      %v568 = vpop.permute.xlu0 %567
      %569 = vrot.lane.b32.xlu0 %v461, 96
      %v570 = vpop.permute.xlu0 %569
      %571 = vrot.lane.b32.xlu0 %v464, 96
      %v572 = vpop.permute.xlu0 %571
      %573 = vrot.lane.b32.xlu0 %v466, 96
      %v574 = vpop.permute.xlu0 %573
      %575 = vrot.lane.b32.xlu0 %v469, 96
      %v576 = vpop.permute.xlu0 %575
      %577 = vrot.lane.b32.xlu0 %v471, 96
      %v578 = vpop.permute.xlu0 %577
      %579 = vrot.lane.b32.xlu0 %v474, 96
      %v580 = vpop.permute.xlu0 %579
      %581 = vrot.lane.b32.xlu0 %v476, 96
      %v582 = vpop.permute.xlu0 %581
      %583 = vrot.lane.b32.xlu0 %v479, 96
      %v584 = vpop.permute.xlu0 %583
      %585 = vrot.lane.b32.xlu0 %v481, 96
      %v586 = vpop.permute.xlu0 %585
      %587 = vrot.lane.b32.xlu0 %v484, 96
      %v588 = vpop.permute.xlu0 %587
      %589 = vrot.lane.b32.xlu0 %v486, 96
      %v590 = vpop.permute.xlu0 %589
      %591 = vrot.lane.b32.xlu0 %v489, 96
      %v592 = vpop.permute.xlu0 %591
      %593 = vrot.lane.b32.xlu0 %v491, 96
      %v594 = vpop.permute.xlu0 %593
      %595 = vrot.lane.b32.xlu0 %v494, 96
      %v596 = vpop.permute.xlu0 %595
      %597 = vrot.lane.b32.xlu0 %v496, 96
      %v598 = vpop.permute.xlu0 %597
      %599 = vrot.lane.b32.xlu0 %v499, 96
      %v600 = vpop.permute.xlu0 %599
      %601 = vrot.lane.b32.xlu0 %v501, 96
      %v602 = vpop.permute.xlu0 %601
      %603 = vrot.lane.b32.xlu0 %v504, 96
      %v604 = vpop.permute.xlu0 %603
      %605 = vrot.lane.b32.xlu0 %v506, 96
      %v606 = vpop.permute.xlu0 %605
      %607 = vrot.lane.b32.xlu0 %v509, 96
      %v608 = vpop.permute.xlu0 %607
      %609 = vrot.lane.b32.xlu0 %v511, 96
      %v610 = vpop.permute.xlu0 %609
      %611 = vrot.lane.b32.xlu0 %v514, 96
      %v612 = vpop.permute.xlu0 %611
      %613 = vrot.lane.b32.xlu0 %v516, 96
      %v614 = vpop.permute.xlu0 %613
      %615 = vrot.lane.b32.xlu0 %v519, 96
      %v616 = vpop.permute.xlu0 %615
      %617 = vrot.lane.b32.xlu0 %v521, 96
      %v618 = vpop.permute.xlu0 %617
      %v651 = vmax.f32 %v444, %v556
      %v652 = vmax.f32 %v446, %v558
      %v653 = vmax.f32 %v449, %v560
      %v654 = vmax.f32 %v451, %v562
      %v655 = vmax.f32 %v454, %v564
      %v656 = vmax.f32 %v456, %v566
      %v657 = vmax.f32 %v459, %v568
      %v658 = vmax.f32 %v461, %v570
      %v659 = vmax.f32 %v464, %v572
      %v660 = vmax.f32 %v466, %v574
      %v661 = vmax.f32 %v469, %v576
      %v662 = vmax.f32 %v471, %v578
      %v663 = vmax.f32 %v474, %v580
      %v664 = vmax.f32 %v476, %v582
      %v665 = vmax.f32 %v479, %v584
      %v666 = vmax.f32 %v481, %v586
      %v667 = vmax.f32 %v484, %v588
      %v668 = vmax.f32 %v486, %v590
      %v669 = vmax.f32 %v489, %v592
      %v670 = vmax.f32 %v491, %v594
      %v671 = vmax.f32 %v494, %v596
      %v672 = vmax.f32 %v496, %v598
      %v673 = vmax.f32 %v499, %v600
      %v674 = vmax.f32 %v501, %v602
      %v675 = vmax.f32 %v504, %v604
      %v676 = vmax.f32 %v506, %v606
      %v677 = vmax.f32 %v509, %v608
      %v678 = vmax.f32 %v511, %v610
      %v679 = vmax.f32 %v514, %v612
      %v680 = vmax.f32 %v516, %v614
      %v681 = vmax.f32 %v519, %v616
      %v682 = vmax.f32 %v521, %v618
      %715 = vrot.lane.b32.xlu0 %v651, 64
      %v716 = vpop.permute.xlu0 %715
      %717 = vrot.lane.b32.xlu0 %v652, 64
      %v718 = vpop.permute.xlu0 %717
      %719 = vrot.lane.b32.xlu0 %v653, 64
      %v720 = vpop.permute.xlu0 %719
      %721 = vrot.lane.b32.xlu0 %v654, 64
      %v722 = vpop.permute.xlu0 %721
      %723 = vrot.lane.b32.xlu0 %v655, 64
      %v724 = vpop.permute.xlu0 %723
      %725 = vrot.lane.b32.xlu0 %v656, 64
      %v726 = vpop.permute.xlu0 %725
      %727 = vrot.lane.b32.xlu0 %v657, 64
      %v728 = vpop.permute.xlu0 %727
      %729 = vrot.lane.b32.xlu0 %v658, 64
      %v730 = vpop.permute.xlu0 %729
      %731 = vrot.lane.b32.xlu0 %v659, 64
      %v732 = vpop.permute.xlu0 %731
      %733 = vrot.lane.b32.xlu0 %v660, 64
      %v734 = vpop.permute.xlu0 %733
      %735 = vrot.lane.b32.xlu0 %v661, 64
      %v736 = vpop.permute.xlu0 %735
      %737 = vrot.lane.b32.xlu0 %v662, 64
      %v738 = vpop.permute.xlu0 %737
      %739 = vrot.lane.b32.xlu0 %v663, 64
      %v740 = vpop.permute.xlu0 %739
      %741 = vrot.lane.b32.xlu0 %v664, 64
      %v742 = vpop.permute.xlu0 %741
      %743 = vrot.lane.b32.xlu0 %v665, 64
      %v744 = vpop.permute.xlu0 %743
      %745 = vrot.lane.b32.xlu0 %v666, 64
      %v746 = vpop.permute.xlu0 %745
      %747 = vrot.lane.b32.xlu0 %v667, 64
      %v748 = vpop.permute.xlu0 %747
      %749 = vrot.lane.b32.xlu0 %v668, 64
      %v750 = vpop.permute.xlu0 %749
      %751 = vrot.lane.b32.xlu0 %v669, 64
      %v752 = vpop.permute.xlu0 %751
      %753 = vrot.lane.b32.xlu0 %v670, 64
      %v754 = vpop.permute.xlu0 %753
      %755 = vrot.lane.b32.xlu0 %v671, 64
      %v756 = vpop.permute.xlu0 %755
      %757 = vrot.lane.b32.xlu0 %v672, 64
      %v758 = vpop.permute.xlu0 %757
      %759 = vrot.lane.b32.xlu0 %v673, 64
      %v760 = vpop.permute.xlu0 %759
      %761 = vrot.lane.b32.xlu0 %v674, 64
      %v762 = vpop.permute.xlu0 %761
      %763 = vrot.lane.b32.xlu0 %v675, 64
      %v764 = vpop.permute.xlu0 %763
      %765 = vrot.lane.b32.xlu0 %v676, 64
      %v766 = vpop.permute.xlu0 %765
      %767 = vrot.lane.b32.xlu0 %v677, 64
      %v768 = vpop.permute.xlu0 %767
      %769 = vrot.lane.b32.xlu0 %v678, 64
      %v770 = vpop.permute.xlu0 %769
      %771 = vrot.lane.b32.xlu0 %v679, 64
      %v772 = vpop.permute.xlu0 %771
      %773 = vrot.lane.b32.xlu0 %v680, 64
      %v774 = vpop.permute.xlu0 %773
      %775 = vrot.lane.b32.xlu0 %v681, 64
      %v776 = vpop.permute.xlu0 %775
      %777 = vrot.lane.b32.xlu0 %v682, 64
      %v778 = vpop.permute.xlu0 %777
      %v811 = vmax.f32 %v651, %v716
      %v812 = vmax.f32 %v652, %v718
      %v813 = vmax.f32 %v653, %v720
      %v814 = vmax.f32 %v654, %v722
      %v815 = vmax.f32 %v655, %v724
      %v816 = vmax.f32 %v656, %v726
      %v817 = vmax.f32 %v657, %v728
      %v818 = vmax.f32 %v658, %v730
      %v819 = vmax.f32 %v659, %v732
      %v820 = vmax.f32 %v660, %v734
      %v821 = vmax.f32 %v661, %v736
      %v822 = vmax.f32 %v662, %v738
      %v823 = vmax.f32 %v663, %v740
      %v824 = vmax.f32 %v664, %v742
      %v825 = vmax.f32 %v665, %v744
      %v826 = vmax.f32 %v666, %v746
      %v827 = vmax.f32 %v667, %v748
      %v828 = vmax.f32 %v668, %v750
      %v829 = vmax.f32 %v669, %v752
      %v830 = vmax.f32 %v670, %v754
      %v831 = vmax.f32 %v671, %v756
      %v832 = vmax.f32 %v672, %v758
      %v833 = vmax.f32 %v673, %v760
      %v834 = vmax.f32 %v674, %v762
      %v835 = vmax.f32 %v675, %v764
      %v836 = vmax.f32 %v676, %v766
      %v837 = vmax.f32 %v677, %v768
      %v838 = vmax.f32 %v678, %v770
      %v839 = vmax.f32 %v679, %v772
      %v840 = vmax.f32 %v680, %v774
      %v841 = vmax.f32 %v681, %v776
      %v842 = vmax.f32 %v682, %v778
      %v843 = vmax.f32 %v811, 0.0
      %v844 = vmax.f32 %v812, 0.0
      %v845 = vmax.f32 %v813, 0.0
      %v846 = vmax.f32 %v814, 0.0
      %v847 = vmax.f32 %v815, 0.0
      %v848 = vmax.f32 %v816, 0.0
      %v849 = vmax.f32 %v817, 0.0
      %v850 = vmax.f32 %v818, 0.0
      %v851 = vmax.f32 %v819, 0.0
      %v852 = vmax.f32 %v820, 0.0
      %v853 = vmax.f32 %v821, 0.0
      %v854 = vmax.f32 %v822, 0.0
      %v855 = vmax.f32 %v823, 0.0
      %v856 = vmax.f32 %v824, 0.0
      %v857 = vmax.f32 %v825, 0.0
      %v858 = vmax.f32 %v826, 0.0
      %v859 = vmax.f32 %v827, 0.0
      %v860 = vmax.f32 %v828, 0.0
      %v861 = vmax.f32 %v829, 0.0
      %v862 = vmax.f32 %v830, 0.0
      %v863 = vmax.f32 %v831, 0.0
      %v864 = vmax.f32 %v832, 0.0
      %v865 = vmax.f32 %v833, 0.0
      %v866 = vmax.f32 %v834, 0.0
      %v867 = vmax.f32 %v835, 0.0
      %v868 = vmax.f32 %v836, 0.0
      %v869 = vmax.f32 %v837, 0.0
      %v870 = vmax.f32 %v838, 0.0
      %v871 = vmax.f32 %v839, 0.0
      %v872 = vmax.f32 %v840, 0.0
      %v873 = vmax.f32 %v841, 0.0
      %v874 = vmax.f32 %v842, 0.0
      %v875 = vpack.c.bf16 %v843, %v843
      %v876 = vpack.c.bf16 %v844, %v844
      %v877 = vpack.c.bf16 %v845, %v845
      %v878 = vpack.c.bf16 %v846, %v846
      %v879 = vpack.c.bf16 %v847, %v847
      %v880 = vpack.c.bf16 %v848, %v848
      %v881 = vpack.c.bf16 %v849, %v849
      %v882 = vpack.c.bf16 %v850, %v850
      %v883 = vpack.c.bf16 %v851, %v851
      %v884 = vpack.c.bf16 %v852, %v852
      %v885 = vpack.c.bf16 %v853, %v853
      %v886 = vpack.c.bf16 %v854, %v854
      %v887 = vpack.c.bf16 %v855, %v855
      %v888 = vpack.c.bf16 %v856, %v856
      %v889 = vpack.c.bf16 %v857, %v857
      %v890 = vpack.c.bf16 %v858, %v858
      %v891 = vpack.c.bf16 %v859, %v859
      %v892 = vpack.c.bf16 %v860, %v860
      %v893 = vpack.c.bf16 %v861, %v861
      %v894 = vpack.c.bf16 %v862, %v862
      %v895 = vpack.c.bf16 %v863, %v863
      %v896 = vpack.c.bf16 %v864, %v864
      %v897 = vpack.c.bf16 %v865, %v865
      %v898 = vpack.c.bf16 %v866, %v866
      %v899 = vpack.c.bf16 %v867, %v867
      %v900 = vpack.c.bf16 %v868, %v868
      %v901 = vpack.c.bf16 %v869, %v869
      %v902 = vpack.c.bf16 %v870, %v870
      %v903 = vpack.c.bf16 %v871, %v871
      %v904 = vpack.c.bf16 %v872, %v872
      %v905 = vpack.c.bf16 %v873, %v873
      %v906 = vpack.c.bf16 %v874, %v874
      %vm907 = vcmask 257024
      %908 = vst.msk [vmem:[#allocation2] sm:$0xf] %vm907, %v875
      %909 = vst.msk [vmem:[#allocation2 + $0x4] sm:$0xf] %vm907, %v876
      %910 = vst.msk [vmem:[#allocation2 + $0x8] sm:$0xf] %vm907, %v877
      %911 = vst.msk [vmem:[#allocation2 + $0xc] sm:$0xf] %vm907, %v878
      %912 = vst.msk [vmem:[#allocation2 + $0x10] sm:$0xf] %vm907, %v879
      %913 = vst.msk [vmem:[#allocation2 + $0x14] sm:$0xf] %vm907, %v880
      %914 = vst.msk [vmem:[#allocation2 + $0x18] sm:$0xf] %vm907, %v881
      %915 = vst.msk [vmem:[#allocation2 + $0x1c] sm:$0xf] %vm907, %v882
      %916 = vst.msk [vmem:[#allocation2 + $0x20] sm:$0xf] %vm907, %v883
      %917 = vst.msk [vmem:[#allocation2 + $0x24] sm:$0xf] %vm907, %v884
      %918 = vst.msk [vmem:[#allocation2 + $0x28] sm:$0xf] %vm907, %v885
      %919 = vst.msk [vmem:[#allocation2 + $0x2c] sm:$0xf] %vm907, %v886
      %920 = vst.msk [vmem:[#allocation2 + $0x30] sm:$0xf] %vm907, %v887
      %921 = vst.msk [vmem:[#allocation2 + $0x34] sm:$0xf] %vm907, %v888
      %922 = vst.msk [vmem:[#allocation2 + $0x38] sm:$0xf] %vm907, %v889
      %923 = vst.msk [vmem:[#allocation2 + $0x3c] sm:$0xf] %vm907, %v890
      %924 = vst.msk [vmem:[#allocation2 + $0x40] sm:$0xf] %vm907, %v891
      %925 = vst.msk [vmem:[#allocation2 + $0x44] sm:$0xf] %vm907, %v892
      %926 = vst.msk [vmem:[#allocation2 + $0x48] sm:$0xf] %vm907, %v893
      %927 = vst.msk [vmem:[#allocation2 + $0x4c] sm:$0xf] %vm907, %v894
      %928 = vst.msk [vmem:[#allocation2 + $0x50] sm:$0xf] %vm907, %v895
      %929 = vst.msk [vmem:[#allocation2 + $0x54] sm:$0xf] %vm907, %v896
      %930 = vst.msk [vmem:[#allocation2 + $0x58] sm:$0xf] %vm907, %v897
      %931 = vst.msk [vmem:[#allocation2 + $0x5c] sm:$0xf] %vm907, %v898
      %932 = vst.msk [vmem:[#allocation2 + $0x60] sm:$0xf] %vm907, %v899
      %933 = vst.msk [vmem:[#allocation2 + $0x64] sm:$0xf] %vm907, %v900
      %934 = vst.msk [vmem:[#allocation2 + $0x68] sm:$0xf] %vm907, %v901
      %935 = vst.msk [vmem:[#allocation2 + $0x6c] sm:$0xf] %vm907, %v902
      %936 = vst.msk [vmem:[#allocation2 + $0x70] sm:$0xf] %vm907, %v903
      %937 = vst.msk [vmem:[#allocation2 + $0x74] sm:$0xf] %vm907, %v904
      %938 = vst.msk [vmem:[#allocation2 + $0x78] sm:$0xf] %vm907, %v905
      %939 = vst.msk [vmem:[#allocation2 + $0x7c] sm:$0xf] %vm907, %v906
      %v940 = vld [vmem:[#allocation2] sm:$0xf]
      %v941 = vld [vmem:[#allocation2 + $0x4] sm:$0xf]
      %v942 = vld [vmem:[#allocation2 + $0x8] sm:$0xf]
      %v943 = vld [vmem:[#allocation2 + $0xc] sm:$0xf]
      %v944 = vld [vmem:[#allocation2 + $0x10] sm:$0xf]
      %v945 = vld [vmem:[#allocation2 + $0x14] sm:$0xf]
      %v946 = vld [vmem:[#allocation2 + $0x18] sm:$0xf]
      %v947 = vld [vmem:[#allocation2 + $0x1c] sm:$0xf]
      %v948 = vld [vmem:[#allocation2 + $0x20] sm:$0xf]
      %v949 = vld [vmem:[#allocation2 + $0x24] sm:$0xf]
      %v950 = vld [vmem:[#allocation2 + $0x28] sm:$0xf]
      %v951 = vld [vmem:[#allocation2 + $0x2c] sm:$0xf]
      %v952 = vld [vmem:[#allocation2 + $0x30] sm:$0xf]
      %v953 = vld [vmem:[#allocation2 + $0x34] sm:$0xf]
      %v954 = vld [vmem:[#allocation2 + $0x38] sm:$0xf]
      %v955 = vld [vmem:[#allocation2 + $0x3c] sm:$0xf]
      %v956 = vld [vmem:[#allocation2 + $0x40] sm:$0xf]
      %v957 = vld [vmem:[#allocation2 + $0x44] sm:$0xf]
      %v958 = vld [vmem:[#allocation2 + $0x48] sm:$0xf]
      %v959 = vld [vmem:[#allocation2 + $0x4c] sm:$0xf]
      %v960 = vld [vmem:[#allocation2 + $0x50] sm:$0xf]
      %v961 = vld [vmem:[#allocation2 + $0x54] sm:$0xf]
      %v962 = vld [vmem:[#allocation2 + $0x58] sm:$0xf]
      %v963 = vld [vmem:[#allocation2 + $0x5c] sm:$0xf]
      %v964 = vld [vmem:[#allocation2 + $0x60] sm:$0xf]
      %v965 = vld [vmem:[#allocation2 + $0x64] sm:$0xf]
      %v966 = vld [vmem:[#allocation2 + $0x68] sm:$0xf]
      %v967 = vld [vmem:[#allocation2 + $0x6c] sm:$0xf]
      %v968 = vld [vmem:[#allocation2 + $0x70] sm:$0xf]
      %v969 = vld [vmem:[#allocation2 + $0x74] sm:$0xf]
      %v970 = vld [vmem:[#allocation2 + $0x78] sm:$0xf]
      %v971 = vld [vmem:[#allocation2 + $0x7c] sm:$0xf]
      %972 = vst.msk [vmem:[#allocation3] sm:$0xf] %vm907, %v940
      %973 = vst.msk [vmem:[#allocation3 + $0xc] sm:$0xf] %vm907, %v941
      %974 = vst.msk [vmem:[#allocation3 + $0x18] sm:$0xf] %vm907, %v942
      %975 = vst.msk [vmem:[#allocation3 + $0x24] sm:$0xf] %vm907, %v943
      %976 = vst.msk [vmem:[#allocation3 + $0x30] sm:$0xf] %vm907, %v944
      %977 = vst.msk [vmem:[#allocation3 + $0x3c] sm:$0xf] %vm907, %v945
      %978 = vst.msk [vmem:[#allocation3 + $0x48] sm:$0xf] %vm907, %v946
      %979 = vst.msk [vmem:[#allocation3 + $0x54] sm:$0xf] %vm907, %v947
      %980 = vst.msk [vmem:[#allocation3 + $0x60] sm:$0xf] %vm907, %v948
      %981 = vst.msk [vmem:[#allocation3 + $0x6c] sm:$0xf] %vm907, %v949
      %982 = vst.msk [vmem:[#allocation3 + $0x78] sm:$0xf] %vm907, %v950
      %983 = vst.msk [vmem:[#allocation3 + $0x84] sm:$0xf] %vm907, %v951
      %984 = vst.msk [vmem:[#allocation3 + $0x90] sm:$0xf] %vm907, %v952
      %985 = vst.msk [vmem:[#allocation3 + $0x9c] sm:$0xf] %vm907, %v953
      %986 = vst.msk [vmem:[#allocation3 + $0xa8] sm:$0xf] %vm907, %v954
      %987 = vst.msk [vmem:[#allocation3 + $0xb4] sm:$0xf] %vm907, %v955
      %988 = vst.msk [vmem:[#allocation3 + $0xc0] sm:$0xf] %vm907, %v956
      %989 = vst.msk [vmem:[#allocation3 + $0xcc] sm:$0xf] %vm907, %v957
      %990 = vst.msk [vmem:[#allocation3 + $0xd8] sm:$0xf] %vm907, %v958
      %991 = vst.msk [vmem:[#allocation3 + $0xe4] sm:$0xf] %vm907, %v959
      %992 = vst.msk [vmem:[#allocation3 + $0xf0] sm:$0xf] %vm907, %v960
      %993 = vst.msk [vmem:[#allocation3 + $0xfc] sm:$0xf] %vm907, %v961
      %994 = vst.msk [vmem:[#allocation3 + $0x108] sm:$0xf] %vm907, %v962
      %995 = vst.msk [vmem:[#allocation3 + $0x114] sm:$0xf] %vm907, %v963
      %996 = vst.msk [vmem:[#allocation3 + $0x120] sm:$0xf] %vm907, %v964
      %997 = vst.msk [vmem:[#allocation3 + $0x12c] sm:$0xf] %vm907, %v965
      %998 = vst.msk [vmem:[#allocation3 + $0x138] sm:$0xf] %vm907, %v966
      %999 = vst.msk [vmem:[#allocation3 + $0x144] sm:$0xf] %vm907, %v967
      %1000 = vst.msk [vmem:[#allocation3 + $0x150] sm:$0xf] %vm907, %v968
      %1001 = vst.msk [vmem:[#allocation3 + $0x15c] sm:$0xf] %vm907, %v969
      %1002 = vst.msk [vmem:[#allocation3 + $0x168] sm:$0xf] %vm907, %v970
      %1003 = vst.msk [vmem:[#allocation3 + $0x174] sm:$0xf] %vm907, %v971
      %v1004 = vld [vmem:[#allocation2] sm:$0xf]
      %v1005 = vld [vmem:[#allocation2 + $0x4] sm:$0xf]
      %v1006 = vld [vmem:[#allocation2 + $0x8] sm:$0xf]
      %v1007 = vld [vmem:[#allocation2 + $0xc] sm:$0xf]
      %v1008 = vld [vmem:[#allocation2 + $0x10] sm:$0xf]
      %v1009 = vld [vmem:[#allocation2 + $0x14] sm:$0xf]
      %v1010 = vld [vmem:[#allocation2 + $0x18] sm:$0xf]
      %v1011 = vld [vmem:[#allocation2 + $0x1c] sm:$0xf]
      %v1012 = vld [vmem:[#allocation2 + $0x20] sm:$0xf]
      %v1013 = vld [vmem:[#allocation2 + $0x24] sm:$0xf]
      %v1014 = vld [vmem:[#allocation2 + $0x28] sm:$0xf]
      %v1015 = vld [vmem:[#allocation2 + $0x2c] sm:$0xf]
      %v1016 = vld [vmem:[#allocation2 + $0x30] sm:$0xf]
      %v1017 = vld [vmem:[#allocation2 + $0x34] sm:$0xf]
      %v1018 = vld [vmem:[#allocation2 + $0x38] sm:$0xf]
      %v1019 = vld [vmem:[#allocation2 + $0x3c] sm:$0xf]
      %v1020 = vld [vmem:[#allocation2 + $0x40] sm:$0xf]
      %v1021 = vld [vmem:[#allocation2 + $0x44] sm:$0xf]
      %v1022 = vld [vmem:[#allocation2 + $0x48] sm:$0xf]
      %v1023 = vld [vmem:[#allocation2 + $0x4c] sm:$0xf]
      %v1024 = vld [vmem:[#allocation2 + $0x50] sm:$0xf]
      %v1025 = vld [vmem:[#allocation2 + $0x54] sm:$0xf]
      %v1026 = vld [vmem:[#allocation2 + $0x58] sm:$0xf]
      %v1027 = vld [vmem:[#allocation2 + $0x5c] sm:$0xf]
      %v1028 = vld [vmem:[#allocation2 + $0x60] sm:$0xf]
      %v1029 = vld [vmem:[#allocation2 + $0x64] sm:$0xf]
      %v1030 = vld [vmem:[#allocation2 + $0x68] sm:$0xf]
      %v1031 = vld [vmem:[#allocation2 + $0x6c] sm:$0xf]
      %v1032 = vld [vmem:[#allocation2 + $0x70] sm:$0xf]
      %v1033 = vld [vmem:[#allocation2 + $0x74] sm:$0xf]
      %v1034 = vld [vmem:[#allocation2 + $0x78] sm:$0xf]
      %v1035 = vld [vmem:[#allocation2 + $0x7c] sm:$0xf]
      %v1036 = vld [vmem:[#allocation2 + $0x80] sm:$0x1]
      %vm1037 = vsmask.f32 3328
      %vm1038 = vsmask.f32 7440
      %vm1039 = vmor %vm1037, %vm1038
      %v1041 = vshrl.u32 %v1004, 16
      %v1043 = vrot.slane %v1041, 4
      %v1044 = vshll.u32 %v1004, 16
      %v1046 = vrot.slane %v1044, 5
      %v1047 = vor.u32 %v1043, %v1046
      %v1048 = vrot.slane %v1047, 4
      %v1050 = vshll.u32 %v1005, 16
      %v1052 = vrot.slane %v1050, 5
      %v1053 = vsel %vm1039, %v1048, %v1052
      %v1054 = vshrl.u32 %v1005, 16
      %v1056 = vrot.slane %v1054, 4
      %v1057 = vor.u32 %v1056, %v1052
      %v1058 = vrot.slane %v1057, 4
      %v1060 = vshll.u32 %v1006, 16
      %v1062 = vrot.slane %v1060, 5
      %v1063 = vsel %vm1039, %v1058, %v1062
      %v1064 = vshrl.u32 %v1006, 16
      %v1066 = vrot.slane %v1064, 4
      %v1067 = vor.u32 %v1066, %v1062
      %v1068 = vrot.slane %v1067, 4
      %v1070 = vshll.u32 %v1007, 16
      %v1072 = vrot.slane %v1070, 5
      %v1073 = vsel %vm1039, %v1068, %v1072
      %v1074 = vshrl.u32 %v1007, 16
      %v1076 = vrot.slane %v1074, 4
      %v1077 = vor.u32 %v1076, %v1072
      %v1078 = vrot.slane %v1077, 4
      %v1080 = vshll.u32 %v1008, 16
      %v1082 = vrot.slane %v1080, 5
      %v1083 = vsel %vm1039, %v1078, %v1082
      %v1084 = vshrl.u32 %v1008, 16
      %v1086 = vrot.slane %v1084, 4
      %v1087 = vor.u32 %v1086, %v1082
      %v1088 = vrot.slane %v1087, 4
      %v1090 = vshll.u32 %v1009, 16
      %v1092 = vrot.slane %v1090, 5
      %v1093 = vsel %vm1039, %v1088, %v1092
      %v1094 = vshrl.u32 %v1009, 16
      %v1096 = vrot.slane %v1094, 4
      %v1097 = vor.u32 %v1096, %v1092
      %v1098 = vrot.slane %v1097, 4
      %v1100 = vshll.u32 %v1010, 16
      %v1102 = vrot.slane %v1100, 5
      %v1103 = vsel %vm1039, %v1098, %v1102
      %v1104 = vshrl.u32 %v1010, 16
      %v1106 = vrot.slane %v1104, 4
      %v1107 = vor.u32 %v1106, %v1102
      %v1108 = vrot.slane %v1107, 4
      %v1110 = vshll.u32 %v1011, 16
      %v1112 = vrot.slane %v1110, 5
      %v1113 = vsel %vm1039, %v1108, %v1112
      %v1114 = vshrl.u32 %v1011, 16
      %v1116 = vrot.slane %v1114, 4
      %v1117 = vor.u32 %v1116, %v1112
      %v1118 = vrot.slane %v1117, 4
      %v1120 = vshll.u32 %v1012, 16
      %v1122 = vrot.slane %v1120, 5
      %v1123 = vsel %vm1039, %v1118, %v1122
      %v1124 = vshrl.u32 %v1012, 16
      %v1126 = vrot.slane %v1124, 4
      %v1127 = vor.u32 %v1126, %v1122
      %v1128 = vrot.slane %v1127, 4
      %v1130 = vshll.u32 %v1013, 16
      %v1132 = vrot.slane %v1130, 5
      %v1133 = vsel %vm1039, %v1128, %v1132
      %v1134 = vshrl.u32 %v1013, 16
      %v1136 = vrot.slane %v1134, 4
      %v1137 = vor.u32 %v1136, %v1132
      %v1138 = vrot.slane %v1137, 4
      %v1140 = vshll.u32 %v1014, 16
      %v1142 = vrot.slane %v1140, 5
      %v1143 = vsel %vm1039, %v1138, %v1142
      %v1144 = vshrl.u32 %v1014, 16
      %v1146 = vrot.slane %v1144, 4
      %v1147 = vor.u32 %v1146, %v1142
      %v1148 = vrot.slane %v1147, 4
      %v1150 = vshll.u32 %v1015, 16
      %v1152 = vrot.slane %v1150, 5
      %v1153 = vsel %vm1039, %v1148, %v1152
      %v1154 = vshrl.u32 %v1015, 16
      %v1156 = vrot.slane %v1154, 4
      %v1157 = vor.u32 %v1156, %v1152
      %v1158 = vrot.slane %v1157, 4
      %v1160 = vshll.u32 %v1016, 16
      %v1162 = vrot.slane %v1160, 5
      %v1163 = vsel %vm1039, %v1158, %v1162
      %v1164 = vshrl.u32 %v1016, 16
      %v1166 = vrot.slane %v1164, 4
      %v1167 = vor.u32 %v1166, %v1162
      %v1168 = vrot.slane %v1167, 4
      %v1170 = vshll.u32 %v1017, 16
      %v1172 = vrot.slane %v1170, 5
      %v1173 = vsel %vm1039, %v1168, %v1172
      %v1174 = vshrl.u32 %v1017, 16
      %v1176 = vrot.slane %v1174, 4
      %v1177 = vor.u32 %v1176, %v1172
      %v1178 = vrot.slane %v1177, 4
      %v1180 = vshll.u32 %v1018, 16
      %v1182 = vrot.slane %v1180, 5
      %v1183 = vsel %vm1039, %v1178, %v1182
      %v1184 = vshrl.u32 %v1018, 16
      %v1186 = vrot.slane %v1184, 4
      %v1187 = vor.u32 %v1186, %v1182
      %v1188 = vrot.slane %v1187, 4
      %v1190 = vshll.u32 %v1019, 16
      %v1192 = vrot.slane %v1190, 5
      %v1193 = vsel %vm1039, %v1188, %v1192
      %v1194 = vshrl.u32 %v1019, 16
      %v1196 = vrot.slane %v1194, 4
      %v1197 = vor.u32 %v1196, %v1192
      %v1198 = vrot.slane %v1197, 4
      %v1200 = vshll.u32 %v1020, 16
      %v1202 = vrot.slane %v1200, 5
      %v1203 = vsel %vm1039, %v1198, %v1202
      %v1204 = vshrl.u32 %v1020, 16
      %v1206 = vrot.slane %v1204, 4
      %v1207 = vor.u32 %v1206, %v1202
      %v1208 = vrot.slane %v1207, 4
      %v1210 = vshll.u32 %v1021, 16
      %v1212 = vrot.slane %v1210, 5
      %v1213 = vsel %vm1039, %v1208, %v1212
      %v1214 = vshrl.u32 %v1021, 16
      %v1216 = vrot.slane %v1214, 4
      %v1217 = vor.u32 %v1216, %v1212
      %v1218 = vrot.slane %v1217, 4
      %v1220 = vshll.u32 %v1022, 16
      %v1222 = vrot.slane %v1220, 5
      %v1223 = vsel %vm1039, %v1218, %v1222
      %v1224 = vshrl.u32 %v1022, 16
      %v1226 = vrot.slane %v1224, 4
      %v1227 = vor.u32 %v1226, %v1222
      %v1228 = vrot.slane %v1227, 4
      %v1230 = vshll.u32 %v1023, 16
      %v1232 = vrot.slane %v1230, 5
      %v1233 = vsel %vm1039, %v1228, %v1232
      %v1234 = vshrl.u32 %v1023, 16
      %v1236 = vrot.slane %v1234, 4
      %v1237 = vor.u32 %v1236, %v1232
      %v1238 = vrot.slane %v1237, 4
      %v1240 = vshll.u32 %v1024, 16
      %v1242 = vrot.slane %v1240, 5
      %v1243 = vsel %vm1039, %v1238, %v1242
      %v1244 = vshrl.u32 %v1024, 16
      %v1246 = vrot.slane %v1244, 4
      %v1247 = vor.u32 %v1246, %v1242
      %v1248 = vrot.slane %v1247, 4
      %v1250 = vshll.u32 %v1025, 16
      %v1252 = vrot.slane %v1250, 5
      %v1253 = vsel %vm1039, %v1248, %v1252
      %v1254 = vshrl.u32 %v1025, 16
      %v1256 = vrot.slane %v1254, 4
      %v1257 = vor.u32 %v1256, %v1252
      %v1258 = vrot.slane %v1257, 4
      %v1260 = vshll.u32 %v1026, 16
      %v1262 = vrot.slane %v1260, 5
      %v1263 = vsel %vm1039, %v1258, %v1262
      %v1264 = vshrl.u32 %v1026, 16
      %v1266 = vrot.slane %v1264, 4
      %v1267 = vor.u32 %v1266, %v1262
      %v1268 = vrot.slane %v1267, 4
      %v1270 = vshll.u32 %v1027, 16
      %v1272 = vrot.slane %v1270, 5
      %v1273 = vsel %vm1039, %v1268, %v1272
      %v1274 = vshrl.u32 %v1027, 16
      %v1276 = vrot.slane %v1274, 4
      %v1277 = vor.u32 %v1276, %v1272
      %v1278 = vrot.slane %v1277, 4
      %v1280 = vshll.u32 %v1028, 16
      %v1282 = vrot.slane %v1280, 5
      %v1283 = vsel %vm1039, %v1278, %v1282
      %v1284 = vshrl.u32 %v1028, 16
      %v1286 = vrot.slane %v1284, 4
      %v1287 = vor.u32 %v1286, %v1282
      %v1288 = vrot.slane %v1287, 4
      %v1290 = vshll.u32 %v1029, 16
      %v1292 = vrot.slane %v1290, 5
      %v1293 = vsel %vm1039, %v1288, %v1292
      %v1294 = vshrl.u32 %v1029, 16
      %v1296 = vrot.slane %v1294, 4
      %v1297 = vor.u32 %v1296, %v1292
      %v1298 = vrot.slane %v1297, 4
      %v1300 = vshll.u32 %v1030, 16
      %v1302 = vrot.slane %v1300, 5
      %v1303 = vsel %vm1039, %v1298, %v1302
      %v1304 = vshrl.u32 %v1030, 16
      %v1306 = vrot.slane %v1304, 4
      %v1307 = vor.u32 %v1306, %v1302
      %v1308 = vrot.slane %v1307, 4
      %v1310 = vshll.u32 %v1031, 16
      %v1312 = vrot.slane %v1310, 5
      %v1313 = vsel %vm1039, %v1308, %v1312
      %v1314 = vshrl.u32 %v1031, 16
      %v1316 = vrot.slane %v1314, 4
      %v1317 = vor.u32 %v1316, %v1312
      %v1318 = vrot.slane %v1317, 4
      %v1320 = vshll.u32 %v1032, 16
      %v1322 = vrot.slane %v1320, 5
      %v1323 = vsel %vm1039, %v1318, %v1322
      %v1324 = vshrl.u32 %v1032, 16
      %v1326 = vrot.slane %v1324, 4
      %v1327 = vor.u32 %v1326, %v1322
      %v1328 = vrot.slane %v1327, 4
      %v1330 = vshll.u32 %v1033, 16
      %v1332 = vrot.slane %v1330, 5
      %v1333 = vsel %vm1039, %v1328, %v1332
      %v1334 = vshrl.u32 %v1033, 16
      %v1336 = vrot.slane %v1334, 4
      %v1337 = vor.u32 %v1336, %v1332
      %v1338 = vrot.slane %v1337, 4
      %v1340 = vshll.u32 %v1034, 16
      %v1342 = vrot.slane %v1340, 5
      %v1343 = vsel %vm1039, %v1338, %v1342
      %v1344 = vshrl.u32 %v1034, 16
      %v1346 = vrot.slane %v1344, 4
      %v1347 = vor.u32 %v1346, %v1342
      %v1348 = vrot.slane %v1347, 4
      %v1350 = vshll.u32 %v1035, 16
      %v1352 = vrot.slane %v1350, 5
      %v1353 = vsel %vm1039, %v1348, %v1352
      %v1354 = vshrl.u32 %v1035, 16
      %v1356 = vrot.slane %v1354, 4
      %v1357 = vor.u32 %v1356, %v1352
      %v1358 = vrot.slane %v1357, 4
      %v1360 = vshll.u32 %v1036, 16
      %v1362 = vrot.slane %v1360, 5
      %v1363 = vsel %vm1039, %v1358, %v1362
      %1364 = vrot.lane.b32.xlu0 %v1053, 32
      %v1365 = vpop.permute.xlu0 %1364
      %1366 = vrot.lane.b32.xlu0 %v1063, 32
      %v1367 = vpop.permute.xlu0 %1366
      %1368 = vrot.lane.b32.xlu0 %v1073, 32
      %v1369 = vpop.permute.xlu0 %1368
      %1370 = vrot.lane.b32.xlu0 %v1083, 32
      %v1371 = vpop.permute.xlu0 %1370
      %1372 = vrot.lane.b32.xlu0 %v1093, 32
      %v1373 = vpop.permute.xlu0 %1372
      %1374 = vrot.lane.b32.xlu0 %v1103, 32
      %v1375 = vpop.permute.xlu0 %1374
      %1376 = vrot.lane.b32.xlu0 %v1113, 32
      %v1377 = vpop.permute.xlu0 %1376
      %1378 = vrot.lane.b32.xlu0 %v1123, 32
      %v1379 = vpop.permute.xlu0 %1378
      %1380 = vrot.lane.b32.xlu0 %v1133, 32
      %v1381 = vpop.permute.xlu0 %1380
      %1382 = vrot.lane.b32.xlu0 %v1143, 32
      %v1383 = vpop.permute.xlu0 %1382
      %1384 = vrot.lane.b32.xlu0 %v1153, 32
      %v1385 = vpop.permute.xlu0 %1384
      %1386 = vrot.lane.b32.xlu0 %v1163, 32
      %v1387 = vpop.permute.xlu0 %1386
      %1388 = vrot.lane.b32.xlu0 %v1173, 32
      %v1389 = vpop.permute.xlu0 %1388
      %1390 = vrot.lane.b32.xlu0 %v1183, 32
      %v1391 = vpop.permute.xlu0 %1390
      %1392 = vrot.lane.b32.xlu0 %v1193, 32
      %v1393 = vpop.permute.xlu0 %1392
      %1394 = vrot.lane.b32.xlu0 %v1203, 32
      %v1395 = vpop.permute.xlu0 %1394
      %1396 = vrot.lane.b32.xlu0 %v1213, 32
      %v1397 = vpop.permute.xlu0 %1396
      %1398 = vrot.lane.b32.xlu0 %v1223, 32
      %v1399 = vpop.permute.xlu0 %1398
      %1400 = vrot.lane.b32.xlu0 %v1233, 32
      %v1401 = vpop.permute.xlu0 %1400
      %1402 = vrot.lane.b32.xlu0 %v1243, 32
      %v1403 = vpop.permute.xlu0 %1402
      %1404 = vrot.lane.b32.xlu0 %v1253, 32
      %v1405 = vpop.permute.xlu0 %1404
      %1406 = vrot.lane.b32.xlu0 %v1263, 32
      %v1407 = vpop.permute.xlu0 %1406
      %1408 = vrot.lane.b32.xlu0 %v1273, 32
      %v1409 = vpop.permute.xlu0 %1408
      %1410 = vrot.lane.b32.xlu0 %v1283, 32
      %v1411 = vpop.permute.xlu0 %1410
      %1412 = vrot.lane.b32.xlu0 %v1293, 32
      %v1413 = vpop.permute.xlu0 %1412
      %1414 = vrot.lane.b32.xlu0 %v1303, 32
      %v1415 = vpop.permute.xlu0 %1414
      %1416 = vrot.lane.b32.xlu0 %v1313, 32
      %v1417 = vpop.permute.xlu0 %1416
      %1418 = vrot.lane.b32.xlu0 %v1323, 32
      %v1419 = vpop.permute.xlu0 %1418
      %1420 = vrot.lane.b32.xlu0 %v1333, 32
      %v1421 = vpop.permute.xlu0 %1420
      %1422 = vrot.lane.b32.xlu0 %v1343, 32
      %v1423 = vpop.permute.xlu0 %1422
      %1424 = vrot.lane.b32.xlu0 %v1353, 32
      %v1425 = vpop.permute.xlu0 %1424
      %1426 = vrot.lane.b32.xlu0 %v1363, 32
      %v1427 = vpop.permute.xlu0 %1426
      %vm1460 = vcmask 519424
      %1461 = vst.msk [vmem:[#allocation3] sm:$0xf] %vm1460, %v1365
      %1462 = vst.msk [vmem:[#allocation3 + $0xc] sm:$0xf] %vm1460, %v1367
      %1463 = vst.msk [vmem:[#allocation3 + $0x18] sm:$0xf] %vm1460, %v1369
      %1464 = vst.msk [vmem:[#allocation3 + $0x24] sm:$0xf] %vm1460, %v1371
      %1465 = vst.msk [vmem:[#allocation3 + $0x30] sm:$0xf] %vm1460, %v1373
      %1466 = vst.msk [vmem:[#allocation3 + $0x3c] sm:$0xf] %vm1460, %v1375
      %1467 = vst.msk [vmem:[#allocation3 + $0x48] sm:$0xf] %vm1460, %v1377
      %1468 = vst.msk [vmem:[#allocation3 + $0x54] sm:$0xf] %vm1460, %v1379
      %1469 = vst.msk [vmem:[#allocation3 + $0x60] sm:$0xf] %vm1460, %v1381
      %1470 = vst.msk [vmem:[#allocation3 + $0x6c] sm:$0xf] %vm1460, %v1383
      %1471 = vst.msk [vmem:[#allocation3 + $0x78] sm:$0xf] %vm1460, %v1385
      %1472 = vst.msk [vmem:[#allocation3 + $0x84] sm:$0xf] %vm1460, %v1387
      %1473 = vst.msk [vmem:[#allocation3 + $0x90] sm:$0xf] %vm1460, %v1389
      %1474 = vst.msk [vmem:[#allocation3 + $0x9c] sm:$0xf] %vm1460, %v1391
      %1475 = vst.msk [vmem:[#allocation3 + $0xa8] sm:$0xf] %vm1460, %v1393
      %1476 = vst.msk [vmem:[#allocation3 + $0xb4] sm:$0xf] %vm1460, %v1395
      %1477 = vst.msk [vmem:[#allocation3 + $0xc0] sm:$0xf] %vm1460, %v1397
      %1478 = vst.msk [vmem:[#allocation3 + $0xcc] sm:$0xf] %vm1460, %v1399
      %1479 = vst.msk [vmem:[#allocation3 + $0xd8] sm:$0xf] %vm1460, %v1401
      %1480 = vst.msk [vmem:[#allocation3 + $0xe4] sm:$0xf] %vm1460, %v1403
      %1481 = vst.msk [vmem:[#allocation3 + $0xf0] sm:$0xf] %vm1460, %v1405
      %1482 = vst.msk [vmem:[#allocation3 + $0xfc] sm:$0xf] %vm1460, %v1407
      %1483 = vst.msk [vmem:[#allocation3 + $0x108] sm:$0xf] %vm1460, %v1409
      %1484 = vst.msk [vmem:[#allocation3 + $0x114] sm:$0xf] %vm1460, %v1411
      %1485 = vst.msk [vmem:[#allocation3 + $0x120] sm:$0xf] %vm1460, %v1413
      %1486 = vst.msk [vmem:[#allocation3 + $0x12c] sm:$0xf] %vm1460, %v1415
      %1487 = vst.msk [vmem:[#allocation3 + $0x138] sm:$0xf] %vm1460, %v1417
      %1488 = vst.msk [vmem:[#allocation3 + $0x144] sm:$0xf] %vm1460, %v1419
      %1489 = vst.msk [vmem:[#allocation3 + $0x150] sm:$0xf] %vm1460, %v1421
      %1490 = vst.msk [vmem:[#allocation3 + $0x15c] sm:$0xf] %vm1460, %v1423
      %1491 = vst.msk [vmem:[#allocation3 + $0x168] sm:$0xf] %vm1460, %v1425
      %1492 = vst.msk [vmem:[#allocation3 + $0x174] sm:$0xf] %vm1460, %v1427
      %v1493 = vld [vmem:[#allocation2] sm:$0xe]
      %v1494 = vld [vmem:[#allocation2 + $0x4] sm:$0xf]
      %v1495 = vld [vmem:[#allocation2 + $0x8] sm:$0xf]
      %v1496 = vld [vmem:[#allocation2 + $0xc] sm:$0xf]
      %v1497 = vld [vmem:[#allocation2 + $0x10] sm:$0xf]
      %v1498 = vld [vmem:[#allocation2 + $0x14] sm:$0xf]
      %v1499 = vld [vmem:[#allocation2 + $0x18] sm:$0xf]
      %v1500 = vld [vmem:[#allocation2 + $0x1c] sm:$0xf]
      %v1501 = vld [vmem:[#allocation2 + $0x20] sm:$0xf]
      %v1502 = vld [vmem:[#allocation2 + $0x24] sm:$0xf]
      %v1503 = vld [vmem:[#allocation2 + $0x28] sm:$0xf]
      %v1504 = vld [vmem:[#allocation2 + $0x2c] sm:$0xf]
      %v1505 = vld [vmem:[#allocation2 + $0x30] sm:$0xf]
      %v1506 = vld [vmem:[#allocation2 + $0x34] sm:$0xf]
      %v1507 = vld [vmem:[#allocation2 + $0x38] sm:$0xf]
      %v1508 = vld [vmem:[#allocation2 + $0x3c] sm:$0xf]
      %v1509 = vld [vmem:[#allocation2 + $0x40] sm:$0xf]
      %v1510 = vld [vmem:[#allocation2 + $0x44] sm:$0xf]
      %v1511 = vld [vmem:[#allocation2 + $0x48] sm:$0xf]
      %v1512 = vld [vmem:[#allocation2 + $0x4c] sm:$0xf]
      %v1513 = vld [vmem:[#allocation2 + $0x50] sm:$0xf]
      %v1514 = vld [vmem:[#allocation2 + $0x54] sm:$0xf]
      %v1515 = vld [vmem:[#allocation2 + $0x58] sm:$0xf]
      %v1516 = vld [vmem:[#allocation2 + $0x5c] sm:$0xf]
      %v1517 = vld [vmem:[#allocation2 + $0x60] sm:$0xf]
      %v1518 = vld [vmem:[#allocation2 + $0x64] sm:$0xf]
      %v1519 = vld [vmem:[#allocation2 + $0x68] sm:$0xf]
      %v1520 = vld [vmem:[#allocation2 + $0x6c] sm:$0xf]
      %v1521 = vld [vmem:[#allocation2 + $0x70] sm:$0xf]
      %v1522 = vld [vmem:[#allocation2 + $0x74] sm:$0xf]
      %v1523 = vld [vmem:[#allocation2 + $0x78] sm:$0xf]
      %v1524 = vld [vmem:[#allocation2 + $0x7c] sm:$0xf]
      %v1525 = vld [vmem:[#allocation2 + $0x80] sm:$0x1]
      %vm1559 = vcmask 1042432
      %vm1560 = vcmask 1046532
      %vm1561 = vmor %vm1559, %vm1560
      %v1562 = vrot.slane %v1493, 5
      %v1563 = vrot.slane %v1562, 4
      %v1564 = vrot.slane %v1494, 5
      %v1565 = vsel %vm1561, %v1563, %v1564
      %v1566 = vrot.slane %v1564, 4
      %v1567 = vrot.slane %v1495, 5
      %v1568 = vsel %vm1561, %v1566, %v1567
      %v1569 = vrot.slane %v1567, 4
      %v1570 = vrot.slane %v1496, 5
      %v1571 = vsel %vm1561, %v1569, %v1570
      %v1572 = vrot.slane %v1570, 4
      %v1573 = vrot.slane %v1497, 5
      %v1574 = vsel %vm1561, %v1572, %v1573
      %v1575 = vrot.slane %v1573, 4
      %v1576 = vrot.slane %v1498, 5
      %v1577 = vsel %vm1561, %v1575, %v1576
      %v1578 = vrot.slane %v1576, 4
      %v1579 = vrot.slane %v1499, 5
      %v1580 = vsel %vm1561, %v1578, %v1579
      %v1581 = vrot.slane %v1579, 4
      %v1582 = vrot.slane %v1500, 5
      %v1583 = vsel %vm1561, %v1581, %v1582
      %v1584 = vrot.slane %v1582, 4
      %v1585 = vrot.slane %v1501, 5
      %v1586 = vsel %vm1561, %v1584, %v1585
      %v1587 = vrot.slane %v1585, 4
      %v1588 = vrot.slane %v1502, 5
      %v1589 = vsel %vm1561, %v1587, %v1588
      %v1590 = vrot.slane %v1588, 4
      %v1591 = vrot.slane %v1503, 5
      %v1592 = vsel %vm1561, %v1590, %v1591
      %v1593 = vrot.slane %v1591, 4
      %v1594 = vrot.slane %v1504, 5
      %v1595 = vsel %vm1561, %v1593, %v1594
      %v1596 = vrot.slane %v1594, 4
      %v1597 = vrot.slane %v1505, 5
      %v1598 = vsel %vm1561, %v1596, %v1597
      %v1599 = vrot.slane %v1597, 4
      %v1600 = vrot.slane %v1506, 5
      %v1601 = vsel %vm1561, %v1599, %v1600
      %v1602 = vrot.slane %v1600, 4
      %v1603 = vrot.slane %v1507, 5
      %v1604 = vsel %vm1561, %v1602, %v1603
      %v1605 = vrot.slane %v1603, 4
      %v1606 = vrot.slane %v1508, 5
      %v1607 = vsel %vm1561, %v1605, %v1606
      %v1608 = vrot.slane %v1606, 4
      %v1609 = vrot.slane %v1509, 5
      %v1610 = vsel %vm1561, %v1608, %v1609
      %v1611 = vrot.slane %v1609, 4
      %v1612 = vrot.slane %v1510, 5
      %v1613 = vsel %vm1561, %v1611, %v1612
      %v1614 = vrot.slane %v1612, 4
      %v1615 = vrot.slane %v1511, 5
      %v1616 = vsel %vm1561, %v1614, %v1615
      %v1617 = vrot.slane %v1615, 4
      %v1618 = vrot.slane %v1512, 5
      %v1619 = vsel %vm1561, %v1617, %v1618
      %v1620 = vrot.slane %v1618, 4
      %v1621 = vrot.slane %v1513, 5
      %v1622 = vsel %vm1561, %v1620, %v1621
      %v1623 = vrot.slane %v1621, 4
      %v1624 = vrot.slane %v1514, 5
      %v1625 = vsel %vm1561, %v1623, %v1624
      %v1626 = vrot.slane %v1624, 4
      %v1627 = vrot.slane %v1515, 5
      %v1628 = vsel %vm1561, %v1626, %v1627
      %v1629 = vrot.slane %v1627, 4
      %v1630 = vrot.slane %v1516, 5
      %v1631 = vsel %vm1561, %v1629, %v1630
      %v1632 = vrot.slane %v1630, 4
      %v1633 = vrot.slane %v1517, 5
      %v1634 = vsel %vm1561, %v1632, %v1633
      %v1635 = vrot.slane %v1633, 4
      %v1636 = vrot.slane %v1518, 5
      %v1637 = vsel %vm1561, %v1635, %v1636
      %v1638 = vrot.slane %v1636, 4
      %v1639 = vrot.slane %v1519, 5
      %v1640 = vsel %vm1561, %v1638, %v1639
      %v1641 = vrot.slane %v1639, 4
      %v1642 = vrot.slane %v1520, 5
      %v1643 = vsel %vm1561, %v1641, %v1642
      %v1644 = vrot.slane %v1642, 4
      %v1645 = vrot.slane %v1521, 5
      %v1646 = vsel %vm1561, %v1644, %v1645
      %v1647 = vrot.slane %v1645, 4
      %v1648 = vrot.slane %v1522, 5
      %v1649 = vsel %vm1561, %v1647, %v1648
      %v1650 = vrot.slane %v1648, 4
      %v1651 = vrot.slane %v1523, 5
      %v1652 = vsel %vm1561, %v1650, %v1651
      %v1653 = vrot.slane %v1651, 4
      %v1654 = vrot.slane %v1524, 5
      %v1655 = vsel %vm1561, %v1653, %v1654
      %v1656 = vrot.slane %v1654, 4
      %v1657 = vrot.slane %v1525, 5
      %v1658 = vsel %vm1561, %v1656, %v1657
      %1659 = vrot.lane.b32.xlu0 %v1565, 64
      %v1660 = vpop.permute.xlu0 %1659
      %1661 = vrot.lane.b32.xlu0 %v1568, 64
      %v1662 = vpop.permute.xlu0 %1661
      %1663 = vrot.lane.b32.xlu0 %v1571, 64
      %v1664 = vpop.permute.xlu0 %1663
      %1665 = vrot.lane.b32.xlu0 %v1574, 64
      %v1666 = vpop.permute.xlu0 %1665
      %1667 = vrot.lane.b32.xlu0 %v1577, 64
      %v1668 = vpop.permute.xlu0 %1667
      %1669 = vrot.lane.b32.xlu0 %v1580, 64
      %v1670 = vpop.permute.xlu0 %1669
      %1671 = vrot.lane.b32.xlu0 %v1583, 64
      %v1672 = vpop.permute.xlu0 %1671
      %1673 = vrot.lane.b32.xlu0 %v1586, 64
      %v1674 = vpop.permute.xlu0 %1673
      %1675 = vrot.lane.b32.xlu0 %v1589, 64
      %v1676 = vpop.permute.xlu0 %1675
      %1677 = vrot.lane.b32.xlu0 %v1592, 64
      %v1678 = vpop.permute.xlu0 %1677
      %1679 = vrot.lane.b32.xlu0 %v1595, 64
      %v1680 = vpop.permute.xlu0 %1679
      %1681 = vrot.lane.b32.xlu0 %v1598, 64
      %v1682 = vpop.permute.xlu0 %1681
      %1683 = vrot.lane.b32.xlu0 %v1601, 64
      %v1684 = vpop.permute.xlu0 %1683
      %1685 = vrot.lane.b32.xlu0 %v1604, 64
      %v1686 = vpop.permute.xlu0 %1685
      %1687 = vrot.lane.b32.xlu0 %v1607, 64
      %v1688 = vpop.permute.xlu0 %1687
      %1689 = vrot.lane.b32.xlu0 %v1610, 64
      %v1690 = vpop.permute.xlu0 %1689
      %1691 = vrot.lane.b32.xlu0 %v1613, 64
      %v1692 = vpop.permute.xlu0 %1691
      %1693 = vrot.lane.b32.xlu0 %v1616, 64
      %v1694 = vpop.permute.xlu0 %1693
      %1695 = vrot.lane.b32.xlu0 %v1619, 64
      %v1696 = vpop.permute.xlu0 %1695
      %1697 = vrot.lane.b32.xlu0 %v1622, 64
      %v1698 = vpop.permute.xlu0 %1697
      %1699 = vrot.lane.b32.xlu0 %v1625, 64
      %v1700 = vpop.permute.xlu0 %1699
      %1701 = vrot.lane.b32.xlu0 %v1628, 64
      %v1702 = vpop.permute.xlu0 %1701
      %1703 = vrot.lane.b32.xlu0 %v1631, 64
      %v1704 = vpop.permute.xlu0 %1703
      %1705 = vrot.lane.b32.xlu0 %v1634, 64
      %v1706 = vpop.permute.xlu0 %1705
      %1707 = vrot.lane.b32.xlu0 %v1637, 64
      %v1708 = vpop.permute.xlu0 %1707
      %1709 = vrot.lane.b32.xlu0 %v1640, 64
      %v1710 = vpop.permute.xlu0 %1709
      %1711 = vrot.lane.b32.xlu0 %v1643, 64
      %v1712 = vpop.permute.xlu0 %1711
      %1713 = vrot.lane.b32.xlu0 %v1646, 64
      %v1714 = vpop.permute.xlu0 %1713
      %1715 = vrot.lane.b32.xlu0 %v1649, 64
      %v1716 = vpop.permute.xlu0 %1715
      %1717 = vrot.lane.b32.xlu0 %v1652, 64
      %v1718 = vpop.permute.xlu0 %1717
      %1719 = vrot.lane.b32.xlu0 %v1655, 64
      %v1720 = vpop.permute.xlu0 %1719
      %1721 = vrot.lane.b32.xlu0 %v1658, 64
      %v1722 = vpop.permute.xlu0 %1721
      %vm1755 = vcmask 781824
      %1756 = vst.msk [vmem:[#allocation3] sm:$0xf] %vm1755, %v1660
      %1757 = vst.msk [vmem:[#allocation3 + $0xc] sm:$0xf] %vm1755, %v1662
      %1758 = vst.msk [vmem:[#allocation3 + $0x18] sm:$0xf] %vm1755, %v1664
      %1759 = vst.msk [vmem:[#allocation3 + $0x24] sm:$0xf] %vm1755, %v1666
      %1760 = vst.msk [vmem:[#allocation3 + $0x30] sm:$0xf] %vm1755, %v1668
      %1761 = vst.msk [vmem:[#allocation3 + $0x3c] sm:$0xf] %vm1755, %v1670
      %1762 = vst.msk [vmem:[#allocation3 + $0x48] sm:$0xf] %vm1755, %v1672
      %1763 = vst.msk [vmem:[#allocation3 + $0x54] sm:$0xf] %vm1755, %v1674
      %1764 = vst.msk [vmem:[#allocation3 + $0x60] sm:$0xf] %vm1755, %v1676
      %1765 = vst.msk [vmem:[#allocation3 + $0x6c] sm:$0xf] %vm1755, %v1678
      %1766 = vst.msk [vmem:[#allocation3 + $0x78] sm:$0xf] %vm1755, %v1680
      %1767 = vst.msk [vmem:[#allocation3 + $0x84] sm:$0xf] %vm1755, %v1682
      %1768 = vst.msk [vmem:[#allocation3 + $0x90] sm:$0xf] %vm1755, %v1684
      %1769 = vst.msk [vmem:[#allocation3 + $0x9c] sm:$0xf] %vm1755, %v1686
      %1770 = vst.msk [vmem:[#allocation3 + $0xa8] sm:$0xf] %vm1755, %v1688
      %1771 = vst.msk [vmem:[#allocation3 + $0xb4] sm:$0xf] %vm1755, %v1690
      %1772 = vst.msk [vmem:[#allocation3 + $0xc0] sm:$0xf] %vm1755, %v1692
      %1773 = vst.msk [vmem:[#allocation3 + $0xcc] sm:$0xf] %vm1755, %v1694
      %1774 = vst.msk [vmem:[#allocation3 + $0xd8] sm:$0xf] %vm1755, %v1696
      %1775 = vst.msk [vmem:[#allocation3 + $0xe4] sm:$0xf] %vm1755, %v1698
      %1776 = vst.msk [vmem:[#allocation3 + $0xf0] sm:$0xf] %vm1755, %v1700
      %1777 = vst.msk [vmem:[#allocation3 + $0xfc] sm:$0xf] %vm1755, %v1702
      %1778 = vst.msk [vmem:[#allocation3 + $0x108] sm:$0xf] %vm1755, %v1704
      %1779 = vst.msk [vmem:[#allocation3 + $0x114] sm:$0xf] %vm1755, %v1706
      %1780 = vst.msk [vmem:[#allocation3 + $0x120] sm:$0xf] %vm1755, %v1708
      %1781 = vst.msk [vmem:[#allocation3 + $0x12c] sm:$0xf] %vm1755, %v1710
      %1782 = vst.msk [vmem:[#allocation3 + $0x138] sm:$0xf] %vm1755, %v1712
      %1783 = vst.msk [vmem:[#allocation3 + $0x144] sm:$0xf] %vm1755, %v1714
      %1784 = vst.msk [vmem:[#allocation3 + $0x150] sm:$0xf] %vm1755, %v1716
      %1785 = vst.msk [vmem:[#allocation3 + $0x15c] sm:$0xf] %vm1755, %v1718
      %1786 = vst.msk [vmem:[#allocation3 + $0x168] sm:$0xf] %vm1755, %v1720
      %1787 = vst.msk [vmem:[#allocation3 + $0x174] sm:$0xf] %vm1755, %v1722
      %v1788 = vld [vmem:[#allocation2 + $0x8] sm:$0xf]
      %v1789 = vld [vmem:[#allocation2 + $0xc] sm:$0xf]
      %v1790 = vld [vmem:[#allocation2 + $0x10] sm:$0xf]
      %v1791 = vld [vmem:[#allocation2 + $0x14] sm:$0xf]
      %v1792 = vld [vmem:[#allocation2 + $0x18] sm:$0xf]
      %v1793 = vld [vmem:[#allocation2 + $0x1c] sm:$0xf]
      %v1794 = vld [vmem:[#allocation2 + $0x20] sm:$0xf]
      %v1795 = vld [vmem:[#allocation2 + $0x24] sm:$0xf]
      %v1796 = vld [vmem:[#allocation2 + $0x28] sm:$0xf]
      %v1797 = vld [vmem:[#allocation2 + $0x2c] sm:$0xf]
      %v1798 = vld [vmem:[#allocation2 + $0x30] sm:$0xf]
      %v1799 = vld [vmem:[#allocation2 + $0x34] sm:$0xf]
      %v1800 = vld [vmem:[#allocation2 + $0x38] sm:$0xf]
      %v1801 = vld [vmem:[#allocation2 + $0x3c] sm:$0xf]
      %v1802 = vld [vmem:[#allocation2 + $0x40] sm:$0xf]
      %v1803 = vld [vmem:[#allocation2 + $0x44] sm:$0xf]
      %v1804 = vld [vmem:[#allocation2 + $0x48] sm:$0xf]
      %v1805 = vld [vmem:[#allocation2 + $0x4c] sm:$0xf]
      %v1806 = vld [vmem:[#allocation2 + $0x50] sm:$0xf]
      %v1807 = vld [vmem:[#allocation2 + $0x54] sm:$0xf]
      %v1808 = vld [vmem:[#allocation2 + $0x58] sm:$0xf]
      %v1809 = vld [vmem:[#allocation2 + $0x5c] sm:$0xf]
      %v1810 = vld [vmem:[#allocation2 + $0x60] sm:$0xf]
      %v1811 = vld [vmem:[#allocation2 + $0x64] sm:$0xf]
      %v1812 = vld [vmem:[#allocation2 + $0x68] sm:$0xf]
      %v1813 = vld [vmem:[#allocation2 + $0x6c] sm:$0xf]
      %v1814 = vld [vmem:[#allocation2 + $0x70] sm:$0xf]
      %v1815 = vld [vmem:[#allocation2 + $0x74] sm:$0xf]
      %v1816 = vld [vmem:[#allocation2 + $0x78] sm:$0xf]
      %v1817 = vld [vmem:[#allocation2 + $0x7c] sm:$0xf]
      %v1818 = vld [vmem:[#allocation2 + $0x80] sm:$0xf]
      %v1819 = vld [vmem:[#allocation2 + $0x84] sm:$0xf]
      %1852 = vrot.lane.b32.xlu0 %v1788, 96
      %v1853 = vpop.permute.xlu0 %1852
      %1854 = vrot.lane.b32.xlu0 %v1789, 96
      %v1855 = vpop.permute.xlu0 %1854
      %1856 = vrot.lane.b32.xlu0 %v1790, 96
      %v1857 = vpop.permute.xlu0 %1856
      %1858 = vrot.lane.b32.xlu0 %v1791, 96
      %v1859 = vpop.permute.xlu0 %1858
      %1860 = vrot.lane.b32.xlu0 %v1792, 96
      %v1861 = vpop.permute.xlu0 %1860
      %1862 = vrot.lane.b32.xlu0 %v1793, 96
      %v1863 = vpop.permute.xlu0 %1862
      %1864 = vrot.lane.b32.xlu0 %v1794, 96
      %v1865 = vpop.permute.xlu0 %1864
      %1866 = vrot.lane.b32.xlu0 %v1795, 96
      %v1867 = vpop.permute.xlu0 %1866
      %1868 = vrot.lane.b32.xlu0 %v1796, 96
      %v1869 = vpop.permute.xlu0 %1868
      %1870 = vrot.lane.b32.xlu0 %v1797, 96
      %v1871 = vpop.permute.xlu0 %1870
      %1872 = vrot.lane.b32.xlu0 %v1798, 96
      %v1873 = vpop.permute.xlu0 %1872
      %1874 = vrot.lane.b32.xlu0 %v1799, 96
      %v1875 = vpop.permute.xlu0 %1874
      %1876 = vrot.lane.b32.xlu0 %v1800, 96
      %v1877 = vpop.permute.xlu0 %1876
      %1878 = vrot.lane.b32.xlu0 %v1801, 96
      %v1879 = vpop.permute.xlu0 %1878
      %1880 = vrot.lane.b32.xlu0 %v1802, 96
      %v1881 = vpop.permute.xlu0 %1880
      %1882 = vrot.lane.b32.xlu0 %v1803, 96
      %v1883 = vpop.permute.xlu0 %1882
      %1884 = vrot.lane.b32.xlu0 %v1804, 96
      %v1885 = vpop.permute.xlu0 %1884
      %1886 = vrot.lane.b32.xlu0 %v1805, 96
      %v1887 = vpop.permute.xlu0 %1886
      %1888 = vrot.lane.b32.xlu0 %v1806, 96
      %v1889 = vpop.permute.xlu0 %1888
      %1890 = vrot.lane.b32.xlu0 %v1807, 96
      %v1891 = vpop.permute.xlu0 %1890
      %1892 = vrot.lane.b32.xlu0 %v1808, 96
      %v1893 = vpop.permute.xlu0 %1892
      %1894 = vrot.lane.b32.xlu0 %v1809, 96
      %v1895 = vpop.permute.xlu0 %1894
      %1896 = vrot.lane.b32.xlu0 %v1810, 96
      %v1897 = vpop.permute.xlu0 %1896
      %1898 = vrot.lane.b32.xlu0 %v1811, 96
      %v1899 = vpop.permute.xlu0 %1898
      %1900 = vrot.lane.b32.xlu0 %v1812, 96
      %v1901 = vpop.permute.xlu0 %1900
      %1902 = vrot.lane.b32.xlu0 %v1813, 96
      %v1903 = vpop.permute.xlu0 %1902
      %1904 = vrot.lane.b32.xlu0 %v1814, 96
      %v1905 = vpop.permute.xlu0 %1904
      %1906 = vrot.lane.b32.xlu0 %v1815, 96
      %v1907 = vpop.permute.xlu0 %1906
      %1908 = vrot.lane.b32.xlu0 %v1816, 96
      %v1909 = vpop.permute.xlu0 %1908
      %1910 = vrot.lane.b32.xlu0 %v1817, 96
      %v1911 = vpop.permute.xlu0 %1910
      %1912 = vrot.lane.b32.xlu0 %v1818, 96
      %v1913 = vpop.permute.xlu0 %1912
      %1914 = vrot.lane.b32.xlu0 %v1819, 96
      %v1915 = vpop.permute.xlu0 %1914
      %vm1948 = vcmask 1044224
      %1949 = vst.msk [vmem:[#allocation3] sm:$0xf] %vm1948, %v1853
      %1950 = vst.msk [vmem:[#allocation3 + $0xc] sm:$0xf] %vm1948, %v1855
      %1951 = vst.msk [vmem:[#allocation3 + $0x18] sm:$0xf] %vm1948, %v1857
      %1952 = vst.msk [vmem:[#allocation3 + $0x24] sm:$0xf] %vm1948, %v1859
      %1953 = vst.msk [vmem:[#allocation3 + $0x30] sm:$0xf] %vm1948, %v1861
      %1954 = vst.msk [vmem:[#allocation3 + $0x3c] sm:$0xf] %vm1948, %v1863
      %1955 = vst.msk [vmem:[#allocation3 + $0x48] sm:$0xf] %vm1948, %v1865
      %1956 = vst.msk [vmem:[#allocation3 + $0x54] sm:$0xf] %vm1948, %v1867
      %1957 = vst.msk [vmem:[#allocation3 + $0x60] sm:$0xf] %vm1948, %v1869
      %1958 = vst.msk [vmem:[#allocation3 + $0x6c] sm:$0xf] %vm1948, %v1871
      %1959 = vst.msk [vmem:[#allocation3 + $0x78] sm:$0xf] %vm1948, %v1873
      %1960 = vst.msk [vmem:[#allocation3 + $0x84] sm:$0xf] %vm1948, %v1875
      %1961 = vst.msk [vmem:[#allocation3 + $0x90] sm:$0xf] %vm1948, %v1877
      %1962 = vst.msk [vmem:[#allocation3 + $0x9c] sm:$0xf] %vm1948, %v1879
      %1963 = vst.msk [vmem:[#allocation3 + $0xa8] sm:$0xf] %vm1948, %v1881
      %1964 = vst.msk [vmem:[#allocation3 + $0xb4] sm:$0xf] %vm1948, %v1883
      %1965 = vst.msk [vmem:[#allocation3 + $0xc0] sm:$0xf] %vm1948, %v1885
      %1966 = vst.msk [vmem:[#allocation3 + $0xcc] sm:$0xf] %vm1948, %v1887
      %1967 = vst.msk [vmem:[#allocation3 + $0xd8] sm:$0xf] %vm1948, %v1889
      %1968 = vst.msk [vmem:[#allocation3 + $0xe4] sm:$0xf] %vm1948, %v1891
      %1969 = vst.msk [vmem:[#allocation3 + $0xf0] sm:$0xf] %vm1948, %v1893
      %1970 = vst.msk [vmem:[#allocation3 + $0xfc] sm:$0xf] %vm1948, %v1895
      %1971 = vst.msk [vmem:[#allocation3 + $0x108] sm:$0xf] %vm1948, %v1897
      %1972 = vst.msk [vmem:[#allocation3 + $0x114] sm:$0xf] %vm1948, %v1899
      %1973 = vst.msk [vmem:[#allocation3 + $0x120] sm:$0xf] %vm1948, %v1901
      %1974 = vst.msk [vmem:[#allocation3 + $0x12c] sm:$0xf] %vm1948, %v1903
      %1975 = vst.msk [vmem:[#allocation3 + $0x138] sm:$0xf] %vm1948, %v1905
      %1976 = vst.msk [vmem:[#allocation3 + $0x144] sm:$0xf] %vm1948, %v1907
      %1977 = vst.msk [vmem:[#allocation3 + $0x150] sm:$0xf] %vm1948, %v1909
      %1978 = vst.msk [vmem:[#allocation3 + $0x15c] sm:$0xf] %vm1948, %v1911
      %1979 = vst.msk [vmem:[#allocation3 + $0x168] sm:$0xf] %vm1948, %v1913
      %1980 = vst.msk [vmem:[#allocation3 + $0x174] sm:$0xf] %vm1948, %v1915
      %v1981 = vld [vmem:[#allocation2 + $0x8] sm:$0xf]
      %v1982 = vld [vmem:[#allocation2 + $0xc] sm:$0xf]
      %v1983 = vld [vmem:[#allocation2 + $0x10] sm:$0xf]
      %v1984 = vld [vmem:[#allocation2 + $0x14] sm:$0xf]
      %v1985 = vld [vmem:[#allocation2 + $0x18] sm:$0xf]
      %v1986 = vld [vmem:[#allocation2 + $0x1c] sm:$0xf]
      %v1987 = vld [vmem:[#allocation2 + $0x20] sm:$0xf]
      %v1988 = vld [vmem:[#allocation2 + $0x24] sm:$0xf]
      %v1989 = vld [vmem:[#allocation2 + $0x28] sm:$0xf]
      %v1990 = vld [vmem:[#allocation2 + $0x2c] sm:$0xf]
      %v1991 = vld [vmem:[#allocation2 + $0x30] sm:$0xf]
      %v1992 = vld [vmem:[#allocation2 + $0x34] sm:$0xf]
      %v1993 = vld [vmem:[#allocation2 + $0x38] sm:$0xf]
      %v1994 = vld [vmem:[#allocation2 + $0x3c] sm:$0xf]
      %v1995 = vld [vmem:[#allocation2 + $0x40] sm:$0xf]
      %v1996 = vld [vmem:[#allocation2 + $0x44] sm:$0xf]
      %v1997 = vld [vmem:[#allocation2 + $0x48] sm:$0xf]
      %v1998 = vld [vmem:[#allocation2 + $0x4c] sm:$0xf]
      %v1999 = vld [vmem:[#allocation2 + $0x50] sm:$0xf]
      %v2000 = vld [vmem:[#allocation2 + $0x54] sm:$0xf]
      %v2001 = vld [vmem:[#allocation2 + $0x58] sm:$0xf]
      %v2002 = vld [vmem:[#allocation2 + $0x5c] sm:$0xf]
      %v2003 = vld [vmem:[#allocation2 + $0x60] sm:$0xf]
      %v2004 = vld [vmem:[#allocation2 + $0x64] sm:$0xf]
      %v2005 = vld [vmem:[#allocation2 + $0x68] sm:$0xf]
      %v2006 = vld [vmem:[#allocation2 + $0x6c] sm:$0xf]
      %v2007 = vld [vmem:[#allocation2 + $0x70] sm:$0xf]
      %v2008 = vld [vmem:[#allocation2 + $0x74] sm:$0xf]
      %v2009 = vld [vmem:[#allocation2 + $0x78] sm:$0xf]
      %v2010 = vld [vmem:[#allocation2 + $0x7c] sm:$0xf]
      %v2011 = vld [vmem:[#allocation2 + $0x80] sm:$0xf]
      %v2012 = vld [vmem:[#allocation2 + $0x84] sm:$0xf]
      %v2013 = vld [vmem:[#allocation2 + $0x88] sm:$0x1]
      %v2015 = vshrl.u32 %v1981, 16
      %v2017 = vrot.slane %v2015, 4
      %v2018 = vshll.u32 %v1981, 16
      %v2020 = vrot.slane %v2018, 5
      %v2021 = vor.u32 %v2017, %v2020
      %v2022 = vrot.slane %v2021, 4
      %v2024 = vshll.u32 %v1982, 16
      %v2026 = vrot.slane %v2024, 5
      %v2027 = vsel %vm1039, %v2022, %v2026
      %v2028 = vshrl.u32 %v1982, 16
      %v2030 = vrot.slane %v2028, 4
      %v2031 = vor.u32 %v2030, %v2026
      %v2032 = vrot.slane %v2031, 4
      %v2034 = vshll.u32 %v1983, 16
      %v2036 = vrot.slane %v2034, 5
      %v2037 = vsel %vm1039, %v2032, %v2036
      %v2038 = vshrl.u32 %v1983, 16
      %v2040 = vrot.slane %v2038, 4
      %v2041 = vor.u32 %v2040, %v2036
      %v2042 = vrot.slane %v2041, 4
      %v2044 = vshll.u32 %v1984, 16
      %v2046 = vrot.slane %v2044, 5
      %v2047 = vsel %vm1039, %v2042, %v2046
      %v2048 = vshrl.u32 %v1984, 16
      %v2050 = vrot.slane %v2048, 4
      %v2051 = vor.u32 %v2050, %v2046
      %v2052 = vrot.slane %v2051, 4
      %v2054 = vshll.u32 %v1985, 16
      %v2056 = vrot.slane %v2054, 5
      %v2057 = vsel %vm1039, %v2052, %v2056
      %v2058 = vshrl.u32 %v1985, 16
      %v2060 = vrot.slane %v2058, 4
      %v2061 = vor.u32 %v2060, %v2056
      %v2062 = vrot.slane %v2061, 4
      %v2064 = vshll.u32 %v1986, 16
      %v2066 = vrot.slane %v2064, 5
      %v2067 = vsel %vm1039, %v2062, %v2066
      %v2068 = vshrl.u32 %v1986, 16
      %v2070 = vrot.slane %v2068, 4
      %v2071 = vor.u32 %v2070, %v2066
      %v2072 = vrot.slane %v2071, 4
      %v2074 = vshll.u32 %v1987, 16
      %v2076 = vrot.slane %v2074, 5
      %v2077 = vsel %vm1039, %v2072, %v2076
      %v2078 = vshrl.u32 %v1987, 16
      %v2080 = vrot.slane %v2078, 4
      %v2081 = vor.u32 %v2080, %v2076
      %v2082 = vrot.slane %v2081, 4
      %v2084 = vshll.u32 %v1988, 16
      %v2086 = vrot.slane %v2084, 5
      %v2087 = vsel %vm1039, %v2082, %v2086
      %v2088 = vshrl.u32 %v1988, 16
      %v2090 = vrot.slane %v2088, 4
      %v2091 = vor.u32 %v2090, %v2086
      %v2092 = vrot.slane %v2091, 4
      %v2094 = vshll.u32 %v1989, 16
      %v2096 = vrot.slane %v2094, 5
      %v2097 = vsel %vm1039, %v2092, %v2096
      %v2098 = vshrl.u32 %v1989, 16
      %v2100 = vrot.slane %v2098, 4
      %v2101 = vor.u32 %v2100, %v2096
      %v2102 = vrot.slane %v2101, 4
      %v2104 = vshll.u32 %v1990, 16
      %v2106 = vrot.slane %v2104, 5
      %v2107 = vsel %vm1039, %v2102, %v2106
      %v2108 = vshrl.u32 %v1990, 16
      %v2110 = vrot.slane %v2108, 4
      %v2111 = vor.u32 %v2110, %v2106
      %v2112 = vrot.slane %v2111, 4
      %v2114 = vshll.u32 %v1991, 16
      %v2116 = vrot.slane %v2114, 5
      %v2117 = vsel %vm1039, %v2112, %v2116
      %v2118 = vshrl.u32 %v1991, 16
      %v2120 = vrot.slane %v2118, 4
      %v2121 = vor.u32 %v2120, %v2116
      %v2122 = vrot.slane %v2121, 4
      %v2124 = vshll.u32 %v1992, 16
      %v2126 = vrot.slane %v2124, 5
      %v2127 = vsel %vm1039, %v2122, %v2126
      %v2128 = vshrl.u32 %v1992, 16
      %v2130 = vrot.slane %v2128, 4
      %v2131 = vor.u32 %v2130, %v2126
      %v2132 = vrot.slane %v2131, 4
      %v2134 = vshll.u32 %v1993, 16
      %v2136 = vrot.slane %v2134, 5
      %v2137 = vsel %vm1039, %v2132, %v2136
      %v2138 = vshrl.u32 %v1993, 16
      %v2140 = vrot.slane %v2138, 4
      %v2141 = vor.u32 %v2140, %v2136
      %v2142 = vrot.slane %v2141, 4
      %v2144 = vshll.u32 %v1994, 16
      %v2146 = vrot.slane %v2144, 5
      %v2147 = vsel %vm1039, %v2142, %v2146
      %v2148 = vshrl.u32 %v1994, 16
      %v2150 = vrot.slane %v2148, 4
      %v2151 = vor.u32 %v2150, %v2146
      %v2152 = vrot.slane %v2151, 4
      %v2154 = vshll.u32 %v1995, 16
      %v2156 = vrot.slane %v2154, 5
      %v2157 = vsel %vm1039, %v2152, %v2156
      %v2158 = vshrl.u32 %v1995, 16
      %v2160 = vrot.slane %v2158, 4
      %v2161 = vor.u32 %v2160, %v2156
      %v2162 = vrot.slane %v2161, 4
      %v2164 = vshll.u32 %v1996, 16
      %v2166 = vrot.slane %v2164, 5
      %v2167 = vsel %vm1039, %v2162, %v2166
      %v2168 = vshrl.u32 %v1996, 16
      %v2170 = vrot.slane %v2168, 4
      %v2171 = vor.u32 %v2170, %v2166
      %v2172 = vrot.slane %v2171, 4
      %v2174 = vshll.u32 %v1997, 16
      %v2176 = vrot.slane %v2174, 5
      %v2177 = vsel %vm1039, %v2172, %v2176
      %v2178 = vshrl.u32 %v1997, 16
      %v2180 = vrot.slane %v2178, 4
      %v2181 = vor.u32 %v2180, %v2176
      %v2182 = vrot.slane %v2181, 4
      %v2184 = vshll.u32 %v1998, 16
      %v2186 = vrot.slane %v2184, 5
      %v2187 = vsel %vm1039, %v2182, %v2186
      %v2188 = vshrl.u32 %v1998, 16
      %v2190 = vrot.slane %v2188, 4
      %v2191 = vor.u32 %v2190, %v2186
      %v2192 = vrot.slane %v2191, 4
      %v2194 = vshll.u32 %v1999, 16
      %v2196 = vrot.slane %v2194, 5
      %v2197 = vsel %vm1039, %v2192, %v2196
      %v2198 = vshrl.u32 %v1999, 16
      %v2200 = vrot.slane %v2198, 4
      %v2201 = vor.u32 %v2200, %v2196
      %v2202 = vrot.slane %v2201, 4
      %v2204 = vshll.u32 %v2000, 16
      %v2206 = vrot.slane %v2204, 5
      %v2207 = vsel %vm1039, %v2202, %v2206
      %v2208 = vshrl.u32 %v2000, 16
      %v2210 = vrot.slane %v2208, 4
      %v2211 = vor.u32 %v2210, %v2206
      %v2212 = vrot.slane %v2211, 4
      %v2214 = vshll.u32 %v2001, 16
      %v2216 = vrot.slane %v2214, 5
      %v2217 = vsel %vm1039, %v2212, %v2216
      %v2218 = vshrl.u32 %v2001, 16
      %v2220 = vrot.slane %v2218, 4
      %v2221 = vor.u32 %v2220, %v2216
      %v2222 = vrot.slane %v2221, 4
      %v2224 = vshll.u32 %v2002, 16
      %v2226 = vrot.slane %v2224, 5
      %v2227 = vsel %vm1039, %v2222, %v2226
      %v2228 = vshrl.u32 %v2002, 16
      %v2230 = vrot.slane %v2228, 4
      %v2231 = vor.u32 %v2230, %v2226
      %v2232 = vrot.slane %v2231, 4
      %v2234 = vshll.u32 %v2003, 16
      %v2236 = vrot.slane %v2234, 5
      %v2237 = vsel %vm1039, %v2232, %v2236
      %v2238 = vshrl.u32 %v2003, 16
      %v2240 = vrot.slane %v2238, 4
      %v2241 = vor.u32 %v2240, %v2236
      %v2242 = vrot.slane %v2241, 4
      %v2244 = vshll.u32 %v2004, 16
      %v2246 = vrot.slane %v2244, 5
      %v2247 = vsel %vm1039, %v2242, %v2246
      %v2248 = vshrl.u32 %v2004, 16
      %v2250 = vrot.slane %v2248, 4
      %v2251 = vor.u32 %v2250, %v2246
      %v2252 = vrot.slane %v2251, 4
      %v2254 = vshll.u32 %v2005, 16
      %v2256 = vrot.slane %v2254, 5
      %v2257 = vsel %vm1039, %v2252, %v2256
      %v2258 = vshrl.u32 %v2005, 16
      %v2260 = vrot.slane %v2258, 4
      %v2261 = vor.u32 %v2260, %v2256
      %v2262 = vrot.slane %v2261, 4
      %v2264 = vshll.u32 %v2006, 16
      %v2266 = vrot.slane %v2264, 5
      %v2267 = vsel %vm1039, %v2262, %v2266
      %v2268 = vshrl.u32 %v2006, 16
      %v2270 = vrot.slane %v2268, 4
      %v2271 = vor.u32 %v2270, %v2266
      %v2272 = vrot.slane %v2271, 4
      %v2274 = vshll.u32 %v2007, 16
      %v2276 = vrot.slane %v2274, 5
      %v2277 = vsel %vm1039, %v2272, %v2276
      %v2278 = vshrl.u32 %v2007, 16
      %v2280 = vrot.slane %v2278, 4
      %v2281 = vor.u32 %v2280, %v2276
      %v2282 = vrot.slane %v2281, 4
      %v2284 = vshll.u32 %v2008, 16
      %v2286 = vrot.slane %v2284, 5
      %v2287 = vsel %vm1039, %v2282, %v2286
      %v2288 = vshrl.u32 %v2008, 16
      %v2290 = vrot.slane %v2288, 4
      %v2291 = vor.u32 %v2290, %v2286
      %v2292 = vrot.slane %v2291, 4
      %v2294 = vshll.u32 %v2009, 16
      %v2296 = vrot.slane %v2294, 5
      %v2297 = vsel %vm1039, %v2292, %v2296
      %v2298 = vshrl.u32 %v2009, 16
      %v2300 = vrot.slane %v2298, 4
      %v2301 = vor.u32 %v2300, %v2296
      %v2302 = vrot.slane %v2301, 4
      %v2304 = vshll.u32 %v2010, 16
      %v2306 = vrot.slane %v2304, 5
      %v2307 = vsel %vm1039, %v2302, %v2306
      %v2308 = vshrl.u32 %v2010, 16
      %v2310 = vrot.slane %v2308, 4
      %v2311 = vor.u32 %v2310, %v2306
      %v2312 = vrot.slane %v2311, 4
      %v2314 = vshll.u32 %v2011, 16
      %v2316 = vrot.slane %v2314, 5
      %v2317 = vsel %vm1039, %v2312, %v2316
      %v2318 = vshrl.u32 %v2011, 16
      %v2320 = vrot.slane %v2318, 4
      %v2321 = vor.u32 %v2320, %v2316
      %v2322 = vrot.slane %v2321, 4
      %v2324 = vshll.u32 %v2012, 16
      %v2326 = vrot.slane %v2324, 5
      %v2327 = vsel %vm1039, %v2322, %v2326
      %v2328 = vshrl.u32 %v2012, 16
      %v2330 = vrot.slane %v2328, 4
      %v2331 = vor.u32 %v2330, %v2326
      %v2332 = vrot.slane %v2331, 4
      %v2334 = vshll.u32 %v2013, 16
      %v2336 = vrot.slane %v2334, 5
      %v2337 = vsel %vm1039, %v2332, %v2336
      %2370 = vst.msk [vmem:[#allocation3 + $0x4] sm:$0xf] %vm907, %v2027
      %2371 = vst.msk [vmem:[#allocation3 + $0x10] sm:$0xf] %vm907, %v2037
      %2372 = vst.msk [vmem:[#allocation3 + $0x1c] sm:$0xf] %vm907, %v2047
      %2373 = vst.msk [vmem:[#allocation3 + $0x28] sm:$0xf] %vm907, %v2057
      %2374 = vst.msk [vmem:[#allocation3 + $0x34] sm:$0xf] %vm907, %v2067
      %2375 = vst.msk [vmem:[#allocation3 + $0x40] sm:$0xf] %vm907, %v2077
      %2376 = vst.msk [vmem:[#allocation3 + $0x4c] sm:$0xf] %vm907, %v2087
      %2377 = vst.msk [vmem:[#allocation3 + $0x58] sm:$0xf] %vm907, %v2097
      %2378 = vst.msk [vmem:[#allocation3 + $0x64] sm:$0xf] %vm907, %v2107
      %2379 = vst.msk [vmem:[#allocation3 + $0x70] sm:$0xf] %vm907, %v2117
      %2380 = vst.msk [vmem:[#allocation3 + $0x7c] sm:$0xf] %vm907, %v2127
      %2381 = vst.msk [vmem:[#allocation3 + $0x88] sm:$0xf] %vm907, %v2137
      %2382 = vst.msk [vmem:[#allocation3 + $0x94] sm:$0xf] %vm907, %v2147
      %2383 = vst.msk [vmem:[#allocation3 + $0xa0] sm:$0xf] %vm907, %v2157
      %2384 = vst.msk [vmem:[#allocation3 + $0xac] sm:$0xf] %vm907, %v2167
      %2385 = vst.msk [vmem:[#allocation3 + $0xb8] sm:$0xf] %vm907, %v2177
      %2386 = vst.msk [vmem:[#allocation3 + $0xc4] sm:$0xf] %vm907, %v2187
      %2387 = vst.msk [vmem:[#allocation3 + $0xd0] sm:$0xf] %vm907, %v2197
      %2388 = vst.msk [vmem:[#allocation3 + $0xdc] sm:$0xf] %vm907, %v2207
      %2389 = vst.msk [vmem:[#allocation3 + $0xe8] sm:$0xf] %vm907, %v2217
      %2390 = vst.msk [vmem:[#allocation3 + $0xf4] sm:$0xf] %vm907, %v2227
      %2391 = vst.msk [vmem:[#allocation3 + $0x100] sm:$0xf] %vm907, %v2237
      %2392 = vst.msk [vmem:[#allocation3 + $0x10c] sm:$0xf] %vm907, %v2247
      %2393 = vst.msk [vmem:[#allocation3 + $0x118] sm:$0xf] %vm907, %v2257
      %2394 = vst.msk [vmem:[#allocation3 + $0x124] sm:$0xf] %vm907, %v2267
      %2395 = vst.msk [vmem:[#allocation3 + $0x130] sm:$0xf] %vm907, %v2277
      %2396 = vst.msk [vmem:[#allocation3 + $0x13c] sm:$0xf] %vm907, %v2287
      %2397 = vst.msk [vmem:[#allocation3 + $0x148] sm:$0xf] %vm907, %v2297
      %2398 = vst.msk [vmem:[#allocation3 + $0x154] sm:$0xf] %vm907, %v2307
      %2399 = vst.msk [vmem:[#allocation3 + $0x160] sm:$0xf] %vm907, %v2317
      %2400 = vst.msk [vmem:[#allocation3 + $0x16c] sm:$0xf] %vm907, %v2327
      %2401 = vst.msk [vmem:[#allocation3 + $0x178] sm:$0xf] %vm907, %v2337
      %v2402 = vld [vmem:[#allocation2 + $0x8] sm:$0xe]
      %v2403 = vld [vmem:[#allocation2 + $0xc] sm:$0xf]
      %v2404 = vld [vmem:[#allocation2 + $0x10] sm:$0xf]
      %v2405 = vld [vmem:[#allocation2 + $0x14] sm:$0xf]
      %v2406 = vld [vmem:[#allocation2 + $0x18] sm:$0xf]
      %v2407 = vld [vmem:[#allocation2 + $0x1c] sm:$0xf]
      %v2408 = vld [vmem:[#allocation2 + $0x20] sm:$0xf]
      %v2409 = vld [vmem:[#allocation2 + $0x24] sm:$0xf]
      %v2410 = vld [vmem:[#allocation2 + $0x28] sm:$0xf]
      %v2411 = vld [vmem:[#allocation2 + $0x2c] sm:$0xf]
      %v2412 = vld [vmem:[#allocation2 + $0x30] sm:$0xf]
      %v2413 = vld [vmem:[#allocation2 + $0x34] sm:$0xf]
      %v2414 = vld [vmem:[#allocation2 + $0x38] sm:$0xf]
      %v2415 = vld [vmem:[#allocation2 + $0x3c] sm:$0xf]
      %v2416 = vld [vmem:[#allocation2 + $0x40] sm:$0xf]
      %v2417 = vld [vmem:[#allocation2 + $0x44] sm:$0xf]
      %v2418 = vld [vmem:[#allocation2 + $0x48] sm:$0xf]
      %v2419 = vld [vmem:[#allocation2 + $0x4c] sm:$0xf]
      %v2420 = vld [vmem:[#allocation2 + $0x50] sm:$0xf]
      %v2421 = vld [vmem:[#allocation2 + $0x54] sm:$0xf]
      %v2422 = vld [vmem:[#allocation2 + $0x58] sm:$0xf]
      %v2423 = vld [vmem:[#allocation2 + $0x5c] sm:$0xf]
      %v2424 = vld [vmem:[#allocation2 + $0x60] sm:$0xf]
      %v2425 = vld [vmem:[#allocation2 + $0x64] sm:$0xf]
      %v2426 = vld [vmem:[#allocation2 + $0x68] sm:$0xf]
      %v2427 = vld [vmem:[#allocation2 + $0x6c] sm:$0xf]
      %v2428 = vld [vmem:[#allocation2 + $0x70] sm:$0xf]
      %v2429 = vld [vmem:[#allocation2 + $0x74] sm:$0xf]
      %v2430 = vld [vmem:[#allocation2 + $0x78] sm:$0xf]
      %v2431 = vld [vmem:[#allocation2 + $0x7c] sm:$0xf]
      %v2432 = vld [vmem:[#allocation2 + $0x80] sm:$0xf]
      %v2433 = vld [vmem:[#allocation2 + $0x84] sm:$0xf]
      %v2434 = vld [vmem:[#allocation2 + $0x88] sm:$0x1]
      %v2468 = vrot.slane %v2402, 5
      %v2469 = vrot.slane %v2468, 4
      %v2470 = vrot.slane %v2403, 5
      %v2471 = vsel %vm1561, %v2469, %v2470
      %v2472 = vrot.slane %v2470, 4
      %v2473 = vrot.slane %v2404, 5
      %v2474 = vsel %vm1561, %v2472, %v2473
      %v2475 = vrot.slane %v2473, 4
      %v2476 = vrot.slane %v2405, 5
      %v2477 = vsel %vm1561, %v2475, %v2476
      %v2478 = vrot.slane %v2476, 4
      %v2479 = vrot.slane %v2406, 5
      %v2480 = vsel %vm1561, %v2478, %v2479
      %v2481 = vrot.slane %v2479, 4
      %v2482 = vrot.slane %v2407, 5
      %v2483 = vsel %vm1561, %v2481, %v2482
      %v2484 = vrot.slane %v2482, 4
      %v2485 = vrot.slane %v2408, 5
      %v2486 = vsel %vm1561, %v2484, %v2485
      %v2487 = vrot.slane %v2485, 4
      %v2488 = vrot.slane %v2409, 5
      %v2489 = vsel %vm1561, %v2487, %v2488
      %v2490 = vrot.slane %v2488, 4
      %v2491 = vrot.slane %v2410, 5
      %v2492 = vsel %vm1561, %v2490, %v2491
      %v2493 = vrot.slane %v2491, 4
      %v2494 = vrot.slane %v2411, 5
      %v2495 = vsel %vm1561, %v2493, %v2494
      %v2496 = vrot.slane %v2494, 4
      %v2497 = vrot.slane %v2412, 5
      %v2498 = vsel %vm1561, %v2496, %v2497
      %v2499 = vrot.slane %v2497, 4
      %v2500 = vrot.slane %v2413, 5
      %v2501 = vsel %vm1561, %v2499, %v2500
      %v2502 = vrot.slane %v2500, 4
      %v2503 = vrot.slane %v2414, 5
      %v2504 = vsel %vm1561, %v2502, %v2503
      %v2505 = vrot.slane %v2503, 4
      %v2506 = vrot.slane %v2415, 5
      %v2507 = vsel %vm1561, %v2505, %v2506
      %v2508 = vrot.slane %v2506, 4
      %v2509 = vrot.slane %v2416, 5
      %v2510 = vsel %vm1561, %v2508, %v2509
      %v2511 = vrot.slane %v2509, 4
      %v2512 = vrot.slane %v2417, 5
      %v2513 = vsel %vm1561, %v2511, %v2512
      %v2514 = vrot.slane %v2512, 4
      %v2515 = vrot.slane %v2418, 5
      %v2516 = vsel %vm1561, %v2514, %v2515
      %v2517 = vrot.slane %v2515, 4
      %v2518 = vrot.slane %v2419, 5
      %v2519 = vsel %vm1561, %v2517, %v2518
      %v2520 = vrot.slane %v2518, 4
      %v2521 = vrot.slane %v2420, 5
      %v2522 = vsel %vm1561, %v2520, %v2521
      %v2523 = vrot.slane %v2521, 4
      %v2524 = vrot.slane %v2421, 5
      %v2525 = vsel %vm1561, %v2523, %v2524
      %v2526 = vrot.slane %v2524, 4
      %v2527 = vrot.slane %v2422, 5
      %v2528 = vsel %vm1561, %v2526, %v2527
      %v2529 = vrot.slane %v2527, 4
      %v2530 = vrot.slane %v2423, 5
      %v2531 = vsel %vm1561, %v2529, %v2530
      %v2532 = vrot.slane %v2530, 4
      %v2533 = vrot.slane %v2424, 5
      %v2534 = vsel %vm1561, %v2532, %v2533
      %v2535 = vrot.slane %v2533, 4
      %v2536 = vrot.slane %v2425, 5
      %v2537 = vsel %vm1561, %v2535, %v2536
      %v2538 = vrot.slane %v2536, 4
      %v2539 = vrot.slane %v2426, 5
      %v2540 = vsel %vm1561, %v2538, %v2539
      %v2541 = vrot.slane %v2539, 4
      %v2542 = vrot.slane %v2427, 5
      %v2543 = vsel %vm1561, %v2541, %v2542
      %v2544 = vrot.slane %v2542, 4
      %v2545 = vrot.slane %v2428, 5
      %v2546 = vsel %vm1561, %v2544, %v2545
      %v2547 = vrot.slane %v2545, 4
      %v2548 = vrot.slane %v2429, 5
      %v2549 = vsel %vm1561, %v2547, %v2548
      %v2550 = vrot.slane %v2548, 4
      %v2551 = vrot.slane %v2430, 5
      %v2552 = vsel %vm1561, %v2550, %v2551
      %v2553 = vrot.slane %v2551, 4
      %v2554 = vrot.slane %v2431, 5
      %v2555 = vsel %vm1561, %v2553, %v2554
      %v2556 = vrot.slane %v2554, 4
      %v2557 = vrot.slane %v2432, 5
      %v2558 = vsel %vm1561, %v2556, %v2557
      %v2559 = vrot.slane %v2557, 4
      %v2560 = vrot.slane %v2433, 5
      %v2561 = vsel %vm1561, %v2559, %v2560
      %v2562 = vrot.slane %v2560, 4
      %v2563 = vrot.slane %v2434, 5
      %v2564 = vsel %vm1561, %v2562, %v2563
      %2565 = vrot.lane.b32.xlu0 %v2471, 32
      %v2566 = vpop.permute.xlu0 %2565
      %2567 = vrot.lane.b32.xlu0 %v2474, 32
      %v2568 = vpop.permute.xlu0 %2567
      %2569 = vrot.lane.b32.xlu0 %v2477, 32
      %v2570 = vpop.permute.xlu0 %2569
      %2571 = vrot.lane.b32.xlu0 %v2480, 32
      %v2572 = vpop.permute.xlu0 %2571
      %2573 = vrot.lane.b32.xlu0 %v2483, 32
      %v2574 = vpop.permute.xlu0 %2573
      %2575 = vrot.lane.b32.xlu0 %v2486, 32
      %v2576 = vpop.permute.xlu0 %2575
      %2577 = vrot.lane.b32.xlu0 %v2489, 32
      %v2578 = vpop.permute.xlu0 %2577
      %2579 = vrot.lane.b32.xlu0 %v2492, 32
      %v2580 = vpop.permute.xlu0 %2579
      %2581 = vrot.lane.b32.xlu0 %v2495, 32
      %v2582 = vpop.permute.xlu0 %2581
      %2583 = vrot.lane.b32.xlu0 %v2498, 32
      %v2584 = vpop.permute.xlu0 %2583
      %2585 = vrot.lane.b32.xlu0 %v2501, 32
      %v2586 = vpop.permute.xlu0 %2585
      %2587 = vrot.lane.b32.xlu0 %v2504, 32
      %v2588 = vpop.permute.xlu0 %2587
      %2589 = vrot.lane.b32.xlu0 %v2507, 32
      %v2590 = vpop.permute.xlu0 %2589
      %2591 = vrot.lane.b32.xlu0 %v2510, 32
      %v2592 = vpop.permute.xlu0 %2591
      %2593 = vrot.lane.b32.xlu0 %v2513, 32
      %v2594 = vpop.permute.xlu0 %2593
      %2595 = vrot.lane.b32.xlu0 %v2516, 32
      %v2596 = vpop.permute.xlu0 %2595
      %2597 = vrot.lane.b32.xlu0 %v2519, 32
      %v2598 = vpop.permute.xlu0 %2597
      %2599 = vrot.lane.b32.xlu0 %v2522, 32
      %v2600 = vpop.permute.xlu0 %2599
      %2601 = vrot.lane.b32.xlu0 %v2525, 32
      %v2602 = vpop.permute.xlu0 %2601
      %2603 = vrot.lane.b32.xlu0 %v2528, 32
      %v2604 = vpop.permute.xlu0 %2603
      %2605 = vrot.lane.b32.xlu0 %v2531, 32
      %v2606 = vpop.permute.xlu0 %2605
      %2607 = vrot.lane.b32.xlu0 %v2534, 32
      %v2608 = vpop.permute.xlu0 %2607
      %2609 = vrot.lane.b32.xlu0 %v2537, 32
      %v2610 = vpop.permute.xlu0 %2609
      %2611 = vrot.lane.b32.xlu0 %v2540, 32
      %v2612 = vpop.permute.xlu0 %2611
      %2613 = vrot.lane.b32.xlu0 %v2543, 32
      %v2614 = vpop.permute.xlu0 %2613
      %2615 = vrot.lane.b32.xlu0 %v2546, 32
      %v2616 = vpop.permute.xlu0 %2615
      %2617 = vrot.lane.b32.xlu0 %v2549, 32
      %v2618 = vpop.permute.xlu0 %2617
      %2619 = vrot.lane.b32.xlu0 %v2552, 32
      %v2620 = vpop.permute.xlu0 %2619
      %2621 = vrot.lane.b32.xlu0 %v2555, 32
      %v2622 = vpop.permute.xlu0 %2621
      %2623 = vrot.lane.b32.xlu0 %v2558, 32
      %v2624 = vpop.permute.xlu0 %2623
      %2625 = vrot.lane.b32.xlu0 %v2561, 32
      %v2626 = vpop.permute.xlu0 %2625
      %2627 = vrot.lane.b32.xlu0 %v2564, 32
      %v2628 = vpop.permute.xlu0 %2627
      %2661 = vst.msk [vmem:[#allocation3 + $0x4] sm:$0xf] %vm1460, %v2566
      %2662 = vst.msk [vmem:[#allocation3 + $0x10] sm:$0xf] %vm1460, %v2568
      %2663 = vst.msk [vmem:[#allocation3 + $0x1c] sm:$0xf] %vm1460, %v2570
      %2664 = vst.msk [vmem:[#allocation3 + $0x28] sm:$0xf] %vm1460, %v2572
      %2665 = vst.msk [vmem:[#allocation3 + $0x34] sm:$0xf] %vm1460, %v2574
      %2666 = vst.msk [vmem:[#allocation3 + $0x40] sm:$0xf] %vm1460, %v2576
      %2667 = vst.msk [vmem:[#allocation3 + $0x4c] sm:$0xf] %vm1460, %v2578
      %2668 = vst.msk [vmem:[#allocation3 + $0x58] sm:$0xf] %vm1460, %v2580
      %2669 = vst.msk [vmem:[#allocation3 + $0x64] sm:$0xf] %vm1460, %v2582
      %2670 = vst.msk [vmem:[#allocation3 + $0x70] sm:$0xf] %vm1460, %v2584
      %2671 = vst.msk [vmem:[#allocation3 + $0x7c] sm:$0xf] %vm1460, %v2586
      %2672 = vst.msk [vmem:[#allocation3 + $0x88] sm:$0xf] %vm1460, %v2588
      %2673 = vst.msk [vmem:[#allocation3 + $0x94] sm:$0xf] %vm1460, %v2590
      %2674 = vst.msk [vmem:[#allocation3 + $0xa0] sm:$0xf] %vm1460, %v2592
      %2675 = vst.msk [vmem:[#allocation3 + $0xac] sm:$0xf] %vm1460, %v2594
      %2676 = vst.msk [vmem:[#allocation3 + $0xb8] sm:$0xf] %vm1460, %v2596
      %2677 = vst.msk [vmem:[#allocation3 + $0xc4] sm:$0xf] %vm1460, %v2598
      %2678 = vst.msk [vmem:[#allocation3 + $0xd0] sm:$0xf] %vm1460, %v2600
      %2679 = vst.msk [vmem:[#allocation3 + $0xdc] sm:$0xf] %vm1460, %v2602
      %2680 = vst.msk [vmem:[#allocation3 + $0xe8] sm:$0xf] %vm1460, %v2604
      %2681 = vst.msk [vmem:[#allocation3 + $0xf4] sm:$0xf] %vm1460, %v2606
      %2682 = vst.msk [vmem:[#allocation3 + $0x100] sm:$0xf] %vm1460, %v2608
      %2683 = vst.msk [vmem:[#allocation3 + $0x10c] sm:$0xf] %vm1460, %v2610
      %2684 = vst.msk [vmem:[#allocation3 + $0x118] sm:$0xf] %vm1460, %v2612
      %2685 = vst.msk [vmem:[#allocation3 + $0x124] sm:$0xf] %vm1460, %v2614
      %2686 = vst.msk [vmem:[#allocation3 + $0x130] sm:$0xf] %vm1460, %v2616
      %2687 = vst.msk [vmem:[#allocation3 + $0x13c] sm:$0xf] %vm1460, %v2618
      %2688 = vst.msk [vmem:[#allocation3 + $0x148] sm:$0xf] %vm1460, %v2620
      %2689 = vst.msk [vmem:[#allocation3 + $0x154] sm:$0xf] %vm1460, %v2622
      %2690 = vst.msk [vmem:[#allocation3 + $0x160] sm:$0xf] %vm1460, %v2624
      %2691 = vst.msk [vmem:[#allocation3 + $0x16c] sm:$0xf] %vm1460, %v2626
      %2692 = vst.msk [vmem:[#allocation3 + $0x178] sm:$0xf] %vm1460, %v2628
      %v2693 = vld [vmem:[#allocation2 + $0x10] sm:$0xf]
      %v2694 = vld [vmem:[#allocation2 + $0x14] sm:$0xf]
      %v2695 = vld [vmem:[#allocation2 + $0x18] sm:$0xf]
      %v2696 = vld [vmem:[#allocation2 + $0x1c] sm:$0xf]
      %v2697 = vld [vmem:[#allocation2 + $0x20] sm:$0xf]
      %v2698 = vld [vmem:[#allocation2 + $0x24] sm:$0xf]
      %v2699 = vld [vmem:[#allocation2 + $0x28] sm:$0xf]
      %v2700 = vld [vmem:[#allocation2 + $0x2c] sm:$0xf]
      %v2701 = vld [vmem:[#allocation2 + $0x30] sm:$0xf]
      %v2702 = vld [vmem:[#allocation2 + $0x34] sm:$0xf]
      %v2703 = vld [vmem:[#allocation2 + $0x38] sm:$0xf]
      %v2704 = vld [vmem:[#allocation2 + $0x3c] sm:$0xf]
      %v2705 = vld [vmem:[#allocation2 + $0x40] sm:$0xf]
      %v2706 = vld [vmem:[#allocation2 + $0x44] sm:$0xf]
      %v2707 = vld [vmem:[#allocation2 + $0x48] sm:$0xf]
      %v2708 = vld [vmem:[#allocation2 + $0x4c] sm:$0xf]
      %v2709 = vld [vmem:[#allocation2 + $0x50] sm:$0xf]
      %v2710 = vld [vmem:[#allocation2 + $0x54] sm:$0xf]
      %v2711 = vld [vmem:[#allocation2 + $0x58] sm:$0xf]
      %v2712 = vld [vmem:[#allocation2 + $0x5c] sm:$0xf]
      %v2713 = vld [vmem:[#allocation2 + $0x60] sm:$0xf]
      %v2714 = vld [vmem:[#allocation2 + $0x64] sm:$0xf]
      %v2715 = vld [vmem:[#allocation2 + $0x68] sm:$0xf]
      %v2716 = vld [vmem:[#allocation2 + $0x6c] sm:$0xf]
      %v2717 = vld [vmem:[#allocation2 + $0x70] sm:$0xf]
      %v2718 = vld [vmem:[#allocation2 + $0x74] sm:$0xf]
      %v2719 = vld [vmem:[#allocation2 + $0x78] sm:$0xf]
      %v2720 = vld [vmem:[#allocation2 + $0x7c] sm:$0xf]
      %v2721 = vld [vmem:[#allocation2 + $0x80] sm:$0xf]
      %v2722 = vld [vmem:[#allocation2 + $0x84] sm:$0xf]
      %v2723 = vld [vmem:[#allocation2 + $0x88] sm:$0xf]
      %v2724 = vld [vmem:[#allocation2 + $0x8c] sm:$0xf]
      %2757 = vrot.lane.b32.xlu0 %v2693, 64
      %v2758 = vpop.permute.xlu0 %2757
      %2759 = vrot.lane.b32.xlu0 %v2694, 64
      %v2760 = vpop.permute.xlu0 %2759
      %2761 = vrot.lane.b32.xlu0 %v2695, 64
      %v2762 = vpop.permute.xlu0 %2761
      %2763 = vrot.lane.b32.xlu0 %v2696, 64
      %v2764 = vpop.permute.xlu0 %2763
      %2765 = vrot.lane.b32.xlu0 %v2697, 64
      %v2766 = vpop.permute.xlu0 %2765
      %2767 = vrot.lane.b32.xlu0 %v2698, 64
      %v2768 = vpop.permute.xlu0 %2767
      %2769 = vrot.lane.b32.xlu0 %v2699, 64
      %v2770 = vpop.permute.xlu0 %2769
      %2771 = vrot.lane.b32.xlu0 %v2700, 64
      %v2772 = vpop.permute.xlu0 %2771
      %2773 = vrot.lane.b32.xlu0 %v2701, 64
      %v2774 = vpop.permute.xlu0 %2773
      %2775 = vrot.lane.b32.xlu0 %v2702, 64
      %v2776 = vpop.permute.xlu0 %2775
      %2777 = vrot.lane.b32.xlu0 %v2703, 64
      %v2778 = vpop.permute.xlu0 %2777
      %2779 = vrot.lane.b32.xlu0 %v2704, 64
      %v2780 = vpop.permute.xlu0 %2779
      %2781 = vrot.lane.b32.xlu0 %v2705, 64
      %v2782 = vpop.permute.xlu0 %2781
      %2783 = vrot.lane.b32.xlu0 %v2706, 64
      %v2784 = vpop.permute.xlu0 %2783
      %2785 = vrot.lane.b32.xlu0 %v2707, 64
      %v2786 = vpop.permute.xlu0 %2785
      %2787 = vrot.lane.b32.xlu0 %v2708, 64
      %v2788 = vpop.permute.xlu0 %2787
      %2789 = vrot.lane.b32.xlu0 %v2709, 64
      %v2790 = vpop.permute.xlu0 %2789
      %2791 = vrot.lane.b32.xlu0 %v2710, 64
      %v2792 = vpop.permute.xlu0 %2791
      %2793 = vrot.lane.b32.xlu0 %v2711, 64
      %v2794 = vpop.permute.xlu0 %2793
      %2795 = vrot.lane.b32.xlu0 %v2712, 64
      %v2796 = vpop.permute.xlu0 %2795
      %2797 = vrot.lane.b32.xlu0 %v2713, 64
      %v2798 = vpop.permute.xlu0 %2797
      %2799 = vrot.lane.b32.xlu0 %v2714, 64
      %v2800 = vpop.permute.xlu0 %2799
      %2801 = vrot.lane.b32.xlu0 %v2715, 64
      %v2802 = vpop.permute.xlu0 %2801
      %2803 = vrot.lane.b32.xlu0 %v2716, 64
      %v2804 = vpop.permute.xlu0 %2803
      %2805 = vrot.lane.b32.xlu0 %v2717, 64
      %v2806 = vpop.permute.xlu0 %2805
      %2807 = vrot.lane.b32.xlu0 %v2718, 64
      %v2808 = vpop.permute.xlu0 %2807
      %2809 = vrot.lane.b32.xlu0 %v2719, 64
      %v2810 = vpop.permute.xlu0 %2809
      %2811 = vrot.lane.b32.xlu0 %v2720, 64
      %v2812 = vpop.permute.xlu0 %2811
      %2813 = vrot.lane.b32.xlu0 %v2721, 64
      %v2814 = vpop.permute.xlu0 %2813
      %2815 = vrot.lane.b32.xlu0 %v2722, 64
      %v2816 = vpop.permute.xlu0 %2815
      %2817 = vrot.lane.b32.xlu0 %v2723, 64
      %v2818 = vpop.permute.xlu0 %2817
      %2819 = vrot.lane.b32.xlu0 %v2724, 64
      %v2820 = vpop.permute.xlu0 %2819
      %2853 = vst.msk [vmem:[#allocation3 + $0x4] sm:$0xf] %vm1755, %v2758
      %2854 = vst.msk [vmem:[#allocation3 + $0x10] sm:$0xf] %vm1755, %v2760
      %2855 = vst.msk [vmem:[#allocation3 + $0x1c] sm:$0xf] %vm1755, %v2762
      %2856 = vst.msk [vmem:[#allocation3 + $0x28] sm:$0xf] %vm1755, %v2764
      %2857 = vst.msk [vmem:[#allocation3 + $0x34] sm:$0xf] %vm1755, %v2766
      %2858 = vst.msk [vmem:[#allocation3 + $0x40] sm:$0xf] %vm1755, %v2768
      %2859 = vst.msk [vmem:[#allocation3 + $0x4c] sm:$0xf] %vm1755, %v2770
      %2860 = vst.msk [vmem:[#allocation3 + $0x58] sm:$0xf] %vm1755, %v2772
      %2861 = vst.msk [vmem:[#allocation3 + $0x64] sm:$0xf] %vm1755, %v2774
      %2862 = vst.msk [vmem:[#allocation3 + $0x70] sm:$0xf] %vm1755, %v2776
      %2863 = vst.msk [vmem:[#allocation3 + $0x7c] sm:$0xf] %vm1755, %v2778
      %2864 = vst.msk [vmem:[#allocation3 + $0x88] sm:$0xf] %vm1755, %v2780
      %2865 = vst.msk [vmem:[#allocation3 + $0x94] sm:$0xf] %vm1755, %v2782
      %2866 = vst.msk [vmem:[#allocation3 + $0xa0] sm:$0xf] %vm1755, %v2784
      %2867 = vst.msk [vmem:[#allocation3 + $0xac] sm:$0xf] %vm1755, %v2786
      %2868 = vst.msk [vmem:[#allocation3 + $0xb8] sm:$0xf] %vm1755, %v2788
      %2869 = vst.msk [vmem:[#allocation3 + $0xc4] sm:$0xf] %vm1755, %v2790
      %2870 = vst.msk [vmem:[#allocation3 + $0xd0] sm:$0xf] %vm1755, %v2792
      %2871 = vst.msk [vmem:[#allocation3 + $0xdc] sm:$0xf] %vm1755, %v2794
      %2872 = vst.msk [vmem:[#allocation3 + $0xe8] sm:$0xf] %vm1755, %v2796
      %2873 = vst.msk [vmem:[#allocation3 + $0xf4] sm:$0xf] %vm1755, %v2798
      %2874 = vst.msk [vmem:[#allocation3 + $0x100] sm:$0xf] %vm1755, %v2800
      %2875 = vst.msk [vmem:[#allocation3 + $0x10c] sm:$0xf] %vm1755, %v2802
      %2876 = vst.msk [vmem:[#allocation3 + $0x118] sm:$0xf] %vm1755, %v2804
      %2877 = vst.msk [vmem:[#allocation3 + $0x124] sm:$0xf] %vm1755, %v2806
      %2878 = vst.msk [vmem:[#allocation3 + $0x130] sm:$0xf] %vm1755, %v2808
      %2879 = vst.msk [vmem:[#allocation3 + $0x13c] sm:$0xf] %vm1755, %v2810
      %2880 = vst.msk [vmem:[#allocation3 + $0x148] sm:$0xf] %vm1755, %v2812
      %2881 = vst.msk [vmem:[#allocation3 + $0x154] sm:$0xf] %vm1755, %v2814
      %2882 = vst.msk [vmem:[#allocation3 + $0x160] sm:$0xf] %vm1755, %v2816
      %2883 = vst.msk [vmem:[#allocation3 + $0x16c] sm:$0xf] %vm1755, %v2818
      %2884 = vst.msk [vmem:[#allocation3 + $0x178] sm:$0xf] %vm1755, %v2820
      %v2885 = vld [vmem:[#allocation2 + $0x10] sm:$0xf]
      %v2886 = vld [vmem:[#allocation2 + $0x14] sm:$0xf]
      %v2887 = vld [vmem:[#allocation2 + $0x18] sm:$0xf]
      %v2888 = vld [vmem:[#allocation2 + $0x1c] sm:$0xf]
      %v2889 = vld [vmem:[#allocation2 + $0x20] sm:$0xf]
      %v2890 = vld [vmem:[#allocation2 + $0x24] sm:$0xf]
      %v2891 = vld [vmem:[#allocation2 + $0x28] sm:$0xf]
      %v2892 = vld [vmem:[#allocation2 + $0x2c] sm:$0xf]
      %v2893 = vld [vmem:[#allocation2 + $0x30] sm:$0xf]
      %v2894 = vld [vmem:[#allocation2 + $0x34] sm:$0xf]
      %v2895 = vld [vmem:[#allocation2 + $0x38] sm:$0xf]
      %v2896 = vld [vmem:[#allocation2 + $0x3c] sm:$0xf]
      %v2897 = vld [vmem:[#allocation2 + $0x40] sm:$0xf]
      %v2898 = vld [vmem:[#allocation2 + $0x44] sm:$0xf]
      %v2899 = vld [vmem:[#allocation2 + $0x48] sm:$0xf]
      %v2900 = vld [vmem:[#allocation2 + $0x4c] sm:$0xf]
      %v2901 = vld [vmem:[#allocation2 + $0x50] sm:$0xf]
      %v2902 = vld [vmem:[#allocation2 + $0x54] sm:$0xf]
      %v2903 = vld [vmem:[#allocation2 + $0x58] sm:$0xf]
      %v2904 = vld [vmem:[#allocation2 + $0x5c] sm:$0xf]
      %v2905 = vld [vmem:[#allocation2 + $0x60] sm:$0xf]
      %v2906 = vld [vmem:[#allocation2 + $0x64] sm:$0xf]
      %v2907 = vld [vmem:[#allocation2 + $0x68] sm:$0xf]
      %v2908 = vld [vmem:[#allocation2 + $0x6c] sm:$0xf]
      %v2909 = vld [vmem:[#allocation2 + $0x70] sm:$0xf]
      %v2910 = vld [vmem:[#allocation2 + $0x74] sm:$0xf]
      %v2911 = vld [vmem:[#allocation2 + $0x78] sm:$0xf]
      %v2912 = vld [vmem:[#allocation2 + $0x7c] sm:$0xf]
      %v2913 = vld [vmem:[#allocation2 + $0x80] sm:$0xf]
      %v2914 = vld [vmem:[#allocation2 + $0x84] sm:$0xf]
      %v2915 = vld [vmem:[#allocation2 + $0x88] sm:$0xf]
      %v2916 = vld [vmem:[#allocation2 + $0x8c] sm:$0xf]
      %v2917 = vld [vmem:[#allocation2 + $0x90] sm:$0x1]
      %v2919 = vshrl.u32 %v2885, 16
      %v2921 = vrot.slane %v2919, 4
      %v2922 = vshll.u32 %v2885, 16
      %v2924 = vrot.slane %v2922, 5
      %v2925 = vor.u32 %v2921, %v2924
      %v2926 = vrot.slane %v2925, 4
      %v2928 = vshll.u32 %v2886, 16
      %v2930 = vrot.slane %v2928, 5
      %v2931 = vsel %vm1039, %v2926, %v2930
      %v2932 = vshrl.u32 %v2886, 16
      %v2934 = vrot.slane %v2932, 4
      %v2935 = vor.u32 %v2934, %v2930
      %v2936 = vrot.slane %v2935, 4
      %v2938 = vshll.u32 %v2887, 16
      %v2940 = vrot.slane %v2938, 5
      %v2941 = vsel %vm1039, %v2936, %v2940
      %v2942 = vshrl.u32 %v2887, 16
      %v2944 = vrot.slane %v2942, 4
      %v2945 = vor.u32 %v2944, %v2940
      %v2946 = vrot.slane %v2945, 4
      %v2948 = vshll.u32 %v2888, 16
      %v2950 = vrot.slane %v2948, 5
      %v2951 = vsel %vm1039, %v2946, %v2950
      %v2952 = vshrl.u32 %v2888, 16
      %v2954 = vrot.slane %v2952, 4
      %v2955 = vor.u32 %v2954, %v2950
      %v2956 = vrot.slane %v2955, 4
      %v2958 = vshll.u32 %v2889, 16
      %v2960 = vrot.slane %v2958, 5
      %v2961 = vsel %vm1039, %v2956, %v2960
      %v2962 = vshrl.u32 %v2889, 16
      %v2964 = vrot.slane %v2962, 4
      %v2965 = vor.u32 %v2964, %v2960
      %v2966 = vrot.slane %v2965, 4
      %v2968 = vshll.u32 %v2890, 16
      %v2970 = vrot.slane %v2968, 5
      %v2971 = vsel %vm1039, %v2966, %v2970
      %v2972 = vshrl.u32 %v2890, 16
      %v2974 = vrot.slane %v2972, 4
      %v2975 = vor.u32 %v2974, %v2970
      %v2976 = vrot.slane %v2975, 4
      %v2978 = vshll.u32 %v2891, 16
      %v2980 = vrot.slane %v2978, 5
      %v2981 = vsel %vm1039, %v2976, %v2980
      %v2982 = vshrl.u32 %v2891, 16
      %v2984 = vrot.slane %v2982, 4
      %v2985 = vor.u32 %v2984, %v2980
      %v2986 = vrot.slane %v2985, 4
      %v2988 = vshll.u32 %v2892, 16
      %v2990 = vrot.slane %v2988, 5
      %v2991 = vsel %vm1039, %v2986, %v2990
      %v2992 = vshrl.u32 %v2892, 16
      %v2994 = vrot.slane %v2992, 4
      %v2995 = vor.u32 %v2994, %v2990
      %v2996 = vrot.slane %v2995, 4
      %v2998 = vshll.u32 %v2893, 16
      %v3000 = vrot.slane %v2998, 5
      %v3001 = vsel %vm1039, %v2996, %v3000
      %v3002 = vshrl.u32 %v2893, 16
      %v3004 = vrot.slane %v3002, 4
      %v3005 = vor.u32 %v3004, %v3000
      %v3006 = vrot.slane %v3005, 4
      %v3008 = vshll.u32 %v2894, 16
      %v3010 = vrot.slane %v3008, 5
      %v3011 = vsel %vm1039, %v3006, %v3010
      %v3012 = vshrl.u32 %v2894, 16
      %v3014 = vrot.slane %v3012, 4
      %v3015 = vor.u32 %v3014, %v3010
      %v3016 = vrot.slane %v3015, 4
      %v3018 = vshll.u32 %v2895, 16
      %v3020 = vrot.slane %v3018, 5
      %v3021 = vsel %vm1039, %v3016, %v3020
      %v3022 = vshrl.u32 %v2895, 16
      %v3024 = vrot.slane %v3022, 4
      %v3025 = vor.u32 %v3024, %v3020
      %v3026 = vrot.slane %v3025, 4
      %v3028 = vshll.u32 %v2896, 16
      %v3030 = vrot.slane %v3028, 5
      %v3031 = vsel %vm1039, %v3026, %v3030
      %v3032 = vshrl.u32 %v2896, 16
      %v3034 = vrot.slane %v3032, 4
      %v3035 = vor.u32 %v3034, %v3030
      %v3036 = vrot.slane %v3035, 4
      %v3038 = vshll.u32 %v2897, 16
      %v3040 = vrot.slane %v3038, 5
      %v3041 = vsel %vm1039, %v3036, %v3040
      %v3042 = vshrl.u32 %v2897, 16
      %v3044 = vrot.slane %v3042, 4
      %v3045 = vor.u32 %v3044, %v3040
      %v3046 = vrot.slane %v3045, 4
      %v3048 = vshll.u32 %v2898, 16
      %v3050 = vrot.slane %v3048, 5
      %v3051 = vsel %vm1039, %v3046, %v3050
      %v3052 = vshrl.u32 %v2898, 16
      %v3054 = vrot.slane %v3052, 4
      %v3055 = vor.u32 %v3054, %v3050
      %v3056 = vrot.slane %v3055, 4
      %v3058 = vshll.u32 %v2899, 16
      %v3060 = vrot.slane %v3058, 5
      %v3061 = vsel %vm1039, %v3056, %v3060
      %v3062 = vshrl.u32 %v2899, 16
      %v3064 = vrot.slane %v3062, 4
      %v3065 = vor.u32 %v3064, %v3060
      %v3066 = vrot.slane %v3065, 4
      %v3068 = vshll.u32 %v2900, 16
      %v3070 = vrot.slane %v3068, 5
      %v3071 = vsel %vm1039, %v3066, %v3070
      %v3072 = vshrl.u32 %v2900, 16
      %v3074 = vrot.slane %v3072, 4
      %v3075 = vor.u32 %v3074, %v3070
      %v3076 = vrot.slane %v3075, 4
      %v3078 = vshll.u32 %v2901, 16
      %v3080 = vrot.slane %v3078, 5
      %v3081 = vsel %vm1039, %v3076, %v3080
      %v3082 = vshrl.u32 %v2901, 16
      %v3084 = vrot.slane %v3082, 4
      %v3085 = vor.u32 %v3084, %v3080
      %v3086 = vrot.slane %v3085, 4
      %v3088 = vshll.u32 %v2902, 16
      %v3090 = vrot.slane %v3088, 5
      %v3091 = vsel %vm1039, %v3086, %v3090
      %v3092 = vshrl.u32 %v2902, 16
      %v3094 = vrot.slane %v3092, 4
      %v3095 = vor.u32 %v3094, %v3090
      %v3096 = vrot.slane %v3095, 4
      %v3098 = vshll.u32 %v2903, 16
      %v3100 = vrot.slane %v3098, 5
      %v3101 = vsel %vm1039, %v3096, %v3100
      %v3102 = vshrl.u32 %v2903, 16
      %v3104 = vrot.slane %v3102, 4
      %v3105 = vor.u32 %v3104, %v3100
      %v3106 = vrot.slane %v3105, 4
      %v3108 = vshll.u32 %v2904, 16
      %v3110 = vrot.slane %v3108, 5
      %v3111 = vsel %vm1039, %v3106, %v3110
      %v3112 = vshrl.u32 %v2904, 16
      %v3114 = vrot.slane %v3112, 4
      %v3115 = vor.u32 %v3114, %v3110
      %v3116 = vrot.slane %v3115, 4
      %v3118 = vshll.u32 %v2905, 16
      %v3120 = vrot.slane %v3118, 5
      %v3121 = vsel %vm1039, %v3116, %v3120
      %v3122 = vshrl.u32 %v2905, 16
      %v3124 = vrot.slane %v3122, 4
      %v3125 = vor.u32 %v3124, %v3120
      %v3126 = vrot.slane %v3125, 4
      %v3128 = vshll.u32 %v2906, 16
      %v3130 = vrot.slane %v3128, 5
      %v3131 = vsel %vm1039, %v3126, %v3130
      %v3132 = vshrl.u32 %v2906, 16
      %v3134 = vrot.slane %v3132, 4
      %v3135 = vor.u32 %v3134, %v3130
      %v3136 = vrot.slane %v3135, 4
      %v3138 = vshll.u32 %v2907, 16
      %v3140 = vrot.slane %v3138, 5
      %v3141 = vsel %vm1039, %v3136, %v3140
      %v3142 = vshrl.u32 %v2907, 16
      %v3144 = vrot.slane %v3142, 4
      %v3145 = vor.u32 %v3144, %v3140
      %v3146 = vrot.slane %v3145, 4
      %v3148 = vshll.u32 %v2908, 16
      %v3150 = vrot.slane %v3148, 5
      %v3151 = vsel %vm1039, %v3146, %v3150
      %v3152 = vshrl.u32 %v2908, 16
      %v3154 = vrot.slane %v3152, 4
      %v3155 = vor.u32 %v3154, %v3150
      %v3156 = vrot.slane %v3155, 4
      %v3158 = vshll.u32 %v2909, 16
      %v3160 = vrot.slane %v3158, 5
      %v3161 = vsel %vm1039, %v3156, %v3160
      %v3162 = vshrl.u32 %v2909, 16
      %v3164 = vrot.slane %v3162, 4
      %v3165 = vor.u32 %v3164, %v3160
      %v3166 = vrot.slane %v3165, 4
      %v3168 = vshll.u32 %v2910, 16
      %v3170 = vrot.slane %v3168, 5
      %v3171 = vsel %vm1039, %v3166, %v3170
      %v3172 = vshrl.u32 %v2910, 16
      %v3174 = vrot.slane %v3172, 4
      %v3175 = vor.u32 %v3174, %v3170
      %v3176 = vrot.slane %v3175, 4
      %v3178 = vshll.u32 %v2911, 16
      %v3180 = vrot.slane %v3178, 5
      %v3181 = vsel %vm1039, %v3176, %v3180
      %v3182 = vshrl.u32 %v2911, 16
      %v3184 = vrot.slane %v3182, 4
      %v3185 = vor.u32 %v3184, %v3180
      %v3186 = vrot.slane %v3185, 4
      %v3188 = vshll.u32 %v2912, 16
      %v3190 = vrot.slane %v3188, 5
      %v3191 = vsel %vm1039, %v3186, %v3190
      %v3192 = vshrl.u32 %v2912, 16
      %v3194 = vrot.slane %v3192, 4
      %v3195 = vor.u32 %v3194, %v3190
      %v3196 = vrot.slane %v3195, 4
      %v3198 = vshll.u32 %v2913, 16
      %v3200 = vrot.slane %v3198, 5
      %v3201 = vsel %vm1039, %v3196, %v3200
      %v3202 = vshrl.u32 %v2913, 16
      %v3204 = vrot.slane %v3202, 4
      %v3205 = vor.u32 %v3204, %v3200
      %v3206 = vrot.slane %v3205, 4
      %v3208 = vshll.u32 %v2914, 16
      %v3210 = vrot.slane %v3208, 5
      %v3211 = vsel %vm1039, %v3206, %v3210
      %v3212 = vshrl.u32 %v2914, 16
      %v3214 = vrot.slane %v3212, 4
      %v3215 = vor.u32 %v3214, %v3210
      %v3216 = vrot.slane %v3215, 4
      %v3218 = vshll.u32 %v2915, 16
      %v3220 = vrot.slane %v3218, 5
      %v3221 = vsel %vm1039, %v3216, %v3220
      %v3222 = vshrl.u32 %v2915, 16
      %v3224 = vrot.slane %v3222, 4
      %v3225 = vor.u32 %v3224, %v3220
      %v3226 = vrot.slane %v3225, 4
      %v3228 = vshll.u32 %v2916, 16
      %v3230 = vrot.slane %v3228, 5
      %v3231 = vsel %vm1039, %v3226, %v3230
      %v3232 = vshrl.u32 %v2916, 16
      %v3234 = vrot.slane %v3232, 4
      %v3235 = vor.u32 %v3234, %v3230
      %v3236 = vrot.slane %v3235, 4
      %v3238 = vshll.u32 %v2917, 16
      %v3240 = vrot.slane %v3238, 5
      %v3241 = vsel %vm1039, %v3236, %v3240
      %3242 = vrot.lane.b32.xlu0 %v2931, 96
      %v3243 = vpop.permute.xlu0 %3242
      %3244 = vrot.lane.b32.xlu0 %v2941, 96
      %v3245 = vpop.permute.xlu0 %3244
      %3246 = vrot.lane.b32.xlu0 %v2951, 96
      %v3247 = vpop.permute.xlu0 %3246
      %3248 = vrot.lane.b32.xlu0 %v2961, 96
      %v3249 = vpop.permute.xlu0 %3248
      %3250 = vrot.lane.b32.xlu0 %v2971, 96
      %v3251 = vpop.permute.xlu0 %3250
      %3252 = vrot.lane.b32.xlu0 %v2981, 96
      %v3253 = vpop.permute.xlu0 %3252
      %3254 = vrot.lane.b32.xlu0 %v2991, 96
      %v3255 = vpop.permute.xlu0 %3254
      %3256 = vrot.lane.b32.xlu0 %v3001, 96
      %v3257 = vpop.permute.xlu0 %3256
      %3258 = vrot.lane.b32.xlu0 %v3011, 96
      %v3259 = vpop.permute.xlu0 %3258
      %3260 = vrot.lane.b32.xlu0 %v3021, 96
      %v3261 = vpop.permute.xlu0 %3260
      %3262 = vrot.lane.b32.xlu0 %v3031, 96
      %v3263 = vpop.permute.xlu0 %3262
      %3264 = vrot.lane.b32.xlu0 %v3041, 96
      %v3265 = vpop.permute.xlu0 %3264
      %3266 = vrot.lane.b32.xlu0 %v3051, 96
      %v3267 = vpop.permute.xlu0 %3266
      %3268 = vrot.lane.b32.xlu0 %v3061, 96
      %v3269 = vpop.permute.xlu0 %3268
      %3270 = vrot.lane.b32.xlu0 %v3071, 96
      %v3271 = vpop.permute.xlu0 %3270
      %3272 = vrot.lane.b32.xlu0 %v3081, 96
      %v3273 = vpop.permute.xlu0 %3272
      %3274 = vrot.lane.b32.xlu0 %v3091, 96
      %v3275 = vpop.permute.xlu0 %3274
      %3276 = vrot.lane.b32.xlu0 %v3101, 96
      %v3277 = vpop.permute.xlu0 %3276
      %3278 = vrot.lane.b32.xlu0 %v3111, 96
      %v3279 = vpop.permute.xlu0 %3278
      %3280 = vrot.lane.b32.xlu0 %v3121, 96
      %v3281 = vpop.permute.xlu0 %3280
      %3282 = vrot.lane.b32.xlu0 %v3131, 96
      %v3283 = vpop.permute.xlu0 %3282
      %3284 = vrot.lane.b32.xlu0 %v3141, 96
      %v3285 = vpop.permute.xlu0 %3284
      %3286 = vrot.lane.b32.xlu0 %v3151, 96
      %v3287 = vpop.permute.xlu0 %3286
      %3288 = vrot.lane.b32.xlu0 %v3161, 96
      %v3289 = vpop.permute.xlu0 %3288
      %3290 = vrot.lane.b32.xlu0 %v3171, 96
      %v3291 = vpop.permute.xlu0 %3290
      %3292 = vrot.lane.b32.xlu0 %v3181, 96
      %v3293 = vpop.permute.xlu0 %3292
      %3294 = vrot.lane.b32.xlu0 %v3191, 96
      %v3295 = vpop.permute.xlu0 %3294
      %3296 = vrot.lane.b32.xlu0 %v3201, 96
      %v3297 = vpop.permute.xlu0 %3296
      %3298 = vrot.lane.b32.xlu0 %v3211, 96
      %v3299 = vpop.permute.xlu0 %3298
      %3300 = vrot.lane.b32.xlu0 %v3221, 96
      %v3301 = vpop.permute.xlu0 %3300
      %3302 = vrot.lane.b32.xlu0 %v3231, 96
      %v3303 = vpop.permute.xlu0 %3302
      %3304 = vrot.lane.b32.xlu0 %v3241, 96
      %v3305 = vpop.permute.xlu0 %3304
      %3338 = vst.msk [vmem:[#allocation3 + $0x4] sm:$0xf] %vm1948, %v3243
      %3339 = vst.msk [vmem:[#allocation3 + $0x10] sm:$0xf] %vm1948, %v3245
      %3340 = vst.msk [vmem:[#allocation3 + $0x1c] sm:$0xf] %vm1948, %v3247
      %3341 = vst.msk [vmem:[#allocation3 + $0x28] sm:$0xf] %vm1948, %v3249
      %3342 = vst.msk [vmem:[#allocation3 + $0x34] sm:$0xf] %vm1948, %v3251
      %3343 = vst.msk [vmem:[#allocation3 + $0x40] sm:$0xf] %vm1948, %v3253
      %3344 = vst.msk [vmem:[#allocation3 + $0x4c] sm:$0xf] %vm1948, %v3255
      %3345 = vst.msk [vmem:[#allocation3 + $0x58] sm:$0xf] %vm1948, %v3257
      %3346 = vst.msk [vmem:[#allocation3 + $0x64] sm:$0xf] %vm1948, %v3259
      %3347 = vst.msk [vmem:[#allocation3 + $0x70] sm:$0xf] %vm1948, %v3261
      %3348 = vst.msk [vmem:[#allocation3 + $0x7c] sm:$0xf] %vm1948, %v3263
      %3349 = vst.msk [vmem:[#allocation3 + $0x88] sm:$0xf] %vm1948, %v3265
      %3350 = vst.msk [vmem:[#allocation3 + $0x94] sm:$0xf] %vm1948, %v3267
      %3351 = vst.msk [vmem:[#allocation3 + $0xa0] sm:$0xf] %vm1948, %v3269
      %3352 = vst.msk [vmem:[#allocation3 + $0xac] sm:$0xf] %vm1948, %v3271
      %3353 = vst.msk [vmem:[#allocation3 + $0xb8] sm:$0xf] %vm1948, %v3273
      %3354 = vst.msk [vmem:[#allocation3 + $0xc4] sm:$0xf] %vm1948, %v3275
      %3355 = vst.msk [vmem:[#allocation3 + $0xd0] sm:$0xf] %vm1948, %v3277
      %3356 = vst.msk [vmem:[#allocation3 + $0xdc] sm:$0xf] %vm1948, %v3279
      %3357 = vst.msk [vmem:[#allocation3 + $0xe8] sm:$0xf] %vm1948, %v3281
      %3358 = vst.msk [vmem:[#allocation3 + $0xf4] sm:$0xf] %vm1948, %v3283
      %3359 = vst.msk [vmem:[#allocation3 + $0x100] sm:$0xf] %vm1948, %v3285
      %3360 = vst.msk [vmem:[#allocation3 + $0x10c] sm:$0xf] %vm1948, %v3287
      %3361 = vst.msk [vmem:[#allocation3 + $0x118] sm:$0xf] %vm1948, %v3289
      %3362 = vst.msk [vmem:[#allocation3 + $0x124] sm:$0xf] %vm1948, %v3291
      %3363 = vst.msk [vmem:[#allocation3 + $0x130] sm:$0xf] %vm1948, %v3293
      %3364 = vst.msk [vmem:[#allocation3 + $0x13c] sm:$0xf] %vm1948, %v3295
      %3365 = vst.msk [vmem:[#allocation3 + $0x148] sm:$0xf] %vm1948, %v3297
      %3366 = vst.msk [vmem:[#allocation3 + $0x154] sm:$0xf] %vm1948, %v3299
      %3367 = vst.msk [vmem:[#allocation3 + $0x160] sm:$0xf] %vm1948, %v3301
      %3368 = vst.msk [vmem:[#allocation3 + $0x16c] sm:$0xf] %vm1948, %v3303
      %3369 = vst.msk [vmem:[#allocation3 + $0x178] sm:$0xf] %vm1948, %v3305
      %v3370 = vld [vmem:[#allocation2 + $0x10] sm:$0xe]
      %v3371 = vld [vmem:[#allocation2 + $0x14] sm:$0xf]
      %v3372 = vld [vmem:[#allocation2 + $0x18] sm:$0xf]
      %v3373 = vld [vmem:[#allocation2 + $0x1c] sm:$0xf]
      %v3374 = vld [vmem:[#allocation2 + $0x20] sm:$0xf]
      %v3375 = vld [vmem:[#allocation2 + $0x24] sm:$0xf]
      %v3376 = vld [vmem:[#allocation2 + $0x28] sm:$0xf]
      %v3377 = vld [vmem:[#allocation2 + $0x2c] sm:$0xf]
      %v3378 = vld [vmem:[#allocation2 + $0x30] sm:$0xf]
      %v3379 = vld [vmem:[#allocation2 + $0x34] sm:$0xf]
      %v3380 = vld [vmem:[#allocation2 + $0x38] sm:$0xf]
      %v3381 = vld [vmem:[#allocation2 + $0x3c] sm:$0xf]
      %v3382 = vld [vmem:[#allocation2 + $0x40] sm:$0xf]
      %v3383 = vld [vmem:[#allocation2 + $0x44] sm:$0xf]
      %v3384 = vld [vmem:[#allocation2 + $0x48] sm:$0xf]
      %v3385 = vld [vmem:[#allocation2 + $0x4c] sm:$0xf]
      %v3386 = vld [vmem:[#allocation2 + $0x50] sm:$0xf]
      %v3387 = vld [vmem:[#allocation2 + $0x54] sm:$0xf]
      %v3388 = vld [vmem:[#allocation2 + $0x58] sm:$0xf]
      %v3389 = vld [vmem:[#allocation2 + $0x5c] sm:$0xf]
      %v3390 = vld [vmem:[#allocation2 + $0x60] sm:$0xf]
      %v3391 = vld [vmem:[#allocation2 + $0x64] sm:$0xf]
      %v3392 = vld [vmem:[#allocation2 + $0x68] sm:$0xf]
      %v3393 = vld [vmem:[#allocation2 + $0x6c] sm:$0xf]
      %v3394 = vld [vmem:[#allocation2 + $0x70] sm:$0xf]
      %v3395 = vld [vmem:[#allocation2 + $0x74] sm:$0xf]
      %v3396 = vld [vmem:[#allocation2 + $0x78] sm:$0xf]
      %v3397 = vld [vmem:[#allocation2 + $0x7c] sm:$0xf]
      %v3398 = vld [vmem:[#allocation2 + $0x80] sm:$0xf]
      %v3399 = vld [vmem:[#allocation2 + $0x84] sm:$0xf]
      %v3400 = vld [vmem:[#allocation2 + $0x88] sm:$0xf]
      %v3401 = vld [vmem:[#allocation2 + $0x8c] sm:$0xf]
      %v3402 = vld [vmem:[#allocation2 + $0x90] sm:$0x1]
      %v3436 = vrot.slane %v3370, 5
      %v3437 = vrot.slane %v3436, 4
      %v3438 = vrot.slane %v3371, 5
      %v3439 = vsel %vm1561, %v3437, %v3438
      %v3440 = vrot.slane %v3438, 4
      %v3441 = vrot.slane %v3372, 5
      %v3442 = vsel %vm1561, %v3440, %v3441
      %v3443 = vrot.slane %v3441, 4
      %v3444 = vrot.slane %v3373, 5
      %v3445 = vsel %vm1561, %v3443, %v3444
      %v3446 = vrot.slane %v3444, 4
      %v3447 = vrot.slane %v3374, 5
      %v3448 = vsel %vm1561, %v3446, %v3447
      %v3449 = vrot.slane %v3447, 4
      %v3450 = vrot.slane %v3375, 5
      %v3451 = vsel %vm1561, %v3449, %v3450
      %v3452 = vrot.slane %v3450, 4
      %v3453 = vrot.slane %v3376, 5
      %v3454 = vsel %vm1561, %v3452, %v3453
      %v3455 = vrot.slane %v3453, 4
      %v3456 = vrot.slane %v3377, 5
      %v3457 = vsel %vm1561, %v3455, %v3456
      %v3458 = vrot.slane %v3456, 4
      %v3459 = vrot.slane %v3378, 5
      %v3460 = vsel %vm1561, %v3458, %v3459
      %v3461 = vrot.slane %v3459, 4
      %v3462 = vrot.slane %v3379, 5
      %v3463 = vsel %vm1561, %v3461, %v3462
      %v3464 = vrot.slane %v3462, 4
      %v3465 = vrot.slane %v3380, 5
      %v3466 = vsel %vm1561, %v3464, %v3465
      %v3467 = vrot.slane %v3465, 4
      %v3468 = vrot.slane %v3381, 5
      %v3469 = vsel %vm1561, %v3467, %v3468
      %v3470 = vrot.slane %v3468, 4
      %v3471 = vrot.slane %v3382, 5
      %v3472 = vsel %vm1561, %v3470, %v3471
      %v3473 = vrot.slane %v3471, 4
      %v3474 = vrot.slane %v3383, 5
      %v3475 = vsel %vm1561, %v3473, %v3474
      %v3476 = vrot.slane %v3474, 4
      %v3477 = vrot.slane %v3384, 5
      %v3478 = vsel %vm1561, %v3476, %v3477
      %v3479 = vrot.slane %v3477, 4
      %v3480 = vrot.slane %v3385, 5
      %v3481 = vsel %vm1561, %v3479, %v3480
      %v3482 = vrot.slane %v3480, 4
      %v3483 = vrot.slane %v3386, 5
      %v3484 = vsel %vm1561, %v3482, %v3483
      %v3485 = vrot.slane %v3483, 4
      %v3486 = vrot.slane %v3387, 5
      %v3487 = vsel %vm1561, %v3485, %v3486
      %v3488 = vrot.slane %v3486, 4
      %v3489 = vrot.slane %v3388, 5
      %v3490 = vsel %vm1561, %v3488, %v3489
      %v3491 = vrot.slane %v3489, 4
      %v3492 = vrot.slane %v3389, 5
      %v3493 = vsel %vm1561, %v3491, %v3492
      %v3494 = vrot.slane %v3492, 4
      %v3495 = vrot.slane %v3390, 5
      %v3496 = vsel %vm1561, %v3494, %v3495
      %v3497 = vrot.slane %v3495, 4
      %v3498 = vrot.slane %v3391, 5
      %v3499 = vsel %vm1561, %v3497, %v3498
      %v3500 = vrot.slane %v3498, 4
      %v3501 = vrot.slane %v3392, 5
      %v3502 = vsel %vm1561, %v3500, %v3501
      %v3503 = vrot.slane %v3501, 4
      %v3504 = vrot.slane %v3393, 5
      %v3505 = vsel %vm1561, %v3503, %v3504
      %v3506 = vrot.slane %v3504, 4
      %v3507 = vrot.slane %v3394, 5
      %v3508 = vsel %vm1561, %v3506, %v3507
      %v3509 = vrot.slane %v3507, 4
      %v3510 = vrot.slane %v3395, 5
      %v3511 = vsel %vm1561, %v3509, %v3510
      %v3512 = vrot.slane %v3510, 4
      %v3513 = vrot.slane %v3396, 5
      %v3514 = vsel %vm1561, %v3512, %v3513
      %v3515 = vrot.slane %v3513, 4
      %v3516 = vrot.slane %v3397, 5
      %v3517 = vsel %vm1561, %v3515, %v3516
      %v3518 = vrot.slane %v3516, 4
      %v3519 = vrot.slane %v3398, 5
      %v3520 = vsel %vm1561, %v3518, %v3519
      %v3521 = vrot.slane %v3519, 4
      %v3522 = vrot.slane %v3399, 5
      %v3523 = vsel %vm1561, %v3521, %v3522
      %v3524 = vrot.slane %v3522, 4
      %v3525 = vrot.slane %v3400, 5
      %v3526 = vsel %vm1561, %v3524, %v3525
      %v3527 = vrot.slane %v3525, 4
      %v3528 = vrot.slane %v3401, 5
      %v3529 = vsel %vm1561, %v3527, %v3528
      %v3530 = vrot.slane %v3528, 4
      %v3531 = vrot.slane %v3402, 5
      %v3532 = vsel %vm1561, %v3530, %v3531
      %3565 = vst.msk [vmem:[#allocation3 + $0x8] sm:$0xf] %vm907, %v3439
      %3566 = vst.msk [vmem:[#allocation3 + $0x14] sm:$0xf] %vm907, %v3442
      %3567 = vst.msk [vmem:[#allocation3 + $0x20] sm:$0xf] %vm907, %v3445
      %3568 = vst.msk [vmem:[#allocation3 + $0x2c] sm:$0xf] %vm907, %v3448
      %3569 = vst.msk [vmem:[#allocation3 + $0x38] sm:$0xf] %vm907, %v3451
      %3570 = vst.msk [vmem:[#allocation3 + $0x44] sm:$0xf] %vm907, %v3454
      %3571 = vst.msk [vmem:[#allocation3 + $0x50] sm:$0xf] %vm907, %v3457
      %3572 = vst.msk [vmem:[#allocation3 + $0x5c] sm:$0xf] %vm907, %v3460
      %3573 = vst.msk [vmem:[#allocation3 + $0x68] sm:$0xf] %vm907, %v3463
      %3574 = vst.msk [vmem:[#allocation3 + $0x74] sm:$0xf] %vm907, %v3466
      %3575 = vst.msk [vmem:[#allocation3 + $0x80] sm:$0xf] %vm907, %v3469
      %3576 = vst.msk [vmem:[#allocation3 + $0x8c] sm:$0xf] %vm907, %v3472
      %3577 = vst.msk [vmem:[#allocation3 + $0x98] sm:$0xf] %vm907, %v3475
      %3578 = vst.msk [vmem:[#allocation3 + $0xa4] sm:$0xf] %vm907, %v3478
      %3579 = vst.msk [vmem:[#allocation3 + $0xb0] sm:$0xf] %vm907, %v3481
      %3580 = vst.msk [vmem:[#allocation3 + $0xbc] sm:$0xf] %vm907, %v3484
      %3581 = vst.msk [vmem:[#allocation3 + $0xc8] sm:$0xf] %vm907, %v3487
      %3582 = vst.msk [vmem:[#allocation3 + $0xd4] sm:$0xf] %vm907, %v3490
      %3583 = vst.msk [vmem:[#allocation3 + $0xe0] sm:$0xf] %vm907, %v3493
      %3584 = vst.msk [vmem:[#allocation3 + $0xec] sm:$0xf] %vm907, %v3496
      %3585 = vst.msk [vmem:[#allocation3 + $0xf8] sm:$0xf] %vm907, %v3499
      %3586 = vst.msk [vmem:[#allocation3 + $0x104] sm:$0xf] %vm907, %v3502
      %3587 = vst.msk [vmem:[#allocation3 + $0x110] sm:$0xf] %vm907, %v3505
      %3588 = vst.msk [vmem:[#allocation3 + $0x11c] sm:$0xf] %vm907, %v3508
      %3589 = vst.msk [vmem:[#allocation3 + $0x128] sm:$0xf] %vm907, %v3511
      %3590 = vst.msk [vmem:[#allocation3 + $0x134] sm:$0xf] %vm907, %v3514
      %3591 = vst.msk [vmem:[#allocation3 + $0x140] sm:$0xf] %vm907, %v3517
      %3592 = vst.msk [vmem:[#allocation3 + $0x14c] sm:$0xf] %vm907, %v3520
      %3593 = vst.msk [vmem:[#allocation3 + $0x158] sm:$0xf] %vm907, %v3523
      %3594 = vst.msk [vmem:[#allocation3 + $0x164] sm:$0xf] %vm907, %v3526
      %3595 = vst.msk [vmem:[#allocation3 + $0x170] sm:$0xf] %vm907, %v3529
      %3596 = vst.msk [vmem:[#allocation3 + $0x17c] sm:$0xf] %vm907, %v3532
      %v3597 = vld [vmem:[#allocation3] sm:$0xff]
      %v3598 = vld [vmem:[#allocation3 + $0x8] sm:$0xf]
      %v3599 = vld [vmem:[#allocation3 + $0xc] sm:$0xff]
      %v3600 = vld [vmem:[#allocation3 + $0x14] sm:$0xf]
      %v3601 = vld [vmem:[#allocation3 + $0x18] sm:$0xff]
      %v3602 = vld [vmem:[#allocation3 + $0x20] sm:$0xf]
      %v3603 = vld [vmem:[#allocation3 + $0x24] sm:$0xff]
      %v3604 = vld [vmem:[#allocation3 + $0x2c] sm:$0xf]
      %v3605 = vld [vmem:[#allocation3 + $0x30] sm:$0xff]
      %v3606 = vld [vmem:[#allocation3 + $0x38] sm:$0xf]
      %v3607 = vld [vmem:[#allocation3 + $0x3c] sm:$0xff]
      %v3608 = vld [vmem:[#allocation3 + $0x44] sm:$0xf]
      %v3609 = vld [vmem:[#allocation3 + $0x48] sm:$0xff]
      %v3610 = vld [vmem:[#allocation3 + $0x50] sm:$0xf]
      %v3611 = vld [vmem:[#allocation3 + $0x54] sm:$0xff]
      %v3612 = vld [vmem:[#allocation3 + $0x5c] sm:$0xf]
      %v3613 = vld [vmem:[#allocation3 + $0x60] sm:$0xff]
      %v3614 = vld [vmem:[#allocation3 + $0x68] sm:$0xf]
      %v3615 = vld [vmem:[#allocation3 + $0x6c] sm:$0xff]
      %v3616 = vld [vmem:[#allocation3 + $0x74] sm:$0xf]
      %v3617 = vld [vmem:[#allocation3 + $0x78] sm:$0xff]
      %v3618 = vld [vmem:[#allocation3 + $0x80] sm:$0xf]
      %v3619 = vld [vmem:[#allocation3 + $0x84] sm:$0xff]
      %v3620 = vld [vmem:[#allocation3 + $0x8c] sm:$0xf]
      %v3621 = vld [vmem:[#allocation3 + $0x90] sm:$0xff]
      %v3622 = vld [vmem:[#allocation3 + $0x98] sm:$0xf]
      %v3623 = vld [vmem:[#allocation3 + $0x9c] sm:$0xff]
      %v3624 = vld [vmem:[#allocation3 + $0xa4] sm:$0xf]
      %v3625 = vld [vmem:[#allocation3 + $0xa8] sm:$0xff]
      %v3626 = vld [vmem:[#allocation3 + $0xb0] sm:$0xf]
      %v3627 = vld [vmem:[#allocation3 + $0xb4] sm:$0xff]
      %v3628 = vld [vmem:[#allocation3 + $0xbc] sm:$0xf]
      %v3629 = vld [vmem:[#allocation3 + $0xc0] sm:$0xff]
      %v3630 = vld [vmem:[#allocation3 + $0xc8] sm:$0xf]
      %v3631 = vld [vmem:[#allocation3 + $0xcc] sm:$0xff]
      %v3632 = vld [vmem:[#allocation3 + $0xd4] sm:$0xf]
      %v3633 = vld [vmem:[#allocation3 + $0xd8] sm:$0xff]
      %v3634 = vld [vmem:[#allocation3 + $0xe0] sm:$0xf]
      %v3635 = vld [vmem:[#allocation3 + $0xe4] sm:$0xff]
      %v3636 = vld [vmem:[#allocation3 + $0xec] sm:$0xf]
      %v3637 = vld [vmem:[#allocation3 + $0xf0] sm:$0xff]
      %v3638 = vld [vmem:[#allocation3 + $0xf8] sm:$0xf]
      %v3639 = vld [vmem:[#allocation3 + $0xfc] sm:$0xff]
      %v3640 = vld [vmem:[#allocation3 + $0x104] sm:$0xf]
      %v3641 = vld [vmem:[#allocation3 + $0x108] sm:$0xff]
      %v3642 = vld [vmem:[#allocation3 + $0x110] sm:$0xf]
      %v3643 = vld [vmem:[#allocation3 + $0x114] sm:$0xff]
      %v3644 = vld [vmem:[#allocation3 + $0x11c] sm:$0xf]
      %v3645 = vld [vmem:[#allocation3 + $0x120] sm:$0xff]
      %v3646 = vld [vmem:[#allocation3 + $0x128] sm:$0xf]
      %v3647 = vld [vmem:[#allocation3 + $0x12c] sm:$0xff]
      %v3648 = vld [vmem:[#allocation3 + $0x134] sm:$0xf]
      %v3649 = vld [vmem:[#allocation3 + $0x138] sm:$0xff]
      %v3650 = vld [vmem:[#allocation3 + $0x140] sm:$0xf]
      %v3651 = vld [vmem:[#allocation3 + $0x144] sm:$0xff]
      %v3652 = vld [vmem:[#allocation3 + $0x14c] sm:$0xf]
      %v3653 = vld [vmem:[#allocation3 + $0x150] sm:$0xff]
      %v3654 = vld [vmem:[#allocation3 + $0x158] sm:$0xf]
      %v3655 = vld [vmem:[#allocation3 + $0x15c] sm:$0xff]
      %v3656 = vld [vmem:[#allocation3 + $0x164] sm:$0xf]
      %v3657 = vld [vmem:[#allocation3 + $0x168] sm:$0xff]
      %v3658 = vld [vmem:[#allocation3 + $0x170] sm:$0xf]
      %v3659 = vld [vmem:[#allocation3 + $0x174] sm:$0xff]
      %v3660 = vld [vmem:[#allocation3 + $0x17c] sm:$0xf]
      %v3661 = vld [vmem:[%s2] sm:$0xf]
      %v3662 = vld [vmem:[%s2 + $0x4] sm:$0xf]
      %v3663 = vld [vmem:[%s2 + $0x8] sm:$0xf]
      %v3664 = vld [vmem:[%s2 + $0xc] sm:$0xf]
      %v3665 = vld [vmem:[%s2 + $0x10] sm:$0xf]
      %v3666 = vld [vmem:[%s2 + $0x14] sm:$0xf]
      %v3667 = vld [vmem:[%s2 + $0x18] sm:$0xf]
      %v3668 = vld [vmem:[%s2 + $0x1c] sm:$0xf]
      %v3669 = vld [vmem:[%s2 + $0x20] sm:$0xf]
      %v3670 = vld [vmem:[%s2 + $0x24] sm:$0xf]
      %v3671 = vld [vmem:[%s2 + $0x28] sm:$0xf]
      %v3672 = vld [vmem:[%s2 + $0x2c] sm:$0xf]
      %v3673 = vld [vmem:[%s2 + $0x30] sm:$0xf]
      %v3674 = vld [vmem:[%s2 + $0x34] sm:$0xf]
      %v3675 = vld [vmem:[%s2 + $0x38] sm:$0xf]
      %v3676 = vld [vmem:[%s2 + $0x3c] sm:$0xf]
      %v3677 = vld [vmem:[%s2 + $0x40] sm:$0xf]
      %v3678 = vld [vmem:[%s2 + $0x44] sm:$0xf]
      %v3679 = vld [vmem:[%s2 + $0x48] sm:$0xf]
      %v3680 = vld [vmem:[%s2 + $0x4c] sm:$0xf]
      %v3681 = vld [vmem:[%s2 + $0x50] sm:$0xf]
      %v3682 = vld [vmem:[%s2 + $0x54] sm:$0xf]
      %v3683 = vld [vmem:[%s2 + $0x58] sm:$0xf]
      %v3684 = vld [vmem:[%s2 + $0x5c] sm:$0xf]
      %v3685 = vld [vmem:[%s2 + $0x60] sm:$0xf]
      %v3686 = vld [vmem:[%s2 + $0x64] sm:$0xf]
      %v3687 = vld [vmem:[%s2 + $0x68] sm:$0xf]
      %v3688 = vld [vmem:[%s2 + $0x6c] sm:$0xf]
      %v3689 = vld [vmem:[%s2 + $0x70] sm:$0xf]
      %v3690 = vld [vmem:[%s2 + $0x74] sm:$0xf]
      %v3691 = vld [vmem:[%s2 + $0x78] sm:$0xf]
      %v3692 = vld [vmem:[%s2 + $0x7c] sm:$0xf]
      %v3693 = vld [vmem:[%s2 + $0x80] sm:$0xf]
      %v3694 = vld [vmem:[%s2 + $0x84] sm:$0xf]
      %v3695 = vld [vmem:[%s2 + $0x88] sm:$0xf]
      %v3696 = vld [vmem:[%s2 + $0x8c] sm:$0xf]
      %v3761 = vunpack.c.l.b16 %v3597
      %v3762 = vunpack.c.h.b16 %v3597
      %v3763 = vunpack.c.l.b16 %v3598
      %v3764 = vunpack.c.l.b16 %v3599
      %v3765 = vunpack.c.h.b16 %v3599
      %v3766 = vunpack.c.l.b16 %v3600
      %v3767 = vunpack.c.l.b16 %v3601
      %v3768 = vunpack.c.h.b16 %v3601
      %v3769 = vunpack.c.l.b16 %v3602
      %v3770 = vunpack.c.l.b16 %v3603
      %v3771 = vunpack.c.h.b16 %v3603
      %v3772 = vunpack.c.l.b16 %v3604
      %v3773 = vunpack.c.l.b16 %v3605
      %v3774 = vunpack.c.h.b16 %v3605
      %v3775 = vunpack.c.l.b16 %v3606
      %v3776 = vunpack.c.l.b16 %v3607
      %v3777 = vunpack.c.h.b16 %v3607
      %v3778 = vunpack.c.l.b16 %v3608
      %v3779 = vunpack.c.l.b16 %v3609
      %v3780 = vunpack.c.h.b16 %v3609
      %v3781 = vunpack.c.l.b16 %v3610
      %v3782 = vunpack.c.l.b16 %v3611
      %v3783 = vunpack.c.h.b16 %v3611
      %v3784 = vunpack.c.l.b16 %v3612
      %v3785 = vunpack.c.l.b16 %v3613
      %v3786 = vunpack.c.h.b16 %v3613
      %v3787 = vunpack.c.l.b16 %v3614
      %v3788 = vunpack.c.l.b16 %v3615
      %v3789 = vunpack.c.h.b16 %v3615
      %v3790 = vunpack.c.l.b16 %v3616
      %v3791 = vunpack.c.l.b16 %v3617
      %v3792 = vunpack.c.h.b16 %v3617
      %v3793 = vunpack.c.l.b16 %v3618
      %v3794 = vunpack.c.l.b16 %v3619
      %v3795 = vunpack.c.h.b16 %v3619
      %v3796 = vunpack.c.l.b16 %v3620
      %v3797 = vunpack.c.l.b16 %v3621
      %v3798 = vunpack.c.h.b16 %v3621
      %v3799 = vunpack.c.l.b16 %v3622
      %v3800 = vunpack.c.l.b16 %v3623
      %v3801 = vunpack.c.h.b16 %v3623
      %v3802 = vunpack.c.l.b16 %v3624
      %v3803 = vunpack.c.l.b16 %v3625
      %v3804 = vunpack.c.h.b16 %v3625
      %v3805 = vunpack.c.l.b16 %v3626
      %v3806 = vunpack.c.l.b16 %v3627
      %v3807 = vunpack.c.h.b16 %v3627
      %v3808 = vunpack.c.l.b16 %v3628
      %v3809 = vunpack.c.l.b16 %v3629
      %v3810 = vunpack.c.h.b16 %v3629
      %v3811 = vunpack.c.l.b16 %v3630
      %v3812 = vunpack.c.l.b16 %v3631
      %v3813 = vunpack.c.h.b16 %v3631
      %v3814 = vunpack.c.l.b16 %v3632
      %v3815 = vunpack.c.l.b16 %v3633
      %v3816 = vunpack.c.h.b16 %v3633
      %v3817 = vunpack.c.l.b16 %v3634
      %v3818 = vunpack.c.l.b16 %v3635
      %v3819 = vunpack.c.h.b16 %v3635
      %v3820 = vunpack.c.l.b16 %v3636
      %v3821 = vunpack.c.l.b16 %v3637
      %v3822 = vunpack.c.h.b16 %v3637
      %v3823 = vunpack.c.l.b16 %v3638
      %v3824 = vunpack.c.l.b16 %v3639
      %v3825 = vunpack.c.h.b16 %v3639
      %v3826 = vunpack.c.l.b16 %v3640
      %v3827 = vunpack.c.l.b16 %v3641
      %v3828 = vunpack.c.h.b16 %v3641
      %v3829 = vunpack.c.l.b16 %v3642
      %v3830 = vunpack.c.l.b16 %v3643
      %v3831 = vunpack.c.h.b16 %v3643
      %v3832 = vunpack.c.l.b16 %v3644
      %v3833 = vunpack.c.l.b16 %v3645
      %v3834 = vunpack.c.h.b16 %v3645
      %v3835 = vunpack.c.l.b16 %v3646
      %v3836 = vunpack.c.l.b16 %v3647
      %v3837 = vunpack.c.h.b16 %v3647
      %v3838 = vunpack.c.l.b16 %v3648
      %v3839 = vunpack.c.l.b16 %v3649
      %v3840 = vunpack.c.h.b16 %v3649
      %v3841 = vunpack.c.l.b16 %v3650
      %v3842 = vunpack.c.l.b16 %v3651
      %v3843 = vunpack.c.h.b16 %v3651
      %v3844 = vunpack.c.l.b16 %v3652
      %v3845 = vunpack.c.l.b16 %v3653
      %v3846 = vunpack.c.h.b16 %v3653
      %v3847 = vunpack.c.l.b16 %v3654
      %v3848 = vunpack.c.l.b16 %v3655
      %v3849 = vunpack.c.h.b16 %v3655
      %v3850 = vunpack.c.l.b16 %v3656
      %v3851 = vunpack.c.l.b16 %v3657
      %v3852 = vunpack.c.h.b16 %v3657
      %v3853 = vunpack.c.l.b16 %v3658
      %v3854 = vunpack.c.l.b16 %v3659
      %v3855 = vunpack.c.h.b16 %v3659
      %v3856 = vunpack.c.l.b16 %v3660
      %v3857 = vpack.c.b16 %v3764, %v3761
      %v3858 = vpack.c.b16 %v3765, %v3762
      %v3859 = vpack.c.b16 %v3766, %v3763
      %v3860 = vpack.c.b16 %v3770, %v3767
      %v3861 = vpack.c.b16 %v3771, %v3768
      %v3862 = vpack.c.b16 %v3772, %v3769
      %v3863 = vpack.c.b16 %v3776, %v3773
      %v3864 = vpack.c.b16 %v3777, %v3774
      %v3865 = vpack.c.b16 %v3778, %v3775
      %v3866 = vpack.c.b16 %v3782, %v3779
      %v3867 = vpack.c.b16 %v3783, %v3780
      %v3868 = vpack.c.b16 %v3784, %v3781
      %v3869 = vpack.c.b16 %v3788, %v3785
      %v3870 = vpack.c.b16 %v3789, %v3786
      %v3871 = vpack.c.b16 %v3790, %v3787
      %v3872 = vpack.c.b16 %v3794, %v3791
      %v3873 = vpack.c.b16 %v3795, %v3792
      %v3874 = vpack.c.b16 %v3796, %v3793
      %v3875 = vpack.c.b16 %v3800, %v3797
      %v3876 = vpack.c.b16 %v3801, %v3798
      %v3877 = vpack.c.b16 %v3802, %v3799
      %v3878 = vpack.c.b16 %v3806, %v3803
      %v3879 = vpack.c.b16 %v3807, %v3804
      %v3880 = vpack.c.b16 %v3808, %v3805
      %v3881 = vpack.c.b16 %v3812, %v3809
      %v3882 = vpack.c.b16 %v3813, %v3810
      %v3883 = vpack.c.b16 %v3814, %v3811
      %v3884 = vpack.c.b16 %v3818, %v3815
      %v3885 = vpack.c.b16 %v3819, %v3816
      %v3886 = vpack.c.b16 %v3820, %v3817
      %v3887 = vpack.c.b16 %v3824, %v3821
      %v3888 = vpack.c.b16 %v3825, %v3822
      %v3889 = vpack.c.b16 %v3826, %v3823
      %v3890 = vpack.c.b16 %v3830, %v3827
      %v3891 = vpack.c.b16 %v3831, %v3828
      %v3892 = vpack.c.b16 %v3832, %v3829
      %v3893 = vpack.c.b16 %v3836, %v3833
      %v3894 = vpack.c.b16 %v3837, %v3834
      %v3895 = vpack.c.b16 %v3838, %v3835
      %v3896 = vpack.c.b16 %v3842, %v3839
      %v3897 = vpack.c.b16 %v3843, %v3840
      %v3898 = vpack.c.b16 %v3844, %v3841
      %v3899 = vpack.c.b16 %v3848, %v3845
      %v3900 = vpack.c.b16 %v3849, %v3846
      %v3901 = vpack.c.b16 %v3850, %v3847
      %v3902 = vpack.c.b16 %v3854, %v3851
      %v3903 = vpack.c.b16 %v3855, %v3852
      %v3904 = vpack.c.b16 %v3856, %v3853
      %v3973 = vunpack.c.l.b16 %v3661
      %v3974 = vunpack.c.l.b16 %v3662
      %v3975 = vunpack.c.l.b16 %v3663
      %v3976 = vunpack.c.l.b16 %v3664
      %v3977 = vunpack.c.l.b16 %v3665
      %v3978 = vunpack.c.l.b16 %v3666
      %v3979 = vunpack.c.l.b16 %v3667
      %v3980 = vunpack.c.l.b16 %v3668
      %v3981 = vunpack.c.l.b16 %v3669
      %v3982 = vunpack.c.l.b16 %v3670
      %v3983 = vunpack.c.l.b16 %v3671
      %v3984 = vunpack.c.l.b16 %v3672
      %v3985 = vunpack.c.l.b16 %v3673
      %v3986 = vunpack.c.l.b16 %v3674
      %v3987 = vunpack.c.l.b16 %v3675
      %v3988 = vunpack.c.l.b16 %v3676
      %v3989 = vunpack.c.l.b16 %v3677
      %v3990 = vunpack.c.l.b16 %v3678
      %v3991 = vunpack.c.l.b16 %v3679
      %v3992 = vunpack.c.l.b16 %v3680
      %v3993 = vunpack.c.l.b16 %v3681
      %v3994 = vunpack.c.l.b16 %v3682
      %v3995 = vunpack.c.l.b16 %v3683
      %v3996 = vunpack.c.l.b16 %v3684
      %v3997 = vunpack.c.l.b16 %v3685
      %v3998 = vunpack.c.l.b16 %v3686
      %v3999 = vunpack.c.l.b16 %v3687
      %v4000 = vunpack.c.l.b16 %v3688
      %v4001 = vunpack.c.l.b16 %v3689
      %v4002 = vunpack.c.l.b16 %v3690
      %v4003 = vunpack.c.l.b16 %v3691
      %v4004 = vunpack.c.l.b16 %v3692
      %v4005 = vunpack.c.l.b16 %v3693
      %v4006 = vunpack.c.l.b16 %v3694
      %v4007 = vunpack.c.l.b16 %v3695
      %v4008 = vunpack.c.l.b16 %v3696
      %v4009 = vpack.c.b16 %v3974, %v3973
      %v4010 = vpack.c.b16 %v3976, %v3975
      %v4011 = vpack.c.b16 %v3978, %v3977
      %v4012 = vpack.c.b16 %v3980, %v3979
      %v4013 = vpack.c.b16 %v3982, %v3981
      %v4014 = vpack.c.b16 %v3984, %v3983
      %v4015 = vpack.c.b16 %v3986, %v3985
      %v4016 = vpack.c.b16 %v3988, %v3987
      %v4017 = vpack.c.b16 %v3990, %v3989
      %v4018 = vpack.c.b16 %v3992, %v3991
      %v4019 = vpack.c.b16 %v3994, %v3993
      %v4020 = vpack.c.b16 %v3996, %v3995
      %v4021 = vpack.c.b16 %v3998, %v3997
      %v4022 = vpack.c.b16 %v4000, %v3999
      %v4023 = vpack.c.b16 %v4002, %v4001
      %v4024 = vpack.c.b16 %v4004, %v4003
      %v4025 = vpack.c.b16 %v4006, %v4005
      %v4026 = vpack.c.b16 %v4008, %v4007
      %vm4045 = vcmask 261120
      %v4047 = vsel %vm4045, %v3859, 0
      %v4050 = vsel %vm4045, %v3862, 0
      %v4053 = vsel %vm4045, %v3865, 0
      %v4056 = vsel %vm4045, %v3868, 0
      %v4059 = vsel %vm4045, %v3871, 0
      %v4062 = vsel %vm4045, %v3874, 0
      %v4065 = vsel %vm4045, %v3877, 0
      %v4068 = vsel %vm4045, %v3880, 0
      %v4071 = vsel %vm4045, %v3883, 0
      %v4074 = vsel %vm4045, %v3886, 0
      %v4077 = vsel %vm4045, %v3889, 0
      %v4080 = vsel %vm4045, %v3892, 0
      %v4083 = vsel %vm4045, %v3895, 0
      %v4086 = vsel %vm4045, %v3898, 0
      %v4089 = vsel %vm4045, %v3901, 0
      %v4092 = vsel %vm4045, %v3904, 0
      %4094 = vmatpush.bf16.msra.mxu0 %v4016
      %4095 = vmatpush.bf16.msra.mxu0 %v4015
      %4096 = vmatpush.bf16.msra.mxu0 %v4014
      %4097 = vmatpush.bf16.msra.mxu0 %v4013
      %4098 = vmatpush.bf16.msra.mxu0 %v4012
      %4099 = vmatpush.bf16.msra.mxu0 %v4011
      %4100 = vmatpush.bf16.msra.mxu0 %v4010
      %4101 = vmatpush.bf16.msra.mxu0 %v4009
      %4102 = vmatmul.bf16.gmra.mxu0 %v3857
      %v4103 = vpop.f32.mrf.mxu0
      %v4104 = vadd.f32 0.0, %v4103
      %v4105 = vpop.f32.mrf.mxu0
      %v4106 = vadd.f32 0.0, %v4105
      %4107 = vmatmul.bf16.gmra.mxu0 %v3860
      %v4108 = vpop.f32.mrf.mxu0
      %v4109 = vadd.f32 0.0, %v4108
      %v4110 = vpop.f32.mrf.mxu0
      %v4111 = vadd.f32 0.0, %v4110
      %4112 = vmatmul.bf16.gmra.mxu0 %v3863
      %v4113 = vpop.f32.mrf.mxu0
      %v4114 = vadd.f32 0.0, %v4113
      %v4115 = vpop.f32.mrf.mxu0
      %v4116 = vadd.f32 0.0, %v4115
      %4117 = vmatmul.bf16.gmra.mxu0 %v3866
      %v4118 = vpop.f32.mrf.mxu0
      %v4119 = vadd.f32 0.0, %v4118
      %v4120 = vpop.f32.mrf.mxu0
      %v4121 = vadd.f32 0.0, %v4120
      %4122 = vmatmul.bf16.gmra.mxu0 %v3869
      %v4123 = vpop.f32.mrf.mxu0
      %v4124 = vadd.f32 0.0, %v4123
      %v4125 = vpop.f32.mrf.mxu0
      %v4126 = vadd.f32 0.0, %v4125
      %4127 = vmatmul.bf16.gmra.mxu0 %v3872
      %v4128 = vpop.f32.mrf.mxu0
      %v4129 = vadd.f32 0.0, %v4128
      %v4130 = vpop.f32.mrf.mxu0
      %v4131 = vadd.f32 0.0, %v4130
      %4132 = vmatmul.bf16.gmra.mxu0 %v3875
      %v4133 = vpop.f32.mrf.mxu0
      %v4134 = vadd.f32 0.0, %v4133
      %v4135 = vpop.f32.mrf.mxu0
      %v4136 = vadd.f32 0.0, %v4135
      %4137 = vmatmul.bf16.gmra.mxu0 %v3878
      %v4138 = vpop.f32.mrf.mxu0
      %v4139 = vadd.f32 0.0, %v4138
      %v4140 = vpop.f32.mrf.mxu0
      %v4141 = vadd.f32 0.0, %v4140
      %4142 = vmatmul.bf16.gmra.mxu0 %v3881
      %v4143 = vpop.f32.mrf.mxu0
      %v4144 = vadd.f32 0.0, %v4143
      %v4145 = vpop.f32.mrf.mxu0
      %v4146 = vadd.f32 0.0, %v4145
      %4147 = vmatmul.bf16.gmra.mxu0 %v3884
      %v4148 = vpop.f32.mrf.mxu0
      %v4149 = vadd.f32 0.0, %v4148
      %v4150 = vpop.f32.mrf.mxu0
      %v4151 = vadd.f32 0.0, %v4150
      %4152 = vmatmul.bf16.gmra.mxu0 %v3887
      %v4153 = vpop.f32.mrf.mxu0
      %v4154 = vadd.f32 0.0, %v4153
      %v4155 = vpop.f32.mrf.mxu0
      %v4156 = vadd.f32 0.0, %v4155
      %4157 = vmatmul.bf16.gmra.mxu0 %v3890
      %v4158 = vpop.f32.mrf.mxu0
      %v4159 = vadd.f32 0.0, %v4158
      %v4160 = vpop.f32.mrf.mxu0
      %v4161 = vadd.f32 0.0, %v4160
      %4162 = vmatmul.bf16.gmra.mxu0 %v3893
      %v4163 = vpop.f32.mrf.mxu0
      %v4164 = vadd.f32 0.0, %v4163
      %v4165 = vpop.f32.mrf.mxu0
      %v4166 = vadd.f32 0.0, %v4165
      %4167 = vmatmul.bf16.gmra.mxu0 %v3896
      %v4168 = vpop.f32.mrf.mxu0
      %v4169 = vadd.f32 0.0, %v4168
      %v4170 = vpop.f32.mrf.mxu0
      %v4171 = vadd.f32 0.0, %v4170
      %4172 = vmatmul.bf16.gmra.mxu0 %v3899
      %v4173 = vpop.f32.mrf.mxu0
      %v4174 = vadd.f32 0.0, %v4173
      %v4175 = vpop.f32.mrf.mxu0
      %v4176 = vadd.f32 0.0, %v4175
      %4177 = vmatmul.bf16.gmra.mxu0 %v3902
      %v4178 = vpop.f32.mrf.mxu0
      %v4179 = vadd.f32 0.0, %v4178
      %v4180 = vpop.f32.mrf.mxu0
      %v4181 = vadd.f32 0.0, %v4180
      %4182 = vdwg.mxu0
      %4183 = vmatpush.bf16.msra.mxu0 %v4024
      %4184 = vmatpush.bf16.msra.mxu0 %v4023
      %4185 = vmatpush.bf16.msra.mxu0 %v4022
      %4186 = vmatpush.bf16.msra.mxu0 %v4021
      %4187 = vmatpush.bf16.msra.mxu0 %v4020
      %4188 = vmatpush.bf16.msra.mxu0 %v4019
      %4189 = vmatpush.bf16.msra.mxu0 %v4018
      %4190 = vmatpush.bf16.msra.mxu0 %v4017
      %4191 = vmatmul.bf16.gmra.mxu0 %v3858
      %v4192 = vpop.f32.mrf.mxu0
      %v4193 = vadd.f32 %v4104, %v4192
      %v4194 = vpop.f32.mrf.mxu0
      %v4195 = vadd.f32 %v4106, %v4194
      %4196 = vmatmul.bf16.gmra.mxu0 %v3861
      %v4197 = vpop.f32.mrf.mxu0
      %v4198 = vadd.f32 %v4109, %v4197
      %v4199 = vpop.f32.mrf.mxu0
      %v4200 = vadd.f32 %v4111, %v4199
      %4201 = vmatmul.bf16.gmra.mxu0 %v3864
      %v4202 = vpop.f32.mrf.mxu0
      %v4203 = vadd.f32 %v4114, %v4202
      %v4204 = vpop.f32.mrf.mxu0
      %v4205 = vadd.f32 %v4116, %v4204
      %4206 = vmatmul.bf16.gmra.mxu0 %v3867
      %v4207 = vpop.f32.mrf.mxu0
      %v4208 = vadd.f32 %v4119, %v4207
      %v4209 = vpop.f32.mrf.mxu0
      %v4210 = vadd.f32 %v4121, %v4209
      %4211 = vmatmul.bf16.gmra.mxu0 %v3870
      %v4212 = vpop.f32.mrf.mxu0
      %v4213 = vadd.f32 %v4124, %v4212
      %v4214 = vpop.f32.mrf.mxu0
      %v4215 = vadd.f32 %v4126, %v4214
      %4216 = vmatmul.bf16.gmra.mxu0 %v3873
      %v4217 = vpop.f32.mrf.mxu0
      %v4218 = vadd.f32 %v4129, %v4217
      %v4219 = vpop.f32.mrf.mxu0
      %v4220 = vadd.f32 %v4131, %v4219
      %4221 = vmatmul.bf16.gmra.mxu0 %v3876
      %v4222 = vpop.f32.mrf.mxu0
      %v4223 = vadd.f32 %v4134, %v4222
      %v4224 = vpop.f32.mrf.mxu0
      %v4225 = vadd.f32 %v4136, %v4224
      %4226 = vmatmul.bf16.gmra.mxu0 %v3879
      %v4227 = vpop.f32.mrf.mxu0
      %v4228 = vadd.f32 %v4139, %v4227
      %v4229 = vpop.f32.mrf.mxu0
      %v4230 = vadd.f32 %v4141, %v4229
      %4231 = vmatmul.bf16.gmra.mxu0 %v3882
      %v4232 = vpop.f32.mrf.mxu0
      %v4233 = vadd.f32 %v4144, %v4232
      %v4234 = vpop.f32.mrf.mxu0
      %v4235 = vadd.f32 %v4146, %v4234
      %4236 = vmatmul.bf16.gmra.mxu0 %v3885
      %v4237 = vpop.f32.mrf.mxu0
      %v4238 = vadd.f32 %v4149, %v4237
      %v4239 = vpop.f32.mrf.mxu0
      %v4240 = vadd.f32 %v4151, %v4239
      %4241 = vmatmul.bf16.gmra.mxu0 %v3888
      %v4242 = vpop.f32.mrf.mxu0
      %v4243 = vadd.f32 %v4154, %v4242
      %v4244 = vpop.f32.mrf.mxu0
      %v4245 = vadd.f32 %v4156, %v4244
      %4246 = vmatmul.bf16.gmra.mxu0 %v3891
      %v4247 = vpop.f32.mrf.mxu0
      %v4248 = vadd.f32 %v4159, %v4247
      %v4249 = vpop.f32.mrf.mxu0
      %v4250 = vadd.f32 %v4161, %v4249
      %4251 = vmatmul.bf16.gmra.mxu0 %v3894
      %v4252 = vpop.f32.mrf.mxu0
      %v4253 = vadd.f32 %v4164, %v4252
      %v4254 = vpop.f32.mrf.mxu0
      %v4255 = vadd.f32 %v4166, %v4254
      %4256 = vmatmul.bf16.gmra.mxu0 %v3897
      %v4257 = vpop.f32.mrf.mxu0
      %v4258 = vadd.f32 %v4169, %v4257
      %v4259 = vpop.f32.mrf.mxu0
      %v4260 = vadd.f32 %v4171, %v4259
      %4261 = vmatmul.bf16.gmra.mxu0 %v3900
      %v4262 = vpop.f32.mrf.mxu0
      %v4263 = vadd.f32 %v4174, %v4262
      %v4264 = vpop.f32.mrf.mxu0
      %v4265 = vadd.f32 %v4176, %v4264
      %4266 = vmatmul.bf16.gmra.mxu0 %v3903
      %v4267 = vpop.f32.mrf.mxu0
      %v4268 = vadd.f32 %v4179, %v4267
      %v4269 = vpop.f32.mrf.mxu0
      %v4270 = vadd.f32 %v4181, %v4269
      %4271 = vdwg.mxu0
      %4272 = vmatpush.bf16.msra.mxu0 0
      %4273 = vmatpush.bf16.msra.mxu0 0
      %4274 = vmatpush.bf16.msra.mxu0 0
      %4275 = vmatpush.bf16.msra.mxu0 0
      %4276 = vmatpush.bf16.msra.mxu0 0
      %4277 = vmatpush.bf16.msra.mxu0 0
      %4278 = vmatpush.bf16.msra.mxu0 %v4026
      %4279 = vmatpush.bf16.msra.mxu0 %v4025
      %4280 = vmatmul.bf16.gmra.mxu0 %v4047
      %v4281 = vpop.f32.mrf.mxu0
      %v4282 = vadd.f32 %v4193, %v4281
      %v4283 = vpop.f32.mrf.mxu0
      %v4284 = vadd.f32 %v4195, %v4283
      %4285 = vmatmul.bf16.gmra.mxu0 %v4050
      %v4286 = vpop.f32.mrf.mxu0
      %v4287 = vadd.f32 %v4198, %v4286
      %v4288 = vpop.f32.mrf.mxu0
      %v4289 = vadd.f32 %v4200, %v4288
      %4290 = vmatmul.bf16.gmra.mxu0 %v4053
      %v4291 = vpop.f32.mrf.mxu0
      %v4292 = vadd.f32 %v4203, %v4291
      %v4293 = vpop.f32.mrf.mxu0
      %v4294 = vadd.f32 %v4205, %v4293
      %4295 = vmatmul.bf16.gmra.mxu0 %v4056
      %v4296 = vpop.f32.mrf.mxu0
      %v4297 = vadd.f32 %v4208, %v4296
      %v4298 = vpop.f32.mrf.mxu0
      %v4299 = vadd.f32 %v4210, %v4298
      %4300 = vmatmul.bf16.gmra.mxu0 %v4059
      %v4301 = vpop.f32.mrf.mxu0
      %v4302 = vadd.f32 %v4213, %v4301
      %v4303 = vpop.f32.mrf.mxu0
      %v4304 = vadd.f32 %v4215, %v4303
      %4305 = vmatmul.bf16.gmra.mxu0 %v4062
      %v4306 = vpop.f32.mrf.mxu0
      %v4307 = vadd.f32 %v4218, %v4306
      %v4308 = vpop.f32.mrf.mxu0
      %v4309 = vadd.f32 %v4220, %v4308
      %4310 = vmatmul.bf16.gmra.mxu0 %v4065
      %v4311 = vpop.f32.mrf.mxu0
      %v4312 = vadd.f32 %v4223, %v4311
      %v4313 = vpop.f32.mrf.mxu0
      %v4314 = vadd.f32 %v4225, %v4313
      %4315 = vmatmul.bf16.gmra.mxu0 %v4068
      %v4316 = vpop.f32.mrf.mxu0
      %v4317 = vadd.f32 %v4228, %v4316
      %v4318 = vpop.f32.mrf.mxu0
      %v4319 = vadd.f32 %v4230, %v4318
      %4320 = vmatmul.bf16.gmra.mxu0 %v4071
      %v4321 = vpop.f32.mrf.mxu0
      %v4322 = vadd.f32 %v4233, %v4321
      %v4323 = vpop.f32.mrf.mxu0
      %v4324 = vadd.f32 %v4235, %v4323
      %4325 = vmatmul.bf16.gmra.mxu0 %v4074
      %v4326 = vpop.f32.mrf.mxu0
      %v4327 = vadd.f32 %v4238, %v4326
      %v4328 = vpop.f32.mrf.mxu0
      %v4329 = vadd.f32 %v4240, %v4328
      %4330 = vmatmul.bf16.gmra.mxu0 %v4077
      %v4331 = vpop.f32.mrf.mxu0
      %v4332 = vadd.f32 %v4243, %v4331
      %v4333 = vpop.f32.mrf.mxu0
      %v4334 = vadd.f32 %v4245, %v4333
      %4335 = vmatmul.bf16.gmra.mxu0 %v4080
      %v4336 = vpop.f32.mrf.mxu0
      %v4337 = vadd.f32 %v4248, %v4336
      %v4338 = vpop.f32.mrf.mxu0
      %v4339 = vadd.f32 %v4250, %v4338
      %4340 = vmatmul.bf16.gmra.mxu0 %v4083
      %v4341 = vpop.f32.mrf.mxu0
      %v4342 = vadd.f32 %v4253, %v4341
      %v4343 = vpop.f32.mrf.mxu0
      %v4344 = vadd.f32 %v4255, %v4343
      %4345 = vmatmul.bf16.gmra.mxu0 %v4086
      %v4346 = vpop.f32.mrf.mxu0
      %v4347 = vadd.f32 %v4258, %v4346
      %v4348 = vpop.f32.mrf.mxu0
      %v4349 = vadd.f32 %v4260, %v4348
      %4350 = vmatmul.bf16.gmra.mxu0 %v4089
      %v4351 = vpop.f32.mrf.mxu0
      %v4352 = vadd.f32 %v4263, %v4351
      %v4353 = vpop.f32.mrf.mxu0
      %v4354 = vadd.f32 %v4265, %v4353
      %4355 = vmatmul.bf16.gmra.mxu0 %v4092
      %v4356 = vpop.f32.mrf.mxu0
      %v4357 = vadd.f32 %v4268, %v4356
      %v4358 = vpop.f32.mrf.mxu0
      %v4359 = vadd.f32 %v4270, %v4358
      %4360 = vdwg.mxu0
      %vm4361 = vcmask 523264
      %4362 = vst.msk [vmem:[#allocation4] sm:$0xff] %vm4361, %v4282
      %4363 = vst.msk [vmem:[#allocation4 + $0x8] sm:$0xff] %vm4361, %v4284
      %4364 = vst.msk [vmem:[#allocation4 + $0x10] sm:$0xff] %vm4361, %v4287
      %4365 = vst.msk [vmem:[#allocation4 + $0x18] sm:$0xff] %vm4361, %v4289
      %4366 = vst.msk [vmem:[#allocation4 + $0x20] sm:$0xff] %vm4361, %v4292
      %4367 = vst.msk [vmem:[#allocation4 + $0x28] sm:$0xff] %vm4361, %v4294
      %4368 = vst.msk [vmem:[#allocation4 + $0x30] sm:$0xff] %vm4361, %v4297
      %4369 = vst.msk [vmem:[#allocation4 + $0x38] sm:$0xff] %vm4361, %v4299
      %4370 = vst.msk [vmem:[#allocation4 + $0x40] sm:$0xff] %vm4361, %v4302
      %4371 = vst.msk [vmem:[#allocation4 + $0x48] sm:$0xff] %vm4361, %v4304
      %4372 = vst.msk [vmem:[#allocation4 + $0x50] sm:$0xff] %vm4361, %v4307
      %4373 = vst.msk [vmem:[#allocation4 + $0x58] sm:$0xff] %vm4361, %v4309
      %4374 = vst.msk [vmem:[#allocation4 + $0x60] sm:$0xff] %vm4361, %v4312
      %4375 = vst.msk [vmem:[#allocation4 + $0x68] sm:$0xff] %vm4361, %v4314
      %4376 = vst.msk [vmem:[#allocation4 + $0x70] sm:$0xff] %vm4361, %v4317
      %4377 = vst.msk [vmem:[#allocation4 + $0x78] sm:$0xff] %vm4361, %v4319
      %4378 = vst.msk [vmem:[#allocation4 + $0x80] sm:$0xff] %vm4361, %v4322
      %4379 = vst.msk [vmem:[#allocation4 + $0x88] sm:$0xff] %vm4361, %v4324
      %4380 = vst.msk [vmem:[#allocation4 + $0x90] sm:$0xff] %vm4361, %v4327
      %4381 = vst.msk [vmem:[#allocation4 + $0x98] sm:$0xff] %vm4361, %v4329
      %4382 = vst.msk [vmem:[#allocation4 + $0xa0] sm:$0xff] %vm4361, %v4332
      %4383 = vst.msk [vmem:[#allocation4 + $0xa8] sm:$0xff] %vm4361, %v4334
      %4384 = vst.msk [vmem:[#allocation4 + $0xb0] sm:$0xff] %vm4361, %v4337
      %4385 = vst.msk [vmem:[#allocation4 + $0xb8] sm:$0xff] %vm4361, %v4339
      %4386 = vst.msk [vmem:[#allocation4 + $0xc0] sm:$0xff] %vm4361, %v4342
      %4387 = vst.msk [vmem:[#allocation4 + $0xc8] sm:$0xff] %vm4361, %v4344
      %4388 = vst.msk [vmem:[#allocation4 + $0xd0] sm:$0xff] %vm4361, %v4347
      %4389 = vst.msk [vmem:[#allocation4 + $0xd8] sm:$0xff] %vm4361, %v4349
      %4390 = vst.msk [vmem:[#allocation4 + $0xe0] sm:$0xff] %vm4361, %v4352
      %4391 = vst.msk [vmem:[#allocation4 + $0xe8] sm:$0xff] %vm4361, %v4354
      %4392 = vst.msk [vmem:[#allocation4 + $0xf0] sm:$0xff] %vm4361, %v4357
      %4393 = vst.msk [vmem:[#allocation4 + $0xf8] sm:$0xff] %vm4361, %v4359
      %v4394 = vld [vmem:[%s3] sm:$0x1]
      %v4395 = vld [vmem:[#allocation4] ss:$2 sm:$0x7f]
      %s4396 = scalar_lea.vmem [#allocation4], 1
      %v4397 = vld [vmem:[%s4396] ss:$2 sm:$0x7f]
      %v4398 = vmax.f32 %v4395, %v4397
      %s4399 = scalar_lea.vmem [#allocation4], 16
      %v4400 = vld [vmem:[%s4399] ss:$2 sm:$0x7f]
      %s4401 = scalar_lea.vmem [#allocation4], 17
      %v4402 = vld [vmem:[%s4401] ss:$2 sm:$0x7f]
      %v4403 = vmax.f32 %v4400, %v4402
      %v4404 = vmax.f32 %v4398, %v4403
      %v4406 = vperm.slane %v4394, 0
      %v4408 = vadd.f32 %v4404, %v4406
      %v4409 = vmax.f32 %v4408, 0.0
      %vm4410 = vcmask 522240
      %4411 = vst.msk [vmem:[%s232] sm:$0x7f] %vm4410, %v4409
      %v4412 = vpack.c.bf16 %v4409, %v4409
      %vm4413 = vcmask 519168
      %vm4414 = vmand %vm4413, %vm1037
      %v4415 = vld [vmem:[%s237] sm:$0xf]
      %v4416 = vsel %vm4414, %v4412, %v4415
      %4417 = vst [vmem:[%s237] sm:$0xf] %v4416
      %s4418 = scalar_lea.vmem [#allocation4], 32
      %v4419 = vld [vmem:[%s4418] ss:$2 sm:$0x7f]
      %s4420 = scalar_lea.vmem [#allocation4], 33
      %v4421 = vld [vmem:[%s4420] ss:$2 sm:$0x7f]
      %v4422 = vmax.f32 %v4419, %v4421
      %s4423 = scalar_lea.vmem [#allocation4], 48
      %v4424 = vld [vmem:[%s4423] ss:$2 sm:$0x7f]
      %s4425 = scalar_lea.vmem [#allocation4], 49
      %v4426 = vld [vmem:[%s4425] ss:$2 sm:$0x7f]
      %v4427 = vmax.f32 %v4424, %v4426
      %v4428 = vmax.f32 %v4422, %v4427
      %v4429 = vadd.f32 %v4428, %v4406
      %v4430 = vmax.f32 %v4429, 0.0
      %4431 = vst.msk [vmem:[%s232 + $0x7] sm:$0x7f] %vm4410, %v4430
      %v4432 = vpack.c.bf16 %v4430, %v4430
      %v4434 = vshll.u32 %v4432, 16
      %v4436 = vrot.slane %v4434, 5
      %v4437 = vshrl.u32 %v4432, 16
      %v4439 = vrot.slane %v4437, 4
      %v4440 = vor.u32 %v4439, %v4436
      %v4441 = vrot.slane %v4440, 4
      %vm4444 = vcmask 519171
      %vm4445 = vsmask.f32 7950
      %vm4446 = vmand %vm4444, %vm4445
      %v4447 = vld [vmem:[%s237] sm:$0x8]
      %v4448 = vsel %vm4446, %v4436, %v4447
      %4449 = vst [vmem:[%s237] sm:$0x8] %v4448
      %vm4450 = vcmask 518144
      %4451 = vst.msk [vmem:[%s237 + $0x4] sm:$0x7] %vm4450, %v4441
      %s4452 = scalar_lea.vmem [#allocation4], 64
      %v4453 = vld [vmem:[%s4452] ss:$2 sm:$0x7f]
      %s4454 = scalar_lea.vmem [#allocation4], 65
      %v4455 = vld [vmem:[%s4454] ss:$2 sm:$0x7f]
      %v4456 = vmax.f32 %v4453, %v4455
      %s4457 = scalar_lea.vmem [#allocation4], 80
      %v4458 = vld [vmem:[%s4457] ss:$2 sm:$0x7f]
      %s4459 = scalar_lea.vmem [#allocation4], 81
      %v4460 = vld [vmem:[%s4459] ss:$2 sm:$0x7f]
      %v4461 = vmax.f32 %v4458, %v4460
      %v4462 = vmax.f32 %v4456, %v4461
      %v4463 = vadd.f32 %v4462, %v4406
      %v4464 = vmax.f32 %v4463, 0.0
      %4465 = vst.msk [vmem:[%s232 + $0xe] sm:$0x7f] %vm4410, %v4464
      %v4466 = vpack.c.bf16 %v4464, %v4464
      %v4468 = vrot.slane %v4466, 5
      %v4469 = vrot.slane %v4468, 4
      %vm4472 = vcmask 519171
      %4473 = vst.msk [vmem:[%s237 + $0x4] sm:$0x8] %vm4472, %v4468
      %vm4474 = vcmask 518144
      %vm4475 = vsmask.f32 2304
      %vm4476 = vmand %vm4474, %vm4475
      %v4477 = vld [vmem:[%s237 + $0x8] sm:$0x7]
      %v4478 = vsel %vm4476, %v4469, %v4477
      %4479 = vst [vmem:[%s237 + $0x8] sm:$0x7] %v4478
      %s4480 = scalar_lea.vmem [#allocation4], 96
      %v4481 = vld [vmem:[%s4480] ss:$2 sm:$0x7f]
      %s4482 = scalar_lea.vmem [#allocation4], 97
      %v4483 = vld [vmem:[%s4482] ss:$2 sm:$0x7f]
      %v4484 = vmax.f32 %v4481, %v4483
      %s4485 = scalar_lea.vmem [#allocation4], 112
      %v4486 = vld [vmem:[%s4485] ss:$2 sm:$0x7f]
      %s4487 = scalar_lea.vmem [#allocation4], 113
      %v4488 = vld [vmem:[%s4487] ss:$2 sm:$0x7f]
      %v4489 = vmax.f32 %v4486, %v4488
      %v4490 = vmax.f32 %v4484, %v4489
      %v4491 = vadd.f32 %v4490, %v4406
      %v4492 = vmax.f32 %v4491, 0.0
      %4493 = vst.msk [vmem:[%s232 + $0x15] sm:$0x7f] %vm4410, %v4492
      %v4494 = vpack.c.bf16 %v4492, %v4492
      %v4496 = vshrl.u32 %v4494, 16
      %v4498 = vrot.slane %v4496, 5
      %v4499 = vshll.u32 %v4494, 16
      %v4501 = vrot.slane %v4499, 6
      %v4502 = vor.u32 %v4498, %v4501
      %v4503 = vrot.slane %v4502, 4
      %vm4506 = vcmask 519170
      %vm4507 = vsmask.f32 7946
      %vm4508 = vmand %vm4506, %vm4507
      %v4509 = vld [vmem:[%s237 + $0x8] sm:$0xc]
      %v4510 = vsel %vm4508, %v4502, %v4509
      %4511 = vst [vmem:[%s237 + $0x8] sm:$0xc] %v4510
      %vm4512 = vcmask 517120
      %4513 = vst.msk [vmem:[%s237 + $0xc] sm:$0x3] %vm4512, %v4503
      %s4514 = scalar_lea.vmem [#allocation4], 128
      %v4515 = vld [vmem:[%s4514] ss:$2 sm:$0x7f]
      %s4516 = scalar_lea.vmem [#allocation4], 129
      %v4517 = vld [vmem:[%s4516] ss:$2 sm:$0x7f]
      %v4518 = vmax.f32 %v4515, %v4517
      %s4519 = scalar_lea.vmem [#allocation4], 144
      %v4520 = vld [vmem:[%s4519] ss:$2 sm:$0x7f]
      %s4521 = scalar_lea.vmem [#allocation4], 145
      %v4522 = vld [vmem:[%s4521] ss:$2 sm:$0x7f]
      %v4523 = vmax.f32 %v4520, %v4522
      %v4524 = vmax.f32 %v4518, %v4523
      %v4525 = vadd.f32 %v4524, %v4406
      %v4526 = vmax.f32 %v4525, 0.0
      %4527 = vst.msk [vmem:[%s232 + $0x1c] sm:$0x7f] %vm4410, %v4526
      %v4528 = vpack.c.bf16 %v4526, %v4526
      %v4530 = vrot.slane %v4528, 6
      %v4531 = vrot.slane %v4530, 4
      %vm4534 = vcmask 519170
      %4535 = vst.msk [vmem:[%s237 + $0xc] sm:$0xc] %vm4534, %v4530
      %vm4536 = vcmask 517120
      %vm4537 = vsmask.f32 1280
      %vm4538 = vmand %vm4536, %vm4537
      %v4539 = vld [vmem:[%s237 + $0x10] sm:$0x3]
      %v4540 = vsel %vm4538, %v4531, %v4539
      %4541 = vst [vmem:[%s237 + $0x10] sm:$0x3] %v4540
      %s4542 = scalar_lea.vmem [#allocation4], 160
      %v4543 = vld [vmem:[%s4542] ss:$2 sm:$0x7f]
      %s4544 = scalar_lea.vmem [#allocation4], 161
      %v4545 = vld [vmem:[%s4544] ss:$2 sm:$0x7f]
      %v4546 = vmax.f32 %v4543, %v4545
      %s4547 = scalar_lea.vmem [#allocation4], 176
      %v4548 = vld [vmem:[%s4547] ss:$2 sm:$0x7f]
      %s4549 = scalar_lea.vmem [#allocation4], 177
      %v4550 = vld [vmem:[%s4549] ss:$2 sm:$0x7f]
      %v4551 = vmax.f32 %v4548, %v4550
      %v4552 = vmax.f32 %v4546, %v4551
      %v4553 = vadd.f32 %v4552, %v4406
      %v4554 = vmax.f32 %v4553, 0.0
      %4555 = vst.msk [vmem:[%s232 + $0x23] sm:$0x7f] %vm4410, %v4554
      %v4556 = vpack.c.bf16 %v4554, %v4554
      %v4558 = vshrl.u32 %v4556, 16
      %v4560 = vrot.slane %v4558, 6
      %v4561 = vshll.u32 %v4556, 16
      %v4563 = vrot.slane %v4561, 7
      %v4564 = vor.u32 %v4560, %v4563
      %v4565 = vrot.slane %v4564, 4
      %vm4568 = vcmask 519169
      %vm4569 = vsmask.f32 7942
      %vm4570 = vmand %vm4568, %vm4569
      %v4571 = vld [vmem:[%s237 + $0x10] sm:$0xe]
      %v4572 = vsel %vm4570, %v4564, %v4571
      %4573 = vst [vmem:[%s237 + $0x10] sm:$0xe] %v4572
      %vm4574 = vcmask 516096
      %4575 = vst.msk [vmem:[%s237 + $0x14] sm:$0x1] %vm4574, %v4565
      %s4576 = scalar_lea.vmem [#allocation4], 192
      %v4577 = vld [vmem:[%s4576] ss:$2 sm:$0x7f]
      %s4578 = scalar_lea.vmem [#allocation4], 193
      %v4579 = vld [vmem:[%s4578] ss:$2 sm:$0x7f]
      %v4580 = vmax.f32 %v4577, %v4579
      %s4581 = scalar_lea.vmem [#allocation4], 208
      %v4582 = vld [vmem:[%s4581] ss:$2 sm:$0x7f]
      %s4583 = scalar_lea.vmem [#allocation4], 209
      %v4584 = vld [vmem:[%s4583] ss:$2 sm:$0x7f]
      %v4585 = vmax.f32 %v4582, %v4584
      %v4586 = vmax.f32 %v4580, %v4585
      %v4587 = vadd.f32 %v4586, %v4406
      %v4588 = vmax.f32 %v4587, 0.0
      %4589 = vst.msk [vmem:[%s232 + $0x2a] sm:$0x7f] %vm4410, %v4588
      %v4590 = vpack.c.bf16 %v4588, %v4588
      %v4592 = vrot.slane %v4590, 7
      %v4593 = vrot.slane %v4592, 4
      %vm4596 = vcmask 519169
      %4597 = vst.msk [vmem:[%s237 + $0x14] sm:$0xe] %vm4596, %v4592
      %vm4598 = vcmask 516096
      %vm4599 = vsmask.f32 256
      %vm4600 = vmand %vm4598, %vm4599
      %v4601 = vld [vmem:[%s237 + $0x18] sm:$0x1]
      %v4602 = vsel %vm4600, %v4593, %v4601
      %4603 = vst [vmem:[%s237 + $0x18] sm:$0x1] %v4602
      %p4604 = scmp.lt.s32.totalorder %s17, 1
      %s4605 = scalar_select %p4604, %s17, 1
      %s4606 = smul.addr %s4605, 7
      %s4607 = smul.addr %s4606, 8
      %s4608 = scalar_lea.vmem %s4, %s4607
      %p4609 = scmp.lt.s32.totalorder %s17, 1
      %s4610 = scalar_select %p4609, %s17, 1
      %s4611 = smul.addr %s4610, 7
      %s4612 = smul.addr %s4611, 4
      %s4613 = scalar_lea.vmem %s5, %s4612
      // Predicated region
      $region41: #{mnist_forward.2} parent=35 // pred_check
        %p4614 = pneg %p124
      $region42: #{mnist_forward.2} parent=35 // pred_check_branch
        %4616 = sbr.rel (%p4614) target = $region44
      $region43: #{mnist_forward.2} parent=35 // pred_region
        _
      $region44: #{mnist_forward.2} parent=35 // pred_fallthru
        _
      // Predicated region
      $region45: #{mnist_forward.2} parent=35 // pred_check
        %p4617 = pneg %p150
      $region46: #{mnist_forward.2} parent=35 // pred_check_branch
        %4619 = sbr.rel (%p4617) target = $region48
      $region47: #{mnist_forward.2} parent=35 // pred_region
        _
      $region48: #{mnist_forward.2} parent=35 // pred_fallthru
        _
    $region36: #{mnist_forward.2} parent=5 // pred_fallthru
      _
    %p4620 = scmp.le.s32.totalorder 2, %s12
    // Predicated region
    $region49: #{mnist_forward.2} parent=5 // pred_check
      %p4621 = pneg %p4620
    $region50: #{mnist_forward.2} parent=5 // pred_check_branch
      %4623 = sbr.rel (%p4621) target = $region52
    $region51: #{mnist_forward.2} parent=5 // pred_region
      %s4624 = ssub.s32 %s12, 2
      // Predicated region
      $region53: #{mnist_forward.2} parent=51 // pred_check
        %p4625 = pneg %p130
      $region54: #{mnist_forward.2} parent=51 // pred_check_branch
        %4627 = sbr.rel (%p4625) target = $region56
      $region55: #{mnist_forward.2} parent=51 // pred_region
        %p4628 = scmp.lt.s32.totalorder %s18, 1
        %s4629 = scalar_select %p4628, %s18, 1
        %s4630 = smul.addr %s4629, 7
        %s4631 = smul.addr %s4630, 8
        %s4632 = scalar_lea.vmem %s4, %s4631
      $region56: #{mnist_forward.2} parent=51 // pred_fallthru
        _
      // Predicated region
      $region57: #{mnist_forward.2} parent=51 // pred_check
        %p4633 = pneg %p156
      $region58: #{mnist_forward.2} parent=51 // pred_check_branch
        %4635 = sbr.rel (%p4633) target = $region60
      $region59: #{mnist_forward.2} parent=51 // pred_region
        %p4636 = scmp.lt.s32.totalorder %s18, 1
        %s4637 = scalar_select %p4636, %s18, 1
        %s4638 = smul.addr %s4637, 7
        %s4639 = smul.addr %s4638, 4
        %s4640 = scalar_lea.vmem %s5, %s4639
      $region60: #{mnist_forward.2} parent=51 // pred_fallthru
        _
    $region52: #{mnist_forward.2} parent=5 // pred_fallthru
      _
  $region6: #{mnist_forward.2} parent=0 // loop_footer
    %s16 = sadd.s32 1, %s12
  $region7: #{mnist_forward.2} parent=0 // loop_footer_branch
    %11 = sbr.rel target = $region3
  $region8: #{mnist_forward.2} parent=0 // loop_exit
    _

</llo_original>
